<compile_context>
chip_gen: v6e
topology: v6e:2x2x1
jax: 0.10.0
libtpu: 0.0.40
codegen_flags: <defaults>
</compile_context>

<pallas_src>
import functools

import jax
import jax.numpy as jnp
from jax.experimental import pallas as pl
from jax.experimental.pallas import tpu as pltpu


def _self_attn_kernel(x_ref, pos_ref, w_ref, c_ref, out_ref, *, nhead, nbatch, eps):
    """Whole-problem kernel (single invocation).

    x_ref, pos_ref : (M, E)   flattened tokens, M = L*N (row = l*N + n)
    w_ref          : (E, 4E)  packed [Wq^T*scale | Wk^T | Wv^T | Wo^T]
    c_ref          : (6, E)   rows: bq*scale, bk, bv, bo, ln_gamma, ln_beta
    out_ref        : (M, E)
    """
    x = x_ref[...]                       # (M, E)
    w = w_ref[...]                       # (E, 4E)
    c = c_ref[...]                       # (6, E)
    M, E = x.shape
    hd = E // nhead
    prec = jax.lax.Precision.HIGHEST

    qk_in = x + pos_ref[...]             # with_pos_embed

    # Fused, lane-dense input projections: (M,E)@(E,2E) and (M,E)@(E,E).
    qk = jax.lax.dot_general(qk_in, w[:, :2 * E], (((1,), (0,)), ((), ())),
                             preferred_element_type=jnp.float32, precision=prec)
    v = jax.lax.dot_general(x, w[:, 2 * E:3 * E], (((1,), (0,)), ((), ())),
                            preferred_element_type=jnp.float32, precision=prec)
    q = qk[:, :E] + c[0:1, :]            # 1/sqrt(hd) already folded into Wq / bq
    k = qk[:, E:] + c[1:2, :]
    v = v + c[2:3, :]

    # Batch-separation additive mask, generated in-kernel: rows i, j may attend
    # iff they came from the same batch element (i % N == j % N). Every row has
    # at least one unmasked entry (its own batch), so softmax never sees 0/0.
    row_b = jax.lax.broadcasted_iota(jnp.int32, (M, M), 0) % nbatch
    col_b = jax.lax.broadcasted_iota(jnp.int32, (M, M), 1) % nbatch
    bias = jnp.where(row_b == col_b, jnp.float32(0.0), jnp.float32(-1e30))

    # Per-head attention (inherently hd-wide): static unrolled loop over cheap
    # lane slices; 2D dot_generals only (transposed contraction handled by the
    # MXU lowering, no explicit .T / reshape / 3D transpose of activations).
    o_heads = []
    for h in range(nhead):
        sl = slice(h * hd, (h + 1) * hd)
        qh, kh, vh = q[:, sl], k[:, sl], v[:, sl]
        s = jax.lax.dot_general(qh, kh, (((1,), (1,)), ((), ())),
                                preferred_element_type=jnp.float32,
                                precision=prec)                     # (M, M)
        s = s + bias
        s = s - jnp.max(s, axis=-1, keepdims=True)
        p = jnp.exp(s)
        # Exact reciprocal kept for tight (1e-4) parity with the f32 reference;
        # approx=True is a free EUP win at production shapes.
        p = p * pl.reciprocal(jnp.sum(p, axis=-1, keepdims=True), approx=False)
        o_heads.append(
            jax.lax.dot_general(p, vh, (((1,), (0,)), ((), ())),
                                preferred_element_type=jnp.float32,
                                precision=prec))                    # (M, hd)
    o = jnp.concatenate(o_heads, axis=1)                            # (M, E)

    # Output projection: single (M,E)@(E,E) matmul + residual.
    proj = jax.lax.dot_general(o, w[:, 3 * E:], (((1,), (0,)), ((), ())),
                               preferred_element_type=jnp.float32, precision=prec)
    y = x + proj + c[3:4, :]

    # LayerNorm over d_model (population variance, eps = 1e-5).
    mean = jnp.mean(y, axis=-1, keepdims=True)
    var = jnp.mean((y - mean) ** 2, axis=-1, keepdims=True)
    y_n = (y - mean) * jax.lax.rsqrt(var + eps)
    out_ref[...] = y_n * c[4:5, :] + c[5:6, :]


def pack_params(params, *, nhead):
    """One-time packing of PyTorch-layout weights (hoisted out of the hot path).

    Call once when parameters are loaded; pass the result to every forward call.
    """
    E = params["wq"].shape[0]
    hd = E // nhead
    assert hd * nhead == E
    scale = 1.0 / (hd ** 0.5)
    # x @ W^T layout, with the softmax scale folded into the q weights / bias.
    w_all = jnp.concatenate([params["wq"].T * scale, params["wk"].T,
                             params["wv"].T, params["wo"].T], axis=1)    # (E, 4E)
    consts = jnp.stack([params["bq"] * scale, params["bk"], params["bv"],
                        params["bo"], params["ln_w"], params["ln_b"]])   # (6, E)
    return {"w_all": jnp.asarray(w_all, jnp.float32),
            "consts": jnp.asarray(consts, jnp.float32)}


@functools.partial(jax.jit, static_argnames=("nhead",))
def self_attention_layer(tgt, query_pos, packed, *, nhead):
    """tgt, query_pos: (L, N, E) float32 — same layout as nn.MultiheadAttention."""
    L, N, E = tgt.shape
    M = L * N

    kernel = functools.partial(_self_attn_kernel, nhead=nhead, nbatch=N, eps=1e-5)
    vmem = pl.BlockSpec(memory_space=pltpu.MemorySpace.VMEM)
    out2 = pl.pallas_call(
        kernel,
        out_shape=jax.ShapeDtypeStruct((M, E), jnp.float32),
        in_specs=[vmem] * 4,
        out_specs=vmem,
    )(tgt.reshape(M, E), query_pos.reshape(M, E),
      packed["w_all"], packed["consts"])

    return out2.reshape(L, N, E)


def _reference(tgt, query_pos, params, *, nhead):
    """Plain-JAX reference mirroring nn.MultiheadAttention + residual + LayerNorm."""
    L, N, E = tgt.shape
    hd = E // nhead
    prec = jax.lax.Precision.HIGHEST
    x = tgt
    qk = tgt + query_pos
    q = jnp.einsum("lne,fe->lnf", qk, params["wq"], precision=prec) + params["bq"]
    k = jnp.einsum("lne,fe->lnf", qk, params["wk"], precision=prec) + params["bk"]
    v = jnp.einsum("lne,fe->lnf", x, params["wv"], precision=prec) + params["bv"]

    def split(t):  # (L, N, H, hd) -> (N, H, L, hd)
        return jnp.transpose(t.reshape(L, N, nhead, hd), (1, 2, 0, 3))

    qh, kh, vh = split(q), split(k), split(v)
    scores = jnp.einsum("nhld,nhmd->nhlm", qh, kh, precision=prec) / (hd ** 0.5)
    p = jax.nn.softmax(scores, axis=-1)
    o = jnp.einsum("nhlm,nhmd->nhld", p, vh, precision=prec)    # (N, H, L, hd)
    o = jnp.transpose(o, (2, 0, 1, 3)).reshape(L, N, E)
    o = jnp.einsum("lne,fe->lnf", o, params["wo"], precision=prec) + params["bo"]
    y = x + o
    mean = jnp.mean(y, axis=-1, keepdims=True)
    var = jnp.mean((y - mean) ** 2, axis=-1, keepdims=True)
    yn = (y - mean) / jnp.sqrt(var + 1e-5)
    return yn * params["ln_w"] + params["ln_b"]


if __name__ == "__main__":
    # Small shapes: seq L=8, batch N=2, d_model E=32, nhead=4
    L, N, E, NHEAD = 8, 2, 32, 4

    key = jax.random.PRNGKey(0)
    keys = jax.random.split(key, 8)

    def xavier(k, shape):
        fan_in, fan_out = shape[1], shape[0]
        lim = (6.0 / (fan_in + fan_out)) ** 0.5
        return jax.random.uniform(k, shape, jnp.float32, -lim, lim)

    params = {
        "wq": xavier(keys[0], (E, E)),
        "wk": xavier(keys[1], (E, E)),
        "wv": xavier(keys[2], (E, E)),
        "wo": xavier(keys[3], (E, E)),
        # nn.MultiheadAttention initializes in_proj_bias / out_proj.bias to zero
        "bq": jnp.zeros((E,), jnp.float32),
        "bk": jnp.zeros((E,), jnp.float32),
        "bv": jnp.zeros((E,), jnp.float32),
        "bo": jnp.zeros((E,), jnp.float32),
        # nn.LayerNorm default affine init
        "ln_w": jnp.ones((E,), jnp.float32),
        "ln_b": jnp.zeros((E,), jnp.float32),
    }

    tgt = jax.random.normal(keys[4], (L, N, E), jnp.float32)
    query_pos = jax.random.normal(keys[5], (L, N, E), jnp.float32)

    # One-time weight packing (outside the per-call hot path).
    packed = jax.tree.map(jax.block_until_ready, pack_params(params, nhead=NHEAD))

    out = self_attention_layer(tgt, query_pos, packed, nhead=NHEAD)
    out = jax.block_until_ready(out)

    ref = _reference(tgt, query_pos, params, nhead=NHEAD)
    assert out.shape == (L, N, E)
    assert jnp.allclose(out, ref, atol=1e-4, rtol=1e-4), "mismatch vs reference"

    print("KERNEL_OK")
</pallas_src>

<mosaic_0001>
module attributes {stable_mosaic.version = 11 : i64} {
  func.func @_self_attn_kernel(%arg0: memref<16x32xf32, #tpu.memory_space<vmem>>, %arg1: memref<16x32xf32, #tpu.memory_space<vmem>>, %arg2: memref<32x128xf32, #tpu.memory_space<vmem>>, %arg3: memref<6x32xf32, #tpu.memory_space<vmem>>, %arg4: memref<16x32xf32, #tpu.memory_space<vmem>>) attributes {dimension_semantics = [], scalar_prefetch = 0 : i64, scratch_operands = 0 : i64, tpu.core_type = #tpu.core_type<tc>} {
    %c0 = arith.constant 0 : index
    %c0_0 = arith.constant 0 : index
    %0 = vector.load %arg0[%c0, %c0_0] : memref<16x32xf32, #tpu.memory_space<vmem>>, vector<16x32xf32>
    %c0_1 = arith.constant 0 : index
    %c0_2 = arith.constant 0 : index
    %1 = vector.load %arg2[%c0_1, %c0_2] : memref<32x128xf32, #tpu.memory_space<vmem>>, vector<32x128xf32>
    %c0_3 = arith.constant 0 : index
    %c0_4 = arith.constant 0 : index
    %2 = vector.load %arg3[%c0_3, %c0_4] : memref<6x32xf32, #tpu.memory_space<vmem>>, vector<6x32xf32>
    %c0_5 = arith.constant 0 : index
    %c0_6 = arith.constant 0 : index
    %3 = vector.load %arg1[%c0_5, %c0_6] : memref<16x32xf32, #tpu.memory_space<vmem>>, vector<16x32xf32>
    %4 = arith.addf %0, %3 : vector<16x32xf32>
    %5 = vector.extract_strided_slice %1 {offsets = [0, 0], sizes = [32, 64], strides = [1, 1]} : vector<32x128xf32> to vector<32x64xf32>
    %cst = arith.constant dense<0.000000e+00> : vector<16x64xf32>
    %6 = tpu.matmul %4, %5, %cst {dimension_numbers = #tpu.dot_dimension_numbers<[1], [0], [0], [1], [0, 0, 1, 1], [], []>, precision = #tpu.contract_precision<fp32>} : vector<16x32xf32>, vector<32x64xf32>, vector<16x64xf32> -> vector<16x64xf32>
    %7 = vector.extract_strided_slice %1 {offsets = [0, 64], sizes = [32, 32], strides = [1, 1]} : vector<32x128xf32> to vector<32x32xf32>
    %cst_7 = arith.constant dense<0.000000e+00> : vector<16x32xf32>
    %8 = tpu.matmul %0, %7, %cst_7 {dimension_numbers = #tpu.dot_dimension_numbers<[1], [0], [0], [1], [0, 0, 1, 1], [], []>, precision = #tpu.contract_precision<fp32>} : vector<16x32xf32>, vector<32x32xf32>, vector<16x32xf32> -> vector<16x32xf32>
    %9 = vector.extract_strided_slice %6 {offsets = [0, 0], sizes = [16, 32], strides = [1, 1]} : vector<16x64xf32> to vector<16x32xf32>
    %10 = vector.extract_strided_slice %2 {offsets = [0, 0], sizes = [1, 32], strides = [1, 1]} : vector<6x32xf32> to vector<1x32xf32>
    %11 = vector.broadcast %10 : vector<1x32xf32> to vector<16x32xf32>
    %12 = arith.addf %9, %11 : vector<16x32xf32>
    %13 = vector.extract_strided_slice %6 {offsets = [0, 32], sizes = [16, 32], strides = [1, 1]} : vector<16x64xf32> to vector<16x32xf32>
    %14 = vector.extract_strided_slice %2 {offsets = [1, 0], sizes = [1, 32], strides = [1, 1]} : vector<6x32xf32> to vector<1x32xf32>
    %15 = vector.broadcast %14 : vector<1x32xf32> to vector<16x32xf32>
    %16 = arith.addf %13, %15 : vector<16x32xf32>
    %17 = vector.extract_strided_slice %2 {offsets = [2, 0], sizes = [1, 32], strides = [1, 1]} : vector<6x32xf32> to vector<1x32xf32>
    %18 = vector.broadcast %17 : vector<1x32xf32> to vector<16x32xf32>
    %19 = arith.addf %8, %18 : vector<16x32xf32>
    %20 = tpu.iota {dimensions = array<i32: 0>} : vector<16x16xi32>
    %c2_i32 = arith.constant 2 : i32
    %c0_i32 = arith.constant 0 : i32
    %21 = arith.cmpi eq, %c2_i32, %c0_i32 : i32
    %c1_i32 = arith.constant 1 : i32
    %22 = arith.select %21, %c1_i32, %c2_i32 : i32
    %23 = vector.broadcast %22 : i32 to vector<16x16xi32>
    %24 = arith.remsi %20, %23 : vector<16x16xi32>
    %c0_i32_8 = arith.constant 0 : i32
    %25 = vector.broadcast %c0_i32_8 : i32 to vector<16x16xi32>
    %26 = arith.cmpi ne, %24, %25 : vector<16x16xi32>
    %c0_i32_9 = arith.constant 0 : i32
    %27 = vector.broadcast %c0_i32_9 : i32 to vector<16x16xi32>
    %28 = arith.cmpi slt, %24, %27 : vector<16x16xi32>
    %c0_i32_10 = arith.constant 0 : i32
    %29 = arith.cmpi slt, %22, %c0_i32_10 : i32
    %30 = vector.broadcast %29 : i1 to vector<16x16xi1>
    %31 = vector.broadcast %30 : vector<16x16xi1> to vector<16x16xi1>
    %32 = arith.xori %28, %31 : vector<16x16xi1>
    %33 = arith.andi %32, %26 : vector<16x16xi1>
    %34 = vector.broadcast %22 : i32 to vector<16x16xi32>
    %35 = arith.addi %24, %34 : vector<16x16xi32>
    %36 = arith.select %33, %35, %24 : vector<16x16xi1>, vector<16x16xi32>
    %37 = tpu.iota {dimensions = array<i32: 1>} : vector<16x16xi32>
    %c2_i32_11 = arith.constant 2 : i32
    %c0_i32_12 = arith.constant 0 : i32
    %38 = arith.cmpi eq, %c2_i32_11, %c0_i32_12 : i32
    %c1_i32_13 = arith.constant 1 : i32
    %39 = arith.select %38, %c1_i32_13, %c2_i32_11 : i32
    %40 = vector.broadcast %39 : i32 to vector<16x16xi32>
    %41 = arith.remsi %37, %40 : vector<16x16xi32>
    %c0_i32_14 = arith.constant 0 : i32
    %42 = vector.broadcast %c0_i32_14 : i32 to vector<16x16xi32>
    %43 = arith.cmpi ne, %41, %42 : vector<16x16xi32>
    %c0_i32_15 = arith.constant 0 : i32
    %44 = vector.broadcast %c0_i32_15 : i32 to vector<16x16xi32>
    %45 = arith.cmpi slt, %41, %44 : vector<16x16xi32>
    %c0_i32_16 = arith.constant 0 : i32
    %46 = arith.cmpi slt, %39, %c0_i32_16 : i32
    %47 = vector.broadcast %46 : i1 to vector<16x16xi1>
    %48 = vector.broadcast %47 : vector<16x16xi1> to vector<16x16xi1>
    %49 = arith.xori %45, %48 : vector<16x16xi1>
    %50 = arith.andi %49, %43 : vector<16x16xi1>
    %51 = vector.broadcast %39 : i32 to vector<16x16xi32>
    %52 = arith.addi %41, %51 : vector<16x16xi32>
    %53 = arith.select %50, %52, %41 : vector<16x16xi1>, vector<16x16xi32>
    %54 = arith.cmpi eq, %36, %53 : vector<16x16xi32>
    %cst_17 = arith.constant 0.000000e+00 : f32
    %cst_18 = arith.constant -1.000000e+30 : f32
    %55 = vector.broadcast %cst_17 : f32 to vector<16x16xf32>
    %56 = vector.broadcast %cst_18 : f32 to vector<16x16xf32>
    %57 = arith.select %54, %55, %56 : vector<16x16xi1>, vector<16x16xf32>
    %58 = vector.extract_strided_slice %12 {offsets = [0, 0], sizes = [16, 8], strides = [1, 1]} : vector<16x32xf32> to vector<16x8xf32>
    %59 = vector.extract_strided_slice %16 {offsets = [0, 0], sizes = [16, 8], strides = [1, 1]} : vector<16x32xf32> to vector<16x8xf32>
    %60 = vector.extract_strided_slice %19 {offsets = [0, 0], sizes = [16, 8], strides = [1, 1]} : vector<16x32xf32> to vector<16x8xf32>
    %cst_19 = arith.constant dense<0.000000e+00> : vector<16x16xf32>
    %61 = tpu.matmul %58, %59, %cst_19 {dimension_numbers = #tpu.dot_dimension_numbers<[1], [1], [0], [0], [0, 0, 1, 0], [], []>, precision = #tpu.contract_precision<fp32>} : vector<16x8xf32>, vector<16x8xf32>, vector<16x16xf32> -> vector<16x16xf32>
    %62 = arith.addf %61, %57 : vector<16x16xf32>
    %cst_20 = arith.constant dense<0xFF800000> : vector<16xf32>
    %63 = vector.multi_reduction <maximumf>, %62, %cst_20 [1] : vector<16x16xf32> to vector<16xf32>
    %64 = vector.shape_cast %63 : vector<16xf32> to vector<16x1xf32>
    %65 = vector.broadcast %64 : vector<16x1xf32> to vector<16x16xf32>
    %66 = arith.subf %62, %65 : vector<16x16xf32>
    %67 = math.exp %66 : vector<16x16xf32>
    %cst_21 = arith.constant dense<0.000000e+00> : vector<16xf32>
    %68 = vector.multi_reduction <add>, %67, %cst_21 [1] : vector<16x16xf32> to vector<16xf32>
    %69 = vector.shape_cast %68 : vector<16xf32> to vector<16x1xf32>
    %70 = tpu.reciprocal %69 : vector<16x1xf32> -> vector<16x1xf32>
    %71 = vector.broadcast %70 : vector<16x1xf32> to vector<16x16xf32>
    %72 = arith.mulf %67, %71 : vector<16x16xf32>
    %cst_22 = arith.constant dense<0.000000e+00> : vector<16x8xf32>
    %73 = tpu.matmul %72, %60, %cst_22 {dimension_numbers = #tpu.dot_dimension_numbers<[1], [0], [0], [1], [0, 0, 1, 1], [], []>, precision = #tpu.contract_precision<fp32>} : vector<16x16xf32>, vector<16x8xf32>, vector<16x8xf32> -> vector<16x8xf32>
    %74 = vector.extract_strided_slice %12 {offsets = [0, 8], sizes = [16, 8], strides = [1, 1]} : vector<16x32xf32> to vector<16x8xf32>
    %75 = vector.extract_strided_slice %16 {offsets = [0, 8], sizes = [16, 8], strides = [1, 1]} : vector<16x32xf32> to vector<16x8xf32>
    %76 = vector.extract_strided_slice %19 {offsets = [0, 8], sizes = [16, 8], strides = [1, 1]} : vector<16x32xf32> to vector<16x8xf32>
    %cst_23 = arith.constant dense<0.000000e+00> : vector<16x16xf32>
    %77 = tpu.matmul %74, %75, %cst_23 {dimension_numbers = #tpu.dot_dimension_numbers<[1], [1], [0], [0], [0, 0, 1, 0], [], []>, precision = #tpu.contract_precision<fp32>} : vector<16x8xf32>, vector<16x8xf32>, vector<16x16xf32> -> vector<16x16xf32>
    %78 = arith.addf %77, %57 : vector<16x16xf32>
    %cst_24 = arith.constant dense<0xFF800000> : vector<16xf32>
    %79 = vector.multi_reduction <maximumf>, %78, %cst_24 [1] : vector<16x16xf32> to vector<16xf32>
    %80 = vector.shape_cast %79 : vector<16xf32> to vector<16x1xf32>
    %81 = vector.broadcast %80 : vector<16x1xf32> to vector<16x16xf32>
    %82 = arith.subf %78, %81 : vector<16x16xf32>
    %83 = math.exp %82 : vector<16x16xf32>
    %cst_25 = arith.constant dense<0.000000e+00> : vector<16xf32>
    %84 = vector.multi_reduction <add>, %83, %cst_25 [1] : vector<16x16xf32> to vector<16xf32>
    %85 = vector.shape_cast %84 : vector<16xf32> to vector<16x1xf32>
    %86 = tpu.reciprocal %85 : vector<16x1xf32> -> vector<16x1xf32>
    %87 = vector.broadcast %86 : vector<16x1xf32> to vector<16x16xf32>
    %88 = arith.mulf %83, %87 : vector<16x16xf32>
    %cst_26 = arith.constant dense<0.000000e+00> : vector<16x8xf32>
    %89 = tpu.matmul %88, %76, %cst_26 {dimension_numbers = #tpu.dot_dimension_numbers<[1], [0], [0], [1], [0, 0, 1, 1], [], []>, precision = #tpu.contract_precision<fp32>} : vector<16x16xf32>, vector<16x8xf32>, vector<16x8xf32> -> vector<16x8xf32>
    %90 = vector.extract_strided_slice %12 {offsets = [0, 16], sizes = [16, 8], strides = [1, 1]} : vector<16x32xf32> to vector<16x8xf32>
    %91 = vector.extract_strided_slice %16 {offsets = [0, 16], sizes = [16, 8], strides = [1, 1]} : vector<16x32xf32> to vector<16x8xf32>
    %92 = vector.extract_strided_slice %19 {offsets = [0, 16], sizes = [16, 8], strides = [1, 1]} : vector<16x32xf32> to vector<16x8xf32>
    %cst_27 = arith.constant dense<0.000000e+00> : vector<16x16xf32>
    %93 = tpu.matmul %90, %91, %cst_27 {dimension_numbers = #tpu.dot_dimension_numbers<[1], [1], [0], [0], [0, 0, 1, 0], [], []>, precision = #tpu.contract_precision<fp32>} : vector<16x8xf32>, vector<16x8xf32>, vector<16x16xf32> -> vector<16x16xf32>
    %94 = arith.addf %93, %57 : vector<16x16xf32>
    %cst_28 = arith.constant dense<0xFF800000> : vector<16xf32>
    %95 = vector.multi_reduction <maximumf>, %94, %cst_28 [1] : vector<16x16xf32> to vector<16xf32>
    %96 = vector.shape_cast %95 : vector<16xf32> to vector<16x1xf32>
    %97 = vector.broadcast %96 : vector<16x1xf32> to vector<16x16xf32>
    %98 = arith.subf %94, %97 : vector<16x16xf32>
    %99 = math.exp %98 : vector<16x16xf32>
    %cst_29 = arith.constant dense<0.000000e+00> : vector<16xf32>
    %100 = vector.multi_reduction <add>, %99, %cst_29 [1] : vector<16x16xf32> to vector<16xf32>
    %101 = vector.shape_cast %100 : vector<16xf32> to vector<16x1xf32>
    %102 = tpu.reciprocal %101 : vector<16x1xf32> -> vector<16x1xf32>
    %103 = vector.broadcast %102 : vector<16x1xf32> to vector<16x16xf32>
    %104 = arith.mulf %99, %103 : vector<16x16xf32>
    %cst_30 = arith.constant dense<0.000000e+00> : vector<16x8xf32>
    %105 = tpu.matmul %104, %92, %cst_30 {dimension_numbers = #tpu.dot_dimension_numbers<[1], [0], [0], [1], [0, 0, 1, 1], [], []>, precision = #tpu.contract_precision<fp32>} : vector<16x16xf32>, vector<16x8xf32>, vector<16x8xf32> -> vector<16x8xf32>
    %106 = vector.extract_strided_slice %12 {offsets = [0, 24], sizes = [16, 8], strides = [1, 1]} : vector<16x32xf32> to vector<16x8xf32>
    %107 = vector.extract_strided_slice %16 {offsets = [0, 24], sizes = [16, 8], strides = [1, 1]} : vector<16x32xf32> to vector<16x8xf32>
    %108 = vector.extract_strided_slice %19 {offsets = [0, 24], sizes = [16, 8], strides = [1, 1]} : vector<16x32xf32> to vector<16x8xf32>
    %cst_31 = arith.constant dense<0.000000e+00> : vector<16x16xf32>
    %109 = tpu.matmul %106, %107, %cst_31 {dimension_numbers = #tpu.dot_dimension_numbers<[1], [1], [0], [0], [0, 0, 1, 0], [], []>, precision = #tpu.contract_precision<fp32>} : vector<16x8xf32>, vector<16x8xf32>, vector<16x16xf32> -> vector<16x16xf32>
    %110 = arith.addf %109, %57 : vector<16x16xf32>
    %cst_32 = arith.constant dense<0xFF800000> : vector<16xf32>
    %111 = vector.multi_reduction <maximumf>, %110, %cst_32 [1] : vector<16x16xf32> to vector<16xf32>
    %112 = vector.shape_cast %111 : vector<16xf32> to vector<16x1xf32>
    %113 = vector.broadcast %112 : vector<16x1xf32> to vector<16x16xf32>
    %114 = arith.subf %110, %113 : vector<16x16xf32>
    %115 = math.exp %114 : vector<16x16xf32>
    %cst_33 = arith.constant dense<0.000000e+00> : vector<16xf32>
    %116 = vector.multi_reduction <add>, %115, %cst_33 [1] : vector<16x16xf32> to vector<16xf32>
    %117 = vector.shape_cast %116 : vector<16xf32> to vector<16x1xf32>
    %118 = tpu.reciprocal %117 : vector<16x1xf32> -> vector<16x1xf32>
    %119 = vector.broadcast %118 : vector<16x1xf32> to vector<16x16xf32>
    %120 = arith.mulf %115, %119 : vector<16x16xf32>
    %cst_34 = arith.constant dense<0.000000e+00> : vector<16x8xf32>
    %121 = tpu.matmul %120, %108, %cst_34 {dimension_numbers = #tpu.dot_dimension_numbers<[1], [0], [0], [1], [0, 0, 1, 1], [], []>, precision = #tpu.contract_precision<fp32>} : vector<16x16xf32>, vector<16x8xf32>, vector<16x8xf32> -> vector<16x8xf32>
    %122 = tpu.concatenate %73, %89, %105, %121 in 1 : vector<16x8xf32>, vector<16x8xf32>, vector<16x8xf32>, vector<16x8xf32> -> vector<16x32xf32>
    %123 = vector.extract_strided_slice %1 {offsets = [0, 96], sizes = [32, 32], strides = [1, 1]} : vector<32x128xf32> to vector<32x32xf32>
    %cst_35 = arith.constant dense<0.000000e+00> : vector<16x32xf32>
    %124 = tpu.matmul %122, %123, %cst_35 {dimension_numbers = #tpu.dot_dimension_numbers<[1], [0], [0], [1], [0, 0, 1, 1], [], []>, precision = #tpu.contract_precision<fp32>} : vector<16x32xf32>, vector<32x32xf32>, vector<16x32xf32> -> vector<16x32xf32>
    %125 = arith.addf %0, %124 : vector<16x32xf32>
    %126 = vector.extract_strided_slice %2 {offsets = [3, 0], sizes = [1, 32], strides = [1, 1]} : vector<6x32xf32> to vector<1x32xf32>
    %127 = vector.broadcast %126 : vector<1x32xf32> to vector<16x32xf32>
    %128 = arith.addf %125, %127 : vector<16x32xf32>
    %cst_36 = arith.constant dense<0.000000e+00> : vector<16xf32>
    %129 = vector.multi_reduction <add>, %128, %cst_36 [1] : vector<16x32xf32> to vector<16xf32>
    %130 = vector.shape_cast %129 : vector<16xf32> to vector<16x1xf32>
    %cst_37 = arith.constant 3.200000e+01 : f32
    %131 = vector.broadcast %cst_37 : f32 to vector<16x1xf32>
    %132 = arith.divf %130, %131 : vector<16x1xf32>
    %133 = vector.broadcast %132 : vector<16x1xf32> to vector<16x32xf32>
    %134 = arith.subf %128, %133 : vector<16x32xf32>
    %135 = arith.mulf %134, %134 : vector<16x32xf32>
    %cst_38 = arith.constant dense<0.000000e+00> : vector<16xf32>
    %136 = vector.multi_reduction <add>, %135, %cst_38 [1] : vector<16x32xf32> to vector<16xf32>
    %137 = vector.shape_cast %136 : vector<16xf32> to vector<16x1xf32>
    %cst_39 = arith.constant 3.200000e+01 : f32
    %138 = vector.broadcast %cst_39 : f32 to vector<16x1xf32>
    %139 = arith.divf %137, %138 : vector<16x1xf32>
    %140 = vector.broadcast %132 : vector<16x1xf32> to vector<16x32xf32>
    %141 = arith.subf %128, %140 : vector<16x32xf32>
    %cst_40 = arith.constant 9.99999974E-6 : f32
    %142 = vector.broadcast %cst_40 : f32 to vector<16x1xf32>
    %143 = arith.addf %139, %142 : vector<16x1xf32>
    %144 = math.rsqrt %143 : vector<16x1xf32>
    %145 = vector.broadcast %144 : vector<16x1xf32> to vector<16x32xf32>
    %146 = arith.mulf %141, %145 : vector<16x32xf32>
    %147 = vector.extract_strided_slice %2 {offsets = [4, 0], sizes = [1, 32], strides = [1, 1]} : vector<6x32xf32> to vector<1x32xf32>
    %148 = vector.broadcast %147 : vector<1x32xf32> to vector<16x32xf32>
    %149 = arith.mulf %146, %148 : vector<16x32xf32>
    %150 = vector.extract_strided_slice %2 {offsets = [5, 0], sizes = [1, 32], strides = [1, 1]} : vector<6x32xf32> to vector<1x32xf32>
    %151 = vector.broadcast %150 : vector<1x32xf32> to vector<16x32xf32>
    %152 = arith.addf %149, %151 : vector<16x32xf32>
    %c0_41 = arith.constant 0 : index
    %c0_42 = arith.constant 0 : index
    %153 = vector.load %arg4[%c0_41, %c0_42] : memref<16x32xf32, #tpu.memory_space<vmem>>, vector<16x32xf32>
    tpu.vector_store %arg4[%c0_41, %c0_42], %152 {strides = array<i32>} : memref<16x32xf32, #tpu.memory_space<vmem>>, vector<16x32xf32>,
    return
  }
}

</mosaic_0001>

<llo_original>
// kernel: self_attention_layer.1
$region0: #{self_attention_layer.1}
  #allocation0 [shape = 'u32[]', space=smem, size = 0x4, offset = 0x4, fixed_abs, tag = 'smem constant byte address 0x4 - core index']
  #allocation1 [shape = 'u32[144,128]{1,0:T(1,128)}', space=vmem, size = 0x12000, scoped, tag = 'internal scratch']
  %s0 = inlined_call_operand.hbm [shape: f32[16,32], index: 0, kind: input, shape index: {}]
  %s1 = inlined_call_operand.hbm [shape: f32[16,32], index: 1, kind: input, shape index: {}]
  %s2 = inlined_call_operand.hbm [shape: f32[32,128], index: 2, kind: input, shape index: {}]
  %s3 = inlined_call_operand.hbm [shape: f32[6,32], index: 3, kind: input, shape index: {}]
  %s4 = inlined_call_operand.hbm [shape: f32[16,32], index: 4, kind: output, shape index: {}]
  %s5 = sld [smem:[#allocation0]]
  $region42: #{self_attention_layer.1} parent=0
    _
  %s7 = ssub.s32 1, %s5
  %s8 = scalar_select 0, %s7, %s5
  $region1: #{self_attention_layer.1} parent=0
    #allocation2 [shape = 'u8[8192]{0}', space=vmem, size = 0x2000, scoped, tag = 'input window, operand 0, single buffered']
    #allocation3 [shape = 's32[1]{0}', space=sflag, size = 0x4, scoped, tag = 'scoped memory for self_attention_layer.1']
    #allocation4 [shape = 's32[1]{0}', space=sflag, size = 0x4, scoped, tag = 'scoped memory for self_attention_layer.1']
    #allocation5 [shape = 'u8[8192]{0}', space=vmem, size = 0x2000, scoped, tag = 'input window, operand 1, single buffered']
    #allocation6 [shape = 's32[1]{0}', space=sflag, size = 0x4, scoped, tag = 'scoped memory for self_attention_layer.1']
    #allocation7 [shape = 'u8[16384]{0}', space=vmem, size = 0x4000, scoped, tag = 'input window, operand 2, single buffered']
    #allocation8 [shape = 'u8[4096]{0}', space=vmem, size = 0x1000, scoped, tag = 'input window, operand 3, single buffered']
    #allocation9 [shape = 's32[1]{0}', space=sflag, size = 0x4, scoped, tag = 'scoped memory for self_attention_layer.1']
    #allocation10 [shape = 'u8[8192]{0}', space=vmem, size = 0x2000, scoped, tag = 'output window, operand 0, single buffered']
    %9 = vsyncpa [#allocation3], 0
    %10 = vsyncpa [#allocation6], 0
    %11 = vsyncpa [#allocation9], 0
    %12 = vsyncpa [#allocation4], 0
    // Predicated region
    $region2: #{self_attention_layer.1} parent=1 // pred_check
      _
    $region3: #{self_attention_layer.1} parent=1 // pred_check_branch
      %14 = sbr.rel (0) target = $region5
    $region4: #{self_attention_layer.1} parent=1 // pred_region
      %s16 = ssub.s32 256, 256
      %17 = vsyncadd [#allocation3], %s16
      %s18 = sshll.u32 [#allocation2], 4
      %s19 = int_to_ptr.vmem [resolvable:$true] %s18
      %24 = dma.hbm_to_vmem [thread:$0]  %s0, 256, %s19, [#allocation3], 128, 128, 8
    $region5: #{self_attention_layer.1} parent=1 // pred_fallthru
      _
    // Predicated region
    $region6: #{self_attention_layer.1} parent=1 // pred_check
      _
    $region7: #{self_attention_layer.1} parent=1 // pred_check_branch
      %26 = sbr.rel (0) target = $region9
    $region8: #{self_attention_layer.1} parent=1 // pred_region
      %s28 = ssub.s32 256, 256
      %29 = vsyncadd [#allocation6], %s28
      %s30 = sshll.u32 [#allocation5], 4
      %s31 = int_to_ptr.vmem [resolvable:$true] %s30
      %36 = dma.hbm_to_vmem [thread:$0]  %s1, 256, %s31, [#allocation6], 128, 128, 8
    $region9: #{self_attention_layer.1} parent=1 // pred_fallthru
      _
    // Predicated region
    $region10: #{self_attention_layer.1} parent=1 // pred_check
      _
    $region11: #{self_attention_layer.1} parent=1 // pred_check_branch
      %38 = sbr.rel (0) target = $region13
    $region12: #{self_attention_layer.1} parent=1 // pred_region
      %s40 = ssub.s32 512, 512
      %41 = vsyncadd [#allocation6], %s40
      %s42 = sshll.u32 [#allocation7], 4
      %s43 = int_to_ptr.vmem [resolvable:$true] %s42
      %48 = dma.hbm_to_vmem [thread:$0]  %s2, 512, %s43, [#allocation6], 128, 128, 8
    $region13: #{self_attention_layer.1} parent=1 // pred_fallthru
      _
    // Predicated region
    $region14: #{self_attention_layer.1} parent=1 // pred_check
      _
    $region15: #{self_attention_layer.1} parent=1 // pred_check_branch
      %50 = sbr.rel (0) target = $region17
    $region16: #{self_attention_layer.1} parent=1 // pred_region
      %s52 = ssub.s32 128, 128
      %53 = vsyncadd [#allocation9], %s52
      %s55 = sshll.u32 [#allocation8], 4
      %s56 = int_to_ptr.vmem [resolvable:$true] %s55
      %58 = dma.hbm_to_vmem [thread:$0]  %s3, 128, %s56, [#allocation9]
    $region17: #{self_attention_layer.1} parent=1 // pred_fallthru
      _
    // Predicated region
    $region18: #{self_attention_layer.1} parent=1 // pred_check
      _
    $region19: #{self_attention_layer.1} parent=1 // pred_check_branch
      %60 = sbr.rel (0) target = $region21
    $region20: #{self_attention_layer.1} parent=1 // pred_region
      %61 = dma.done [#allocation3], 256
    $region21: #{self_attention_layer.1} parent=1 // pred_fallthru
      _
    // Predicated region
    $region22: #{self_attention_layer.1} parent=1 // pred_check
      _
    $region23: #{self_attention_layer.1} parent=1 // pred_check_branch
      %63 = sbr.rel (0) target = $region25
    $region24: #{self_attention_layer.1} parent=1 // pred_region
      %64 = dma.done [#allocation6], 256
    $region25: #{self_attention_layer.1} parent=1 // pred_fallthru
      _
    // Predicated region
    $region26: #{self_attention_layer.1} parent=1 // pred_check
      _
    $region27: #{self_attention_layer.1} parent=1 // pred_check_branch
      %66 = sbr.rel (0) target = $region29
    $region28: #{self_attention_layer.1} parent=1 // pred_region
      %67 = dma.done [#allocation6], 512
    $region29: #{self_attention_layer.1} parent=1 // pred_fallthru
      _
    // Predicated region
    $region30: #{self_attention_layer.1} parent=1 // pred_check
      _
    $region31: #{self_attention_layer.1} parent=1 // pred_check_branch
      %69 = sbr.rel (0) target = $region33
    $region32: #{self_attention_layer.1} parent=1 // pred_region
      %70 = dma.done [#allocation9], 128
    $region33: #{self_attention_layer.1} parent=1 // pred_fallthru
      _
    %v71 = vld [vmem:[#allocation2] sm:$0xff]
    %v72 = vld [vmem:[#allocation2 + $0x8] sm:$0xff]
    %v73 = vld [vmem:[#allocation7] sm:$0xff]
    %v74 = vld [vmem:[#allocation7 + $0x8] sm:$0xff]
    %v75 = vld [vmem:[#allocation7 + $0x10] sm:$0xff]
    %v76 = vld [vmem:[#allocation7 + $0x18] sm:$0xff]
    %v77 = vld [vmem:[#allocation8] sm:$0x3f]
    %v78 = vld [vmem:[#allocation5] sm:$0xff]
    %v79 = vld [vmem:[#allocation5 + $0x8] sm:$0xff]
    %v80 = vadd.f32 %v71, %v78
    %v81 = vadd.f32 %v72, %v79
    %vm82 = vcmask 261120
    %v84 = vsel %vm82, %v80, 0
    %v87 = vsel %vm82, %v81, 0
    %89 = vmatprep.subr.mxu0 0.0
    %90 = vmatpush1.msra.mxu0 0.0
    %91 = vmatprep.subr.mxu0 0.0
    %92 = vmatpush1.msra.mxu0 0.0
    %93 = vmatprep.subr.mxu0 0.0
    %94 = vmatpush1.msra.mxu0 0.0
    %95 = vmatprep.subr.mxu0 0.0
    %96 = vmatpush1.msra.mxu0 0.0
    %97 = vmatprep.subr.mxu0 0.0
    %98 = vmatpush1.msra.mxu0 0.0
    %99 = vmatprep.subr.mxu0 0.0
    %100 = vmatpush1.msra.mxu0 0.0
    %101 = vmatprep.subr.mxu0 0.0
    %102 = vmatpush1.msra.mxu0 0.0
    %103 = vmatprep.subr.mxu0 0.0
    %104 = vmatpush1.msra.mxu0 0.0
    %105 = vmatprep.subr.mxu0 0.0
    %106 = vmatpush1.msra.mxu0 0.0
    %107 = vmatprep.subr.mxu0 0.0
    %108 = vmatpush1.msra.mxu0 0.0
    %109 = vmatprep.subr.mxu0 0.0
    %110 = vmatpush1.msra.mxu0 0.0
    %111 = vmatprep.subr.mxu0 0.0
    %112 = vmatpush1.msra.mxu0 0.0
    %113 = vmatprep.subr.mxu0 0.0
    %v114 = vand.u32 %v76, 4294901760
    %115 = vmatpush1.msra.mxu0 %v114
    %116 = vmatprep.subr.mxu0 0.0
    %v117 = vand.u32 %v75, 4294901760
    %118 = vmatpush1.msra.mxu0 %v117
    %119 = vmatprep.subr.mxu0 0.0
    %v120 = vand.u32 %v74, 4294901760
    %121 = vmatpush1.msra.mxu0 %v120
    %122 = vmatprep.subr.mxu0 0.0
    %v123 = vand.u32 %v73, 4294901760
    %124 = vmatpush1.msra.mxu0 %v123
    %125 = vmatprep.subr.mxu0 0.0
    %126 = vmatpush2.msra.mxu0 0.0
    %127 = vmatprep.subr.mxu0 0.0
    %128 = vmatpush2.msra.mxu0 0.0
    %129 = vmatprep.subr.mxu0 0.0
    %130 = vmatpush2.msra.mxu0 0.0
    %131 = vmatprep.subr.mxu0 0.0
    %132 = vmatpush2.msra.mxu0 0.0
    %133 = vmatprep.subr.mxu0 0.0
    %134 = vmatpush2.msra.mxu0 0.0
    %135 = vmatprep.subr.mxu0 0.0
    %136 = vmatpush2.msra.mxu0 0.0
    %137 = vmatprep.subr.mxu0 0.0
    %138 = vmatpush2.msra.mxu0 0.0
    %139 = vmatprep.subr.mxu0 0.0
    %140 = vmatpush2.msra.mxu0 0.0
    %141 = vmatprep.subr.mxu0 0.0
    %142 = vmatpush2.msra.mxu0 0.0
    %143 = vmatprep.subr.mxu0 0.0
    %144 = vmatpush2.msra.mxu0 0.0
    %145 = vmatprep.subr.mxu0 0.0
    %146 = vmatpush2.msra.mxu0 0.0
    %147 = vmatprep.subr.mxu0 0.0
    %148 = vmatpush2.msra.mxu0 0.0
    %149 = vmatprep.subr.mxu0 0.0
    %150 = vmatpush2.msra.mxu0 0.0
    %151 = vmatprep.subr.mxu0 0.0
    %152 = vmatpush2.msra.mxu0 0.0
    %153 = vmatprep.subr.mxu0 0.0
    %154 = vmatpush2.msra.mxu0 0.0
    %155 = vmatprep.subr.mxu0 0.0
    %156 = vmatpush2.msra.mxu0 0.0
    %157 = vmatprep.mubr.f32.mxu0 0.0
    %v158 = vand.u32 %v84, 4294901760
    %v159 = vsub.f32 %v84, %v158
    %v160 = vand.u32 %v159, 4294901760
    %v161 = vsub.f32 %v159, %v160
    %v162 = vand.u32 %v161, 4294901760
    %163 = vmatmul.mubr.f32.gmra.mxu0 %v162
    %v164 = vpop.f32.mrf.mxu0
    %v165 = vadd.f32 0.0, %v164
    %v166 = vpop.f32.mrf.mxu0
    %167 = vmatprep.mubr.f32.mxu0 0.0
    %v168 = vand.u32 %v87, 4294901760
    %v169 = vsub.f32 %v87, %v168
    %v170 = vand.u32 %v169, 4294901760
    %v171 = vsub.f32 %v169, %v170
    %v172 = vand.u32 %v171, 4294901760
    %173 = vmatmul.mubr.f32.gmra.mxu0 %v172
    %v174 = vpop.f32.mrf.mxu0
    %v175 = vadd.f32 0.0, %v174
    %v176 = vpop.f32.mrf.mxu0
    %177 = vdwg.mxu0
    %178 = vmatprep.subr.mxu0 0.0
    %179 = vmatpush1.msra.mxu0 0.0
    %180 = vmatprep.subr.mxu0 0.0
    %181 = vmatpush1.msra.mxu0 0.0
    %182 = vmatprep.subr.mxu0 0.0
    %183 = vmatpush1.msra.mxu0 0.0
    %184 = vmatprep.subr.mxu0 0.0
    %185 = vmatpush1.msra.mxu0 0.0
    %186 = vmatprep.subr.mxu0 0.0
    %187 = vmatpush1.msra.mxu0 0.0
    %188 = vmatprep.subr.mxu0 0.0
    %189 = vmatpush1.msra.mxu0 0.0
    %190 = vmatprep.subr.mxu0 0.0
    %191 = vmatpush1.msra.mxu0 0.0
    %192 = vmatprep.subr.mxu0 0.0
    %193 = vmatpush1.msra.mxu0 0.0
    %194 = vmatprep.subr.mxu0 0.0
    %195 = vmatpush1.msra.mxu0 0.0
    %196 = vmatprep.subr.mxu0 0.0
    %197 = vmatpush1.msra.mxu0 0.0
    %198 = vmatprep.subr.mxu0 0.0
    %199 = vmatpush1.msra.mxu0 0.0
    %200 = vmatprep.subr.mxu0 0.0
    %201 = vmatpush1.msra.mxu0 0.0
    %202 = vmatprep.subr.mxu0 0.0
    %v203 = vand.u32 %v76, 4294901760
    %v204 = vsub.f32 %v76, %v203
    %v205 = vand.u32 %v204, 4294901760
    %v206 = vsub.f32 %v204, %v205
    %v207 = vand.u32 %v206, 4294901760
    %208 = vmatpush1.msra.mxu0 %v207
    %209 = vmatprep.subr.mxu0 0.0
    %v210 = vand.u32 %v75, 4294901760
    %v211 = vsub.f32 %v75, %v210
    %v212 = vand.u32 %v211, 4294901760
    %v213 = vsub.f32 %v211, %v212
    %v214 = vand.u32 %v213, 4294901760
    %215 = vmatpush1.msra.mxu0 %v214
    %216 = vmatprep.subr.mxu0 0.0
    %v217 = vand.u32 %v74, 4294901760
    %v218 = vsub.f32 %v74, %v217
    %v219 = vand.u32 %v218, 4294901760
    %v220 = vsub.f32 %v218, %v219
    %v221 = vand.u32 %v220, 4294901760
    %222 = vmatpush1.msra.mxu0 %v221
    %223 = vmatprep.subr.mxu0 0.0
    %v224 = vand.u32 %v73, 4294901760
    %v225 = vsub.f32 %v73, %v224
    %v226 = vand.u32 %v225, 4294901760
    %v227 = vsub.f32 %v225, %v226
    %v228 = vand.u32 %v227, 4294901760
    %229 = vmatpush1.msra.mxu0 %v228
    %230 = vmatprep.subr.mxu0 0.0
    %231 = vmatpush2.msra.mxu0 0.0
    %232 = vmatprep.subr.mxu0 0.0
    %233 = vmatpush2.msra.mxu0 0.0
    %234 = vmatprep.subr.mxu0 0.0
    %235 = vmatpush2.msra.mxu0 0.0
    %236 = vmatprep.subr.mxu0 0.0
    %237 = vmatpush2.msra.mxu0 0.0
    %238 = vmatprep.subr.mxu0 0.0
    %239 = vmatpush2.msra.mxu0 0.0
    %240 = vmatprep.subr.mxu0 0.0
    %241 = vmatpush2.msra.mxu0 0.0
    %242 = vmatprep.subr.mxu0 0.0
    %243 = vmatpush2.msra.mxu0 0.0
    %244 = vmatprep.subr.mxu0 0.0
    %245 = vmatpush2.msra.mxu0 0.0
    %246 = vmatprep.subr.mxu0 0.0
    %247 = vmatpush2.msra.mxu0 0.0
    %248 = vmatprep.subr.mxu0 0.0
    %249 = vmatpush2.msra.mxu0 0.0
    %250 = vmatprep.subr.mxu0 0.0
    %251 = vmatpush2.msra.mxu0 0.0
    %252 = vmatprep.subr.mxu0 0.0
    %253 = vmatpush2.msra.mxu0 0.0
    %254 = vmatprep.subr.mxu0 0.0
    %255 = vmatpush2.msra.mxu0 0.0
    %256 = vmatprep.subr.mxu0 0.0
    %257 = vmatpush2.msra.mxu0 0.0
    %258 = vmatprep.subr.mxu0 0.0
    %259 = vmatpush2.msra.mxu0 0.0
    %260 = vmatprep.subr.mxu0 0.0
    %261 = vmatpush2.msra.mxu0 0.0
    %262 = vmatprep.mubr.f32.mxu0 0.0
    %v263 = vand.u32 %v84, 4294901760
    %264 = vmatmul.mubr.f32.gmra.mxu0 %v263
    %v265 = vpop.f32.mrf.mxu0
    %v266 = vadd.f32 %v165, %v265
    %v267 = vpop.f32.mrf.mxu0
    %268 = vmatprep.mubr.f32.mxu0 0.0
    %v269 = vand.u32 %v87, 4294901760
    %270 = vmatmul.mubr.f32.gmra.mxu0 %v269
    %v271 = vpop.f32.mrf.mxu0
    %v272 = vadd.f32 %v175, %v271
    %v273 = vpop.f32.mrf.mxu0
    %274 = vdwg.mxu0
    %275 = vmatprep.subr.mxu0 0.0
    %276 = vmatpush1.msra.mxu0 0.0
    %277 = vmatprep.subr.mxu0 0.0
    %278 = vmatpush1.msra.mxu0 0.0
    %279 = vmatprep.subr.mxu0 0.0
    %280 = vmatpush1.msra.mxu0 0.0
    %281 = vmatprep.subr.mxu0 0.0
    %282 = vmatpush1.msra.mxu0 0.0
    %283 = vmatprep.subr.mxu0 0.0
    %284 = vmatpush1.msra.mxu0 0.0
    %285 = vmatprep.subr.mxu0 0.0
    %286 = vmatpush1.msra.mxu0 0.0
    %287 = vmatprep.subr.mxu0 0.0
    %288 = vmatpush1.msra.mxu0 0.0
    %289 = vmatprep.subr.mxu0 0.0
    %290 = vmatpush1.msra.mxu0 0.0
    %291 = vmatprep.subr.mxu0 0.0
    %292 = vmatpush1.msra.mxu0 0.0
    %293 = vmatprep.subr.mxu0 0.0
    %294 = vmatpush1.msra.mxu0 0.0
    %295 = vmatprep.subr.mxu0 0.0
    %296 = vmatpush1.msra.mxu0 0.0
    %297 = vmatprep.subr.mxu0 0.0
    %298 = vmatpush1.msra.mxu0 0.0
    %299 = vmatprep.subr.mxu0 0.0
    %v300 = vand.u32 %v76, 4294901760
    %v301 = vsub.f32 %v76, %v300
    %302 = vmatpush1.msra.mxu0 %v301
    %303 = vmatprep.subr.mxu0 0.0
    %v304 = vand.u32 %v75, 4294901760
    %v305 = vsub.f32 %v75, %v304
    %306 = vmatpush1.msra.mxu0 %v305
    %307 = vmatprep.subr.mxu0 0.0
    %v308 = vand.u32 %v74, 4294901760
    %v309 = vsub.f32 %v74, %v308
    %310 = vmatpush1.msra.mxu0 %v309
    %311 = vmatprep.subr.mxu0 0.0
    %v312 = vand.u32 %v73, 4294901760
    %v313 = vsub.f32 %v73, %v312
    %314 = vmatpush1.msra.mxu0 %v313
    %315 = vmatprep.subr.mxu0 0.0
    %316 = vmatpush2.msra.mxu0 0.0
    %317 = vmatprep.subr.mxu0 0.0
    %318 = vmatpush2.msra.mxu0 0.0
    %319 = vmatprep.subr.mxu0 0.0
    %320 = vmatpush2.msra.mxu0 0.0
    %321 = vmatprep.subr.mxu0 0.0
    %322 = vmatpush2.msra.mxu0 0.0
    %323 = vmatprep.subr.mxu0 0.0
    %324 = vmatpush2.msra.mxu0 0.0
    %325 = vmatprep.subr.mxu0 0.0
    %326 = vmatpush2.msra.mxu0 0.0
    %327 = vmatprep.subr.mxu0 0.0
    %328 = vmatpush2.msra.mxu0 0.0
    %329 = vmatprep.subr.mxu0 0.0
    %330 = vmatpush2.msra.mxu0 0.0
    %331 = vmatprep.subr.mxu0 0.0
    %332 = vmatpush2.msra.mxu0 0.0
    %333 = vmatprep.subr.mxu0 0.0
    %334 = vmatpush2.msra.mxu0 0.0
    %335 = vmatprep.subr.mxu0 0.0
    %336 = vmatpush2.msra.mxu0 0.0
    %337 = vmatprep.subr.mxu0 0.0
    %338 = vmatpush2.msra.mxu0 0.0
    %339 = vmatprep.subr.mxu0 0.0
    %340 = vmatpush2.msra.mxu0 0.0
    %341 = vmatprep.subr.mxu0 0.0
    %342 = vmatpush2.msra.mxu0 0.0
    %343 = vmatprep.subr.mxu0 0.0
    %344 = vmatpush2.msra.mxu0 0.0
    %345 = vmatprep.subr.mxu0 0.0
    %346 = vmatpush2.msra.mxu0 0.0
    %347 = vmatprep.mubr.f32.mxu0 0.0
    %v348 = vand.u32 %v84, 4294901760
    %v349 = vsub.f32 %v84, %v348
    %350 = vmatmul.mubr.f32.gmra.mxu0 %v349
    %v351 = vpop.f32.mrf.mxu0
    %v352 = vadd.f32 %v266, %v351
    %v353 = vpop.f32.mrf.mxu0
    %354 = vmatprep.mubr.f32.mxu0 0.0
    %v355 = vand.u32 %v87, 4294901760
    %v356 = vsub.f32 %v87, %v355
    %357 = vmatmul.mubr.f32.gmra.mxu0 %v356
    %v358 = vpop.f32.mrf.mxu0
    %v359 = vadd.f32 %v272, %v358
    %v360 = vpop.f32.mrf.mxu0
    %361 = vdwg.mxu0
    %362 = vmatprep.subr.mxu0 0.0
    %363 = vmatpush1.msra.mxu0 0.0
    %364 = vmatprep.subr.mxu0 0.0
    %365 = vmatpush1.msra.mxu0 0.0
    %366 = vmatprep.subr.mxu0 0.0
    %367 = vmatpush1.msra.mxu0 0.0
    %368 = vmatprep.subr.mxu0 0.0
    %369 = vmatpush1.msra.mxu0 0.0
    %370 = vmatprep.subr.mxu0 0.0
    %371 = vmatpush1.msra.mxu0 0.0
    %372 = vmatprep.subr.mxu0 0.0
    %373 = vmatpush1.msra.mxu0 0.0
    %374 = vmatprep.subr.mxu0 0.0
    %375 = vmatpush1.msra.mxu0 0.0
    %376 = vmatprep.subr.mxu0 0.0
    %377 = vmatpush1.msra.mxu0 0.0
    %378 = vmatprep.subr.mxu0 0.0
    %379 = vmatpush1.msra.mxu0 0.0
    %380 = vmatprep.subr.mxu0 0.0
    %381 = vmatpush1.msra.mxu0 0.0
    %382 = vmatprep.subr.mxu0 0.0
    %383 = vmatpush1.msra.mxu0 0.0
    %384 = vmatprep.subr.mxu0 0.0
    %385 = vmatpush1.msra.mxu0 0.0
    %386 = vmatprep.subr.mxu0 0.0
    %v387 = vand.u32 %v76, 4294901760
    %388 = vmatpush1.msra.mxu0 %v387
    %389 = vmatprep.subr.mxu0 0.0
    %v390 = vand.u32 %v75, 4294901760
    %391 = vmatpush1.msra.mxu0 %v390
    %392 = vmatprep.subr.mxu0 0.0
    %v393 = vand.u32 %v74, 4294901760
    %394 = vmatpush1.msra.mxu0 %v393
    %395 = vmatprep.subr.mxu0 0.0
    %v396 = vand.u32 %v73, 4294901760
    %397 = vmatpush1.msra.mxu0 %v396
    %398 = vmatprep.subr.mxu0 0.0
    %399 = vmatpush2.msra.mxu0 0.0
    %400 = vmatprep.subr.mxu0 0.0
    %401 = vmatpush2.msra.mxu0 0.0
    %402 = vmatprep.subr.mxu0 0.0
    %403 = vmatpush2.msra.mxu0 0.0
    %404 = vmatprep.subr.mxu0 0.0
    %405 = vmatpush2.msra.mxu0 0.0
    %406 = vmatprep.subr.mxu0 0.0
    %407 = vmatpush2.msra.mxu0 0.0
    %408 = vmatprep.subr.mxu0 0.0
    %409 = vmatpush2.msra.mxu0 0.0
    %410 = vmatprep.subr.mxu0 0.0
    %411 = vmatpush2.msra.mxu0 0.0
    %412 = vmatprep.subr.mxu0 0.0
    %413 = vmatpush2.msra.mxu0 0.0
    %414 = vmatprep.subr.mxu0 0.0
    %415 = vmatpush2.msra.mxu0 0.0
    %416 = vmatprep.subr.mxu0 0.0
    %417 = vmatpush2.msra.mxu0 0.0
    %418 = vmatprep.subr.mxu0 0.0
    %419 = vmatpush2.msra.mxu0 0.0
    %420 = vmatprep.subr.mxu0 0.0
    %421 = vmatpush2.msra.mxu0 0.0
    %422 = vmatprep.subr.mxu0 0.0
    %423 = vmatpush2.msra.mxu0 0.0
    %424 = vmatprep.subr.mxu0 0.0
    %425 = vmatpush2.msra.mxu0 0.0
    %426 = vmatprep.subr.mxu0 0.0
    %427 = vmatpush2.msra.mxu0 0.0
    %428 = vmatprep.subr.mxu0 0.0
    %429 = vmatpush2.msra.mxu0 0.0
    %430 = vmatprep.mubr.f32.mxu0 0.0
    %v431 = vand.u32 %v84, 4294901760
    %v432 = vsub.f32 %v84, %v431
    %v433 = vand.u32 %v432, 4294901760
    %434 = vmatmul.mubr.f32.gmra.mxu0 %v433
    %v435 = vpop.f32.mrf.mxu0
    %v436 = vadd.f32 %v352, %v435
    %v437 = vpop.f32.mrf.mxu0
    %438 = vmatprep.mubr.f32.mxu0 0.0
    %v439 = vand.u32 %v87, 4294901760
    %v440 = vsub.f32 %v87, %v439
    %v441 = vand.u32 %v440, 4294901760
    %442 = vmatmul.mubr.f32.gmra.mxu0 %v441
    %v443 = vpop.f32.mrf.mxu0
    %v444 = vadd.f32 %v359, %v443
    %v445 = vpop.f32.mrf.mxu0
    %446 = vdwg.mxu0
    %447 = vmatprep.subr.mxu0 0.0
    %448 = vmatpush1.msra.mxu0 0.0
    %449 = vmatprep.subr.mxu0 0.0
    %450 = vmatpush1.msra.mxu0 0.0
    %451 = vmatprep.subr.mxu0 0.0
    %452 = vmatpush1.msra.mxu0 0.0
    %453 = vmatprep.subr.mxu0 0.0
    %454 = vmatpush1.msra.mxu0 0.0
    %455 = vmatprep.subr.mxu0 0.0
    %456 = vmatpush1.msra.mxu0 0.0
    %457 = vmatprep.subr.mxu0 0.0
    %458 = vmatpush1.msra.mxu0 0.0
    %459 = vmatprep.subr.mxu0 0.0
    %460 = vmatpush1.msra.mxu0 0.0
    %461 = vmatprep.subr.mxu0 0.0
    %462 = vmatpush1.msra.mxu0 0.0
    %463 = vmatprep.subr.mxu0 0.0
    %464 = vmatpush1.msra.mxu0 0.0
    %465 = vmatprep.subr.mxu0 0.0
    %466 = vmatpush1.msra.mxu0 0.0
    %467 = vmatprep.subr.mxu0 0.0
    %468 = vmatpush1.msra.mxu0 0.0
    %469 = vmatprep.subr.mxu0 0.0
    %470 = vmatpush1.msra.mxu0 0.0
    %471 = vmatprep.subr.mxu0 0.0
    %v472 = vand.u32 %v76, 4294901760
    %v473 = vsub.f32 %v76, %v472
    %v474 = vand.u32 %v473, 4294901760
    %475 = vmatpush1.msra.mxu0 %v474
    %476 = vmatprep.subr.mxu0 0.0
    %v477 = vand.u32 %v75, 4294901760
    %v478 = vsub.f32 %v75, %v477
    %v479 = vand.u32 %v478, 4294901760
    %480 = vmatpush1.msra.mxu0 %v479
    %481 = vmatprep.subr.mxu0 0.0
    %v482 = vand.u32 %v74, 4294901760
    %v483 = vsub.f32 %v74, %v482
    %v484 = vand.u32 %v483, 4294901760
    %485 = vmatpush1.msra.mxu0 %v484
    %486 = vmatprep.subr.mxu0 0.0
    %v487 = vand.u32 %v73, 4294901760
    %v488 = vsub.f32 %v73, %v487
    %v489 = vand.u32 %v488, 4294901760
    %490 = vmatpush1.msra.mxu0 %v489
    %491 = vmatprep.subr.mxu0 0.0
    %492 = vmatpush2.msra.mxu0 0.0
    %493 = vmatprep.subr.mxu0 0.0
    %494 = vmatpush2.msra.mxu0 0.0
    %495 = vmatprep.subr.mxu0 0.0
    %496 = vmatpush2.msra.mxu0 0.0
    %497 = vmatprep.subr.mxu0 0.0
    %498 = vmatpush2.msra.mxu0 0.0
    %499 = vmatprep.subr.mxu0 0.0
    %500 = vmatpush2.msra.mxu0 0.0
    %501 = vmatprep.subr.mxu0 0.0
    %502 = vmatpush2.msra.mxu0 0.0
    %503 = vmatprep.subr.mxu0 0.0
    %504 = vmatpush2.msra.mxu0 0.0
    %505 = vmatprep.subr.mxu0 0.0
    %506 = vmatpush2.msra.mxu0 0.0
    %507 = vmatprep.subr.mxu0 0.0
    %508 = vmatpush2.msra.mxu0 0.0
    %509 = vmatprep.subr.mxu0 0.0
    %510 = vmatpush2.msra.mxu0 0.0
    %511 = vmatprep.subr.mxu0 0.0
    %512 = vmatpush2.msra.mxu0 0.0
    %513 = vmatprep.subr.mxu0 0.0
    %514 = vmatpush2.msra.mxu0 0.0
    %515 = vmatprep.subr.mxu0 0.0
    %516 = vmatpush2.msra.mxu0 0.0
    %517 = vmatprep.subr.mxu0 0.0
    %518 = vmatpush2.msra.mxu0 0.0
    %519 = vmatprep.subr.mxu0 0.0
    %520 = vmatpush2.msra.mxu0 0.0
    %521 = vmatprep.subr.mxu0 0.0
    %522 = vmatpush2.msra.mxu0 0.0
    %523 = vmatprep.mubr.f32.mxu0 0.0
    %v524 = vand.u32 %v84, 4294901760
    %525 = vmatmul.mubr.f32.gmra.mxu0 %v524
    %v526 = vpop.f32.mrf.mxu0
    %v527 = vadd.f32 %v436, %v526
    %v528 = vpop.f32.mrf.mxu0
    %529 = vmatprep.mubr.f32.mxu0 0.0
    %v530 = vand.u32 %v87, 4294901760
    %531 = vmatmul.mubr.f32.gmra.mxu0 %v530
    %v532 = vpop.f32.mrf.mxu0
    %v533 = vadd.f32 %v444, %v532
    %v534 = vpop.f32.mrf.mxu0
    %535 = vdwg.mxu0
    %536 = vmatprep.subr.mxu0 0.0
    %537 = vmatpush1.msra.mxu0 0.0
    %538 = vmatprep.subr.mxu0 0.0
    %539 = vmatpush1.msra.mxu0 0.0
    %540 = vmatprep.subr.mxu0 0.0
    %541 = vmatpush1.msra.mxu0 0.0
    %542 = vmatprep.subr.mxu0 0.0
    %543 = vmatpush1.msra.mxu0 0.0
    %544 = vmatprep.subr.mxu0 0.0
    %545 = vmatpush1.msra.mxu0 0.0
    %546 = vmatprep.subr.mxu0 0.0
    %547 = vmatpush1.msra.mxu0 0.0
    %548 = vmatprep.subr.mxu0 0.0
    %549 = vmatpush1.msra.mxu0 0.0
    %550 = vmatprep.subr.mxu0 0.0
    %551 = vmatpush1.msra.mxu0 0.0
    %552 = vmatprep.subr.mxu0 0.0
    %553 = vmatpush1.msra.mxu0 0.0
    %554 = vmatprep.subr.mxu0 0.0
    %555 = vmatpush1.msra.mxu0 0.0
    %556 = vmatprep.subr.mxu0 0.0
    %557 = vmatpush1.msra.mxu0 0.0
    %558 = vmatprep.subr.mxu0 0.0
    %559 = vmatpush1.msra.mxu0 0.0
    %560 = vmatprep.subr.mxu0 0.0
    %v561 = vand.u32 %v76, 4294901760
    %562 = vmatpush1.msra.mxu0 %v561
    %563 = vmatprep.subr.mxu0 0.0
    %v564 = vand.u32 %v75, 4294901760
    %565 = vmatpush1.msra.mxu0 %v564
    %566 = vmatprep.subr.mxu0 0.0
    %v567 = vand.u32 %v74, 4294901760
    %568 = vmatpush1.msra.mxu0 %v567
    %569 = vmatprep.subr.mxu0 0.0
    %v570 = vand.u32 %v73, 4294901760
    %571 = vmatpush1.msra.mxu0 %v570
    %572 = vmatprep.subr.mxu0 0.0
    %573 = vmatpush2.msra.mxu0 0.0
    %574 = vmatprep.subr.mxu0 0.0
    %575 = vmatpush2.msra.mxu0 0.0
    %576 = vmatprep.subr.mxu0 0.0
    %577 = vmatpush2.msra.mxu0 0.0
    %578 = vmatprep.subr.mxu0 0.0
    %579 = vmatpush2.msra.mxu0 0.0
    %580 = vmatprep.subr.mxu0 0.0
    %581 = vmatpush2.msra.mxu0 0.0
    %582 = vmatprep.subr.mxu0 0.0
    %583 = vmatpush2.msra.mxu0 0.0
    %584 = vmatprep.subr.mxu0 0.0
    %585 = vmatpush2.msra.mxu0 0.0
    %586 = vmatprep.subr.mxu0 0.0
    %587 = vmatpush2.msra.mxu0 0.0
    %588 = vmatprep.subr.mxu0 0.0
    %589 = vmatpush2.msra.mxu0 0.0
    %590 = vmatprep.subr.mxu0 0.0
    %591 = vmatpush2.msra.mxu0 0.0
    %592 = vmatprep.subr.mxu0 0.0
    %593 = vmatpush2.msra.mxu0 0.0
    %594 = vmatprep.subr.mxu0 0.0
    %595 = vmatpush2.msra.mxu0 0.0
    %596 = vmatprep.subr.mxu0 0.0
    %597 = vmatpush2.msra.mxu0 0.0
    %598 = vmatprep.subr.mxu0 0.0
    %599 = vmatpush2.msra.mxu0 0.0
    %600 = vmatprep.subr.mxu0 0.0
    %601 = vmatpush2.msra.mxu0 0.0
    %602 = vmatprep.subr.mxu0 0.0
    %603 = vmatpush2.msra.mxu0 0.0
    %604 = vmatprep.mubr.f32.mxu0 0.0
    %v605 = vand.u32 %v84, 4294901760
    %606 = vmatmul.mubr.f32.gmra.mxu0 %v605
    %v607 = vpop.f32.mrf.mxu0
    %v608 = vadd.f32 %v527, %v607
    %v609 = vpop.f32.mrf.mxu0
    %610 = vmatprep.mubr.f32.mxu0 0.0
    %v611 = vand.u32 %v87, 4294901760
    %612 = vmatmul.mubr.f32.gmra.mxu0 %v611
    %v613 = vpop.f32.mrf.mxu0
    %v614 = vadd.f32 %v533, %v613
    %v615 = vpop.f32.mrf.mxu0
    %616 = vdwg.mxu0
    %v617 = vlaneseq
    %v618 = vshrl.u32 %v617, 7
    %v619 = vsub.s32 0, %v618
    %v620 = vrot.slane %v77, %v619
    %v621 = vadd.f32 %v608, %v620
    %v622 = vadd.f32 %v614, %v620
    %v623 = vlaneseq
    %v624 = vshrl.u32 %v623, 7
    %v625 = vsub.s32 1, %v624
    %v626 = vrot.slane %v77, %v625
    %628 = vrot.lane.b32.xlu0 %v626, 32
    %v629 = vpop.permute.xlu0 %628
    %v631 = vadd.f32 %v608, %v629
    %v632 = vadd.f32 %v614, %v629
    %v633 = vlaneseq
    %v634 = vshrl.u32 %v633, 7
    %v635 = vsub.s32 2, %v634
    %v636 = vrot.slane %v77, %v635
    %641 = vrot.lane.b32.xlu0 %v73, 64
    %v642 = vpop.permute.xlu0 %641
    %643 = vrot.lane.b32.xlu0 %v74, 64
    %v644 = vpop.permute.xlu0 %643
    %645 = vrot.lane.b32.xlu0 %v75, 64
    %v646 = vpop.permute.xlu0 %645
    %647 = vrot.lane.b32.xlu0 %v76, 64
    %v648 = vpop.permute.xlu0 %647
    %v654 = vsel %vm82, %v71, 0
    %v657 = vsel %vm82, %v72, 0
    %659 = vmatprep.subr.mxu0 0.0
    %660 = vmatpush1.msra.mxu0 0.0
    %661 = vmatprep.subr.mxu0 0.0
    %662 = vmatpush1.msra.mxu0 0.0
    %663 = vmatprep.subr.mxu0 0.0
    %664 = vmatpush1.msra.mxu0 0.0
    %665 = vmatprep.subr.mxu0 0.0
    %666 = vmatpush1.msra.mxu0 0.0
    %667 = vmatprep.subr.mxu0 0.0
    %668 = vmatpush1.msra.mxu0 0.0
    %669 = vmatprep.subr.mxu0 0.0
    %670 = vmatpush1.msra.mxu0 0.0
    %671 = vmatprep.subr.mxu0 0.0
    %672 = vmatpush1.msra.mxu0 0.0
    %673 = vmatprep.subr.mxu0 0.0
    %674 = vmatpush1.msra.mxu0 0.0
    %675 = vmatprep.subr.mxu0 0.0
    %676 = vmatpush1.msra.mxu0 0.0
    %677 = vmatprep.subr.mxu0 0.0
    %678 = vmatpush1.msra.mxu0 0.0
    %679 = vmatprep.subr.mxu0 0.0
    %680 = vmatpush1.msra.mxu0 0.0
    %681 = vmatprep.subr.mxu0 0.0
    %682 = vmatpush1.msra.mxu0 0.0
    %683 = vmatprep.subr.mxu0 0.0
    %v684 = vand.u32 %v648, 4294901760
    %685 = vmatpush1.msra.mxu0 %v684
    %686 = vmatprep.subr.mxu0 0.0
    %v687 = vand.u32 %v646, 4294901760
    %688 = vmatpush1.msra.mxu0 %v687
    %689 = vmatprep.subr.mxu0 0.0
    %v690 = vand.u32 %v644, 4294901760
    %691 = vmatpush1.msra.mxu0 %v690
    %692 = vmatprep.subr.mxu0 0.0
    %v693 = vand.u32 %v642, 4294901760
    %694 = vmatpush1.msra.mxu0 %v693
    %695 = vmatprep.subr.mxu0 0.0
    %696 = vmatpush2.msra.mxu0 0.0
    %697 = vmatprep.subr.mxu0 0.0
    %698 = vmatpush2.msra.mxu0 0.0
    %699 = vmatprep.subr.mxu0 0.0
    %700 = vmatpush2.msra.mxu0 0.0
    %701 = vmatprep.subr.mxu0 0.0
    %702 = vmatpush2.msra.mxu0 0.0
    %703 = vmatprep.subr.mxu0 0.0
    %704 = vmatpush2.msra.mxu0 0.0
    %705 = vmatprep.subr.mxu0 0.0
    %706 = vmatpush2.msra.mxu0 0.0
    %707 = vmatprep.subr.mxu0 0.0
    %708 = vmatpush2.msra.mxu0 0.0
    %709 = vmatprep.subr.mxu0 0.0
    %710 = vmatpush2.msra.mxu0 0.0
    %711 = vmatprep.subr.mxu0 0.0
    %712 = vmatpush2.msra.mxu0 0.0
    %713 = vmatprep.subr.mxu0 0.0
    %714 = vmatpush2.msra.mxu0 0.0
    %715 = vmatprep.subr.mxu0 0.0
    %716 = vmatpush2.msra.mxu0 0.0
    %717 = vmatprep.subr.mxu0 0.0
    %718 = vmatpush2.msra.mxu0 0.0
    %719 = vmatprep.subr.mxu0 0.0
    %720 = vmatpush2.msra.mxu0 0.0
    %721 = vmatprep.subr.mxu0 0.0
    %722 = vmatpush2.msra.mxu0 0.0
    %723 = vmatprep.subr.mxu0 0.0
    %724 = vmatpush2.msra.mxu0 0.0
    %725 = vmatprep.subr.mxu0 0.0
    %726 = vmatpush2.msra.mxu0 0.0
    %727 = vmatprep.mubr.f32.mxu0 0.0
    %v728 = vand.u32 %v654, 4294901760
    %v729 = vsub.f32 %v654, %v728
    %v730 = vand.u32 %v729, 4294901760
    %v731 = vsub.f32 %v729, %v730
    %v732 = vand.u32 %v731, 4294901760
    %733 = vmatmul.mubr.f32.gmra.mxu0 %v732
    %v734 = vpop.f32.mrf.mxu0
    %v735 = vadd.f32 %v636, %v734
    %v736 = vpop.f32.mrf.mxu0
    %737 = vmatprep.mubr.f32.mxu0 0.0
    %v738 = vand.u32 %v657, 4294901760
    %v739 = vsub.f32 %v657, %v738
    %v740 = vand.u32 %v739, 4294901760
    %v741 = vsub.f32 %v739, %v740
    %v742 = vand.u32 %v741, 4294901760
    %743 = vmatmul.mubr.f32.gmra.mxu0 %v742
    %v744 = vpop.f32.mrf.mxu0
    %v745 = vadd.f32 %v636, %v744
    %v746 = vpop.f32.mrf.mxu0
    %747 = vdwg.mxu0
    %748 = vmatprep.subr.mxu0 0.0
    %749 = vmatpush1.msra.mxu0 0.0
    %750 = vmatprep.subr.mxu0 0.0
    %751 = vmatpush1.msra.mxu0 0.0
    %752 = vmatprep.subr.mxu0 0.0
    %753 = vmatpush1.msra.mxu0 0.0
    %754 = vmatprep.subr.mxu0 0.0
    %755 = vmatpush1.msra.mxu0 0.0
    %756 = vmatprep.subr.mxu0 0.0
    %757 = vmatpush1.msra.mxu0 0.0
    %758 = vmatprep.subr.mxu0 0.0
    %759 = vmatpush1.msra.mxu0 0.0
    %760 = vmatprep.subr.mxu0 0.0
    %761 = vmatpush1.msra.mxu0 0.0
    %762 = vmatprep.subr.mxu0 0.0
    %763 = vmatpush1.msra.mxu0 0.0
    %764 = vmatprep.subr.mxu0 0.0
    %765 = vmatpush1.msra.mxu0 0.0
    %766 = vmatprep.subr.mxu0 0.0
    %767 = vmatpush1.msra.mxu0 0.0
    %768 = vmatprep.subr.mxu0 0.0
    %769 = vmatpush1.msra.mxu0 0.0
    %770 = vmatprep.subr.mxu0 0.0
    %771 = vmatpush1.msra.mxu0 0.0
    %772 = vmatprep.subr.mxu0 0.0
    %v773 = vand.u32 %v648, 4294901760
    %v774 = vsub.f32 %v648, %v773
    %v775 = vand.u32 %v774, 4294901760
    %v776 = vsub.f32 %v774, %v775
    %v777 = vand.u32 %v776, 4294901760
    %778 = vmatpush1.msra.mxu0 %v777
    %779 = vmatprep.subr.mxu0 0.0
    %v780 = vand.u32 %v646, 4294901760
    %v781 = vsub.f32 %v646, %v780
    %v782 = vand.u32 %v781, 4294901760
    %v783 = vsub.f32 %v781, %v782
    %v784 = vand.u32 %v783, 4294901760
    %785 = vmatpush1.msra.mxu0 %v784
    %786 = vmatprep.subr.mxu0 0.0
    %v787 = vand.u32 %v644, 4294901760
    %v788 = vsub.f32 %v644, %v787
    %v789 = vand.u32 %v788, 4294901760
    %v790 = vsub.f32 %v788, %v789
    %v791 = vand.u32 %v790, 4294901760
    %792 = vmatpush1.msra.mxu0 %v791
    %793 = vmatprep.subr.mxu0 0.0
    %v794 = vand.u32 %v642, 4294901760
    %v795 = vsub.f32 %v642, %v794
    %v796 = vand.u32 %v795, 4294901760
    %v797 = vsub.f32 %v795, %v796
    %v798 = vand.u32 %v797, 4294901760
    %799 = vmatpush1.msra.mxu0 %v798
    %800 = vmatprep.subr.mxu0 0.0
    %801 = vmatpush2.msra.mxu0 0.0
    %802 = vmatprep.subr.mxu0 0.0
    %803 = vmatpush2.msra.mxu0 0.0
    %804 = vmatprep.subr.mxu0 0.0
    %805 = vmatpush2.msra.mxu0 0.0
    %806 = vmatprep.subr.mxu0 0.0
    %807 = vmatpush2.msra.mxu0 0.0
    %808 = vmatprep.subr.mxu0 0.0
    %809 = vmatpush2.msra.mxu0 0.0
    %810 = vmatprep.subr.mxu0 0.0
    %811 = vmatpush2.msra.mxu0 0.0
    %812 = vmatprep.subr.mxu0 0.0
    %813 = vmatpush2.msra.mxu0 0.0
    %814 = vmatprep.subr.mxu0 0.0
    %815 = vmatpush2.msra.mxu0 0.0
    %816 = vmatprep.subr.mxu0 0.0
    %817 = vmatpush2.msra.mxu0 0.0
    %818 = vmatprep.subr.mxu0 0.0
    %819 = vmatpush2.msra.mxu0 0.0
    %820 = vmatprep.subr.mxu0 0.0
    %821 = vmatpush2.msra.mxu0 0.0
    %822 = vmatprep.subr.mxu0 0.0
    %823 = vmatpush2.msra.mxu0 0.0
    %824 = vmatprep.subr.mxu0 0.0
    %825 = vmatpush2.msra.mxu0 0.0
    %826 = vmatprep.subr.mxu0 0.0
    %827 = vmatpush2.msra.mxu0 0.0
    %828 = vmatprep.subr.mxu0 0.0
    %829 = vmatpush2.msra.mxu0 0.0
    %830 = vmatprep.subr.mxu0 0.0
    %831 = vmatpush2.msra.mxu0 0.0
    %832 = vmatprep.mubr.f32.mxu0 0.0
    %v833 = vand.u32 %v654, 4294901760
    %834 = vmatmul.mubr.f32.gmra.mxu0 %v833
    %v835 = vpop.f32.mrf.mxu0
    %v836 = vadd.f32 %v735, %v835
    %v837 = vpop.f32.mrf.mxu0
    %838 = vmatprep.mubr.f32.mxu0 0.0
    %v839 = vand.u32 %v657, 4294901760
    %840 = vmatmul.mubr.f32.gmra.mxu0 %v839
    %v841 = vpop.f32.mrf.mxu0
    %v842 = vadd.f32 %v745, %v841
    %v843 = vpop.f32.mrf.mxu0
    %844 = vdwg.mxu0
    %845 = vmatprep.subr.mxu0 0.0
    %846 = vmatpush1.msra.mxu0 0.0
    %847 = vmatprep.subr.mxu0 0.0
    %848 = vmatpush1.msra.mxu0 0.0
    %849 = vmatprep.subr.mxu0 0.0
    %850 = vmatpush1.msra.mxu0 0.0
    %851 = vmatprep.subr.mxu0 0.0
    %852 = vmatpush1.msra.mxu0 0.0
    %853 = vmatprep.subr.mxu0 0.0
    %854 = vmatpush1.msra.mxu0 0.0
    %855 = vmatprep.subr.mxu0 0.0
    %856 = vmatpush1.msra.mxu0 0.0
    %857 = vmatprep.subr.mxu0 0.0
    %858 = vmatpush1.msra.mxu0 0.0
    %859 = vmatprep.subr.mxu0 0.0
    %860 = vmatpush1.msra.mxu0 0.0
    %861 = vmatprep.subr.mxu0 0.0
    %862 = vmatpush1.msra.mxu0 0.0
    %863 = vmatprep.subr.mxu0 0.0
    %864 = vmatpush1.msra.mxu0 0.0
    %865 = vmatprep.subr.mxu0 0.0
    %866 = vmatpush1.msra.mxu0 0.0
    %867 = vmatprep.subr.mxu0 0.0
    %868 = vmatpush1.msra.mxu0 0.0
    %869 = vmatprep.subr.mxu0 0.0
    %v870 = vand.u32 %v648, 4294901760
    %v871 = vsub.f32 %v648, %v870
    %872 = vmatpush1.msra.mxu0 %v871
    %873 = vmatprep.subr.mxu0 0.0
    %v874 = vand.u32 %v646, 4294901760
    %v875 = vsub.f32 %v646, %v874
    %876 = vmatpush1.msra.mxu0 %v875
    %877 = vmatprep.subr.mxu0 0.0
    %v878 = vand.u32 %v644, 4294901760
    %v879 = vsub.f32 %v644, %v878
    %880 = vmatpush1.msra.mxu0 %v879
    %881 = vmatprep.subr.mxu0 0.0
    %v882 = vand.u32 %v642, 4294901760
    %v883 = vsub.f32 %v642, %v882
    %884 = vmatpush1.msra.mxu0 %v883
    %885 = vmatprep.subr.mxu0 0.0
    %886 = vmatpush2.msra.mxu0 0.0
    %887 = vmatprep.subr.mxu0 0.0
    %888 = vmatpush2.msra.mxu0 0.0
    %889 = vmatprep.subr.mxu0 0.0
    %890 = vmatpush2.msra.mxu0 0.0
    %891 = vmatprep.subr.mxu0 0.0
    %892 = vmatpush2.msra.mxu0 0.0
    %893 = vmatprep.subr.mxu0 0.0
    %894 = vmatpush2.msra.mxu0 0.0
    %895 = vmatprep.subr.mxu0 0.0
    %896 = vmatpush2.msra.mxu0 0.0
    %897 = vmatprep.subr.mxu0 0.0
    %898 = vmatpush2.msra.mxu0 0.0
    %899 = vmatprep.subr.mxu0 0.0
    %900 = vmatpush2.msra.mxu0 0.0
    %901 = vmatprep.subr.mxu0 0.0
    %902 = vmatpush2.msra.mxu0 0.0
    %903 = vmatprep.subr.mxu0 0.0
    %904 = vmatpush2.msra.mxu0 0.0
    %905 = vmatprep.subr.mxu0 0.0
    %906 = vmatpush2.msra.mxu0 0.0
    %907 = vmatprep.subr.mxu0 0.0
    %908 = vmatpush2.msra.mxu0 0.0
    %909 = vmatprep.subr.mxu0 0.0
    %910 = vmatpush2.msra.mxu0 0.0
    %911 = vmatprep.subr.mxu0 0.0
    %912 = vmatpush2.msra.mxu0 0.0
    %913 = vmatprep.subr.mxu0 0.0
    %914 = vmatpush2.msra.mxu0 0.0
    %915 = vmatprep.subr.mxu0 0.0
    %916 = vmatpush2.msra.mxu0 0.0
    %917 = vmatprep.mubr.f32.mxu0 0.0
    %v918 = vand.u32 %v654, 4294901760
    %v919 = vsub.f32 %v654, %v918
    %920 = vmatmul.mubr.f32.gmra.mxu0 %v919
    %v921 = vpop.f32.mrf.mxu0
    %v922 = vadd.f32 %v836, %v921
    %v923 = vpop.f32.mrf.mxu0
    %924 = vmatprep.mubr.f32.mxu0 0.0
    %v925 = vand.u32 %v657, 4294901760
    %v926 = vsub.f32 %v657, %v925
    %927 = vmatmul.mubr.f32.gmra.mxu0 %v926
    %v928 = vpop.f32.mrf.mxu0
    %v929 = vadd.f32 %v842, %v928
    %v930 = vpop.f32.mrf.mxu0
    %931 = vdwg.mxu0
    %932 = vmatprep.subr.mxu0 0.0
    %933 = vmatpush1.msra.mxu0 0.0
    %934 = vmatprep.subr.mxu0 0.0
    %935 = vmatpush1.msra.mxu0 0.0
    %936 = vmatprep.subr.mxu0 0.0
    %937 = vmatpush1.msra.mxu0 0.0
    %938 = vmatprep.subr.mxu0 0.0
    %939 = vmatpush1.msra.mxu0 0.0
    %940 = vmatprep.subr.mxu0 0.0
    %941 = vmatpush1.msra.mxu0 0.0
    %942 = vmatprep.subr.mxu0 0.0
    %943 = vmatpush1.msra.mxu0 0.0
    %944 = vmatprep.subr.mxu0 0.0
    %945 = vmatpush1.msra.mxu0 0.0
    %946 = vmatprep.subr.mxu0 0.0
    %947 = vmatpush1.msra.mxu0 0.0
    %948 = vmatprep.subr.mxu0 0.0
    %949 = vmatpush1.msra.mxu0 0.0
    %950 = vmatprep.subr.mxu0 0.0
    %951 = vmatpush1.msra.mxu0 0.0
    %952 = vmatprep.subr.mxu0 0.0
    %953 = vmatpush1.msra.mxu0 0.0
    %954 = vmatprep.subr.mxu0 0.0
    %955 = vmatpush1.msra.mxu0 0.0
    %956 = vmatprep.subr.mxu0 0.0
    %v957 = vand.u32 %v648, 4294901760
    %958 = vmatpush1.msra.mxu0 %v957
    %959 = vmatprep.subr.mxu0 0.0
    %v960 = vand.u32 %v646, 4294901760
    %961 = vmatpush1.msra.mxu0 %v960
    %962 = vmatprep.subr.mxu0 0.0
    %v963 = vand.u32 %v644, 4294901760
    %964 = vmatpush1.msra.mxu0 %v963
    %965 = vmatprep.subr.mxu0 0.0
    %v966 = vand.u32 %v642, 4294901760
    %967 = vmatpush1.msra.mxu0 %v966
    %968 = vmatprep.subr.mxu0 0.0
    %969 = vmatpush2.msra.mxu0 0.0
    %970 = vmatprep.subr.mxu0 0.0
    %971 = vmatpush2.msra.mxu0 0.0
    %972 = vmatprep.subr.mxu0 0.0
    %973 = vmatpush2.msra.mxu0 0.0
    %974 = vmatprep.subr.mxu0 0.0
    %975 = vmatpush2.msra.mxu0 0.0
    %976 = vmatprep.subr.mxu0 0.0
    %977 = vmatpush2.msra.mxu0 0.0
    %978 = vmatprep.subr.mxu0 0.0
    %979 = vmatpush2.msra.mxu0 0.0
    %980 = vmatprep.subr.mxu0 0.0
    %981 = vmatpush2.msra.mxu0 0.0
    %982 = vmatprep.subr.mxu0 0.0
    %983 = vmatpush2.msra.mxu0 0.0
    %984 = vmatprep.subr.mxu0 0.0
    %985 = vmatpush2.msra.mxu0 0.0
    %986 = vmatprep.subr.mxu0 0.0
    %987 = vmatpush2.msra.mxu0 0.0
    %988 = vmatprep.subr.mxu0 0.0
    %989 = vmatpush2.msra.mxu0 0.0
    %990 = vmatprep.subr.mxu0 0.0
    %991 = vmatpush2.msra.mxu0 0.0
    %992 = vmatprep.subr.mxu0 0.0
    %993 = vmatpush2.msra.mxu0 0.0
    %994 = vmatprep.subr.mxu0 0.0
    %995 = vmatpush2.msra.mxu0 0.0
    %996 = vmatprep.subr.mxu0 0.0
    %997 = vmatpush2.msra.mxu0 0.0
    %998 = vmatprep.subr.mxu0 0.0
    %999 = vmatpush2.msra.mxu0 0.0
    %1000 = vmatprep.mubr.f32.mxu0 0.0
    %v1001 = vand.u32 %v654, 4294901760
    %v1002 = vsub.f32 %v654, %v1001
    %v1003 = vand.u32 %v1002, 4294901760
    %1004 = vmatmul.mubr.f32.gmra.mxu0 %v1003
    %v1005 = vpop.f32.mrf.mxu0
    %v1006 = vadd.f32 %v922, %v1005
    %v1007 = vpop.f32.mrf.mxu0
    %1008 = vmatprep.mubr.f32.mxu0 0.0
    %v1009 = vand.u32 %v657, 4294901760
    %v1010 = vsub.f32 %v657, %v1009
    %v1011 = vand.u32 %v1010, 4294901760
    %1012 = vmatmul.mubr.f32.gmra.mxu0 %v1011
    %v1013 = vpop.f32.mrf.mxu0
    %v1014 = vadd.f32 %v929, %v1013
    %v1015 = vpop.f32.mrf.mxu0
    %1016 = vdwg.mxu0
    %1017 = vmatprep.subr.mxu0 0.0
    %1018 = vmatpush1.msra.mxu0 0.0
    %1019 = vmatprep.subr.mxu0 0.0
    %1020 = vmatpush1.msra.mxu0 0.0
    %1021 = vmatprep.subr.mxu0 0.0
    %1022 = vmatpush1.msra.mxu0 0.0
    %1023 = vmatprep.subr.mxu0 0.0
    %1024 = vmatpush1.msra.mxu0 0.0
    %1025 = vmatprep.subr.mxu0 0.0
    %1026 = vmatpush1.msra.mxu0 0.0
    %1027 = vmatprep.subr.mxu0 0.0
    %1028 = vmatpush1.msra.mxu0 0.0
    %1029 = vmatprep.subr.mxu0 0.0
    %1030 = vmatpush1.msra.mxu0 0.0
    %1031 = vmatprep.subr.mxu0 0.0
    %1032 = vmatpush1.msra.mxu0 0.0
    %1033 = vmatprep.subr.mxu0 0.0
    %1034 = vmatpush1.msra.mxu0 0.0
    %1035 = vmatprep.subr.mxu0 0.0
    %1036 = vmatpush1.msra.mxu0 0.0
    %1037 = vmatprep.subr.mxu0 0.0
    %1038 = vmatpush1.msra.mxu0 0.0
    %1039 = vmatprep.subr.mxu0 0.0
    %1040 = vmatpush1.msra.mxu0 0.0
    %1041 = vmatprep.subr.mxu0 0.0
    %v1042 = vand.u32 %v648, 4294901760
    %v1043 = vsub.f32 %v648, %v1042
    %v1044 = vand.u32 %v1043, 4294901760
    %1045 = vmatpush1.msra.mxu0 %v1044
    %1046 = vmatprep.subr.mxu0 0.0
    %v1047 = vand.u32 %v646, 4294901760
    %v1048 = vsub.f32 %v646, %v1047
    %v1049 = vand.u32 %v1048, 4294901760
    %1050 = vmatpush1.msra.mxu0 %v1049
    %1051 = vmatprep.subr.mxu0 0.0
    %v1052 = vand.u32 %v644, 4294901760
    %v1053 = vsub.f32 %v644, %v1052
    %v1054 = vand.u32 %v1053, 4294901760
    %1055 = vmatpush1.msra.mxu0 %v1054
    %1056 = vmatprep.subr.mxu0 0.0
    %v1057 = vand.u32 %v642, 4294901760
    %v1058 = vsub.f32 %v642, %v1057
    %v1059 = vand.u32 %v1058, 4294901760
    %1060 = vmatpush1.msra.mxu0 %v1059
    %1061 = vmatprep.subr.mxu0 0.0
    %1062 = vmatpush2.msra.mxu0 0.0
    %1063 = vmatprep.subr.mxu0 0.0
    %1064 = vmatpush2.msra.mxu0 0.0
    %1065 = vmatprep.subr.mxu0 0.0
    %1066 = vmatpush2.msra.mxu0 0.0
    %1067 = vmatprep.subr.mxu0 0.0
    %1068 = vmatpush2.msra.mxu0 0.0
    %1069 = vmatprep.subr.mxu0 0.0
    %1070 = vmatpush2.msra.mxu0 0.0
    %1071 = vmatprep.subr.mxu0 0.0
    %1072 = vmatpush2.msra.mxu0 0.0
    %1073 = vmatprep.subr.mxu0 0.0
    %1074 = vmatpush2.msra.mxu0 0.0
    %1075 = vmatprep.subr.mxu0 0.0
    %1076 = vmatpush2.msra.mxu0 0.0
    %1077 = vmatprep.subr.mxu0 0.0
    %1078 = vmatpush2.msra.mxu0 0.0
    %1079 = vmatprep.subr.mxu0 0.0
    %1080 = vmatpush2.msra.mxu0 0.0
    %1081 = vmatprep.subr.mxu0 0.0
    %1082 = vmatpush2.msra.mxu0 0.0
    %1083 = vmatprep.subr.mxu0 0.0
    %1084 = vmatpush2.msra.mxu0 0.0
    %1085 = vmatprep.subr.mxu0 0.0
    %1086 = vmatpush2.msra.mxu0 0.0
    %1087 = vmatprep.subr.mxu0 0.0
    %1088 = vmatpush2.msra.mxu0 0.0
    %1089 = vmatprep.subr.mxu0 0.0
    %1090 = vmatpush2.msra.mxu0 0.0
    %1091 = vmatprep.subr.mxu0 0.0
    %1092 = vmatpush2.msra.mxu0 0.0
    %1093 = vmatprep.mubr.f32.mxu0 0.0
    %v1094 = vand.u32 %v654, 4294901760
    %1095 = vmatmul.mubr.f32.gmra.mxu0 %v1094
    %v1096 = vpop.f32.mrf.mxu0
    %v1097 = vadd.f32 %v1006, %v1096
    %v1098 = vpop.f32.mrf.mxu0
    %1099 = vmatprep.mubr.f32.mxu0 0.0
    %v1100 = vand.u32 %v657, 4294901760
    %1101 = vmatmul.mubr.f32.gmra.mxu0 %v1100
    %v1102 = vpop.f32.mrf.mxu0
    %v1103 = vadd.f32 %v1014, %v1102
    %v1104 = vpop.f32.mrf.mxu0
    %1105 = vdwg.mxu0
    %1106 = vmatprep.subr.mxu0 0.0
    %1107 = vmatpush1.msra.mxu0 0.0
    %1108 = vmatprep.subr.mxu0 0.0
    %1109 = vmatpush1.msra.mxu0 0.0
    %1110 = vmatprep.subr.mxu0 0.0
    %1111 = vmatpush1.msra.mxu0 0.0
    %1112 = vmatprep.subr.mxu0 0.0
    %1113 = vmatpush1.msra.mxu0 0.0
    %1114 = vmatprep.subr.mxu0 0.0
    %1115 = vmatpush1.msra.mxu0 0.0
    %1116 = vmatprep.subr.mxu0 0.0
    %1117 = vmatpush1.msra.mxu0 0.0
    %1118 = vmatprep.subr.mxu0 0.0
    %1119 = vmatpush1.msra.mxu0 0.0
    %1120 = vmatprep.subr.mxu0 0.0
    %1121 = vmatpush1.msra.mxu0 0.0
    %1122 = vmatprep.subr.mxu0 0.0
    %1123 = vmatpush1.msra.mxu0 0.0
    %1124 = vmatprep.subr.mxu0 0.0
    %1125 = vmatpush1.msra.mxu0 0.0
    %1126 = vmatprep.subr.mxu0 0.0
    %1127 = vmatpush1.msra.mxu0 0.0
    %1128 = vmatprep.subr.mxu0 0.0
    %1129 = vmatpush1.msra.mxu0 0.0
    %1130 = vmatprep.subr.mxu0 0.0
    %v1131 = vand.u32 %v648, 4294901760
    %1132 = vmatpush1.msra.mxu0 %v1131
    %1133 = vmatprep.subr.mxu0 0.0
    %v1134 = vand.u32 %v646, 4294901760
    %1135 = vmatpush1.msra.mxu0 %v1134
    %1136 = vmatprep.subr.mxu0 0.0
    %v1137 = vand.u32 %v644, 4294901760
    %1138 = vmatpush1.msra.mxu0 %v1137
    %1139 = vmatprep.subr.mxu0 0.0
    %v1140 = vand.u32 %v642, 4294901760
    %1141 = vmatpush1.msra.mxu0 %v1140
    %1142 = vmatprep.subr.mxu0 0.0
    %1143 = vmatpush2.msra.mxu0 0.0
    %1144 = vmatprep.subr.mxu0 0.0
    %1145 = vmatpush2.msra.mxu0 0.0
    %1146 = vmatprep.subr.mxu0 0.0
    %1147 = vmatpush2.msra.mxu0 0.0
    %1148 = vmatprep.subr.mxu0 0.0
    %1149 = vmatpush2.msra.mxu0 0.0
    %1150 = vmatprep.subr.mxu0 0.0
    %1151 = vmatpush2.msra.mxu0 0.0
    %1152 = vmatprep.subr.mxu0 0.0
    %1153 = vmatpush2.msra.mxu0 0.0
    %1154 = vmatprep.subr.mxu0 0.0
    %1155 = vmatpush2.msra.mxu0 0.0
    %1156 = vmatprep.subr.mxu0 0.0
    %1157 = vmatpush2.msra.mxu0 0.0
    %1158 = vmatprep.subr.mxu0 0.0
    %1159 = vmatpush2.msra.mxu0 0.0
    %1160 = vmatprep.subr.mxu0 0.0
    %1161 = vmatpush2.msra.mxu0 0.0
    %1162 = vmatprep.subr.mxu0 0.0
    %1163 = vmatpush2.msra.mxu0 0.0
    %1164 = vmatprep.subr.mxu0 0.0
    %1165 = vmatpush2.msra.mxu0 0.0
    %1166 = vmatprep.subr.mxu0 0.0
    %1167 = vmatpush2.msra.mxu0 0.0
    %1168 = vmatprep.subr.mxu0 0.0
    %1169 = vmatpush2.msra.mxu0 0.0
    %1170 = vmatprep.subr.mxu0 0.0
    %1171 = vmatpush2.msra.mxu0 0.0
    %1172 = vmatprep.subr.mxu0 0.0
    %1173 = vmatpush2.msra.mxu0 0.0
    %1174 = vmatprep.mubr.f32.mxu0 0.0
    %v1175 = vand.u32 %v654, 4294901760
    %1176 = vmatmul.mubr.f32.gmra.mxu0 %v1175
    %v1177 = vpop.f32.mrf.mxu0
    %v1178 = vadd.f32 %v1097, %v1177
    %v1179 = vpop.f32.mrf.mxu0
    %1180 = vmatprep.mubr.f32.mxu0 0.0
    %v1181 = vand.u32 %v657, 4294901760
    %1182 = vmatmul.mubr.f32.gmra.mxu0 %v1181
    %v1183 = vpop.f32.mrf.mxu0
    %v1184 = vadd.f32 %v1103, %v1183
    %v1185 = vpop.f32.mrf.mxu0
    %1186 = vdwg.mxu0
    %v1187 = vlaneseq
    %v1188 = vshrl.u32 %v1187, 7
    %v1189 = vadd.s32 %v1188, 8
    %vm1190 = vcmp.lt.s32.totalorder %v1188, 0
    %v1191 = vsub.s32 0, %v1188
    %v1192 = vsel %vm1190, %v1191, %v1188
    %v1193 = vshrl.u32 %v1192, 1
    %v1194 = vand.u32 %v1192, 1
    %v1195 = vsub.s32 0, %v1194
    %v1196 = vsel %vm1190, %v1195, %v1194
    %vm1197 = vcmp.lt.s32.totalorder %v1189, 0
    %v1198 = vsub.s32 0, %v1189
    %v1199 = vsel %vm1197, %v1198, %v1189
    %v1200 = vshrl.u32 %v1199, 1
    %v1201 = vand.u32 %v1199, 1
    %v1202 = vsub.s32 0, %v1201
    %v1203 = vsel %vm1197, %v1202, %v1201
    %vm1204 = vcmp.ne.s32.totalorder %v1196, 0
    %vm1205 = vcmp.ne.s32.totalorder %v1203, 0
    %vm1206 = vcmp.lt.s32.totalorder %v1196, 0
    %vm1207 = vcmp.lt.s32.totalorder %v1203, 0
    %vm1208 = vmand %vm1206, %vm1204
    %vm1209 = vmand %vm1207, %vm1205
    %v1210 = vadd.s32 %v1196, 2
    %v1211 = vadd.s32 %v1203, 2
    %v1212 = vsel %vm1208, %v1210, %v1196
    %v1213 = vsel %vm1209, %v1211, %v1203
    %v1214 = vlaneseq
    %v1215 = vand.u32 %v1214, 127
    %vm1216 = vcmp.lt.s32.totalorder %v1215, 0
    %v1217 = vsub.s32 0, %v1215
    %v1218 = vsel %vm1216, %v1217, %v1215
    %v1219 = vshrl.u32 %v1218, 1
    %v1220 = vand.u32 %v1218, 1
    %v1221 = vsub.s32 0, %v1220
    %v1222 = vsel %vm1216, %v1221, %v1220
    %vm1223 = vcmp.ne.s32.totalorder %v1222, 0
    %vm1224 = vcmp.lt.s32.totalorder %v1222, 0
    %vm1225 = vmand %vm1224, %vm1223
    %v1226 = vadd.s32 %v1222, 2
    %v1227 = vsel %vm1225, %v1226, %v1222
    %vm1228 = vcmp.eq.s32.totalorder %v1212, %v1227
    %vm1229 = vcmp.eq.s32.totalorder %v1213, %v1227
    %v1230 = vsel %vm1228, 0.0, -1e+30
    %v1231 = vsel %vm1229, 0.0, -1e+30
    %1234 = vrot.lane.b32.xlu0 %v631, 96
    %v1235 = vpop.permute.xlu0 %1234
    %1236 = vrot.lane.b32.xlu0 %v632, 96
    %v1237 = vpop.permute.xlu0 %1236
    %vm1238 = vcmask 64512
    %v1240 = vsel %vm1238, %v621, 0
    %v1243 = vsel %vm1238, %v622, 0
    %v1245 = vsel %vm1238, %v1235, 0
    %v1247 = vsel %vm1238, %v1237, 0
    %1249 = vmatprep.subr.mxu0 0.0
    %1250 = vmatpush1.xpose.msra.mxu0 0.0
    %1251 = vmatprep.subr.mxu0 0.0
    %1252 = vmatpush1.xpose.msra.mxu0 0.0
    %1253 = vmatprep.subr.mxu0 0.0
    %1254 = vmatpush1.xpose.msra.mxu0 0.0
    %1255 = vmatprep.subr.mxu0 0.0
    %1256 = vmatpush1.xpose.msra.mxu0 0.0
    %1257 = vmatprep.subr.mxu0 0.0
    %1258 = vmatpush1.xpose.msra.mxu0 0.0
    %1259 = vmatprep.subr.mxu0 0.0
    %1260 = vmatpush1.xpose.msra.mxu0 0.0
    %1261 = vmatprep.subr.mxu0 0.0
    %1262 = vmatpush1.xpose.msra.mxu0 0.0
    %1263 = vmatprep.subr.mxu0 0.0
    %1264 = vmatpush1.xpose.msra.mxu0 0.0
    %1265 = vmatprep.subr.mxu0 0.0
    %1266 = vmatpush1.xpose.msra.mxu0 0.0
    %1267 = vmatprep.subr.mxu0 0.0
    %1268 = vmatpush1.xpose.msra.mxu0 0.0
    %1269 = vmatprep.subr.mxu0 0.0
    %1270 = vmatpush1.xpose.msra.mxu0 0.0
    %1271 = vmatprep.subr.mxu0 0.0
    %1272 = vmatpush1.xpose.msra.mxu0 0.0
    %1273 = vmatprep.subr.mxu0 0.0
    %1274 = vmatpush1.xpose.msra.mxu0 0.0
    %1275 = vmatprep.subr.mxu0 0.0
    %1276 = vmatpush1.xpose.msra.mxu0 0.0
    %1277 = vmatprep.subr.mxu0 0.0
    %v1278 = vand.u32 %v1247, 4294901760
    %1279 = vmatpush1.xpose.msra.mxu0 %v1278
    %1280 = vmatprep.subr.mxu0 0.0
    %v1281 = vand.u32 %v1245, 4294901760
    %1282 = vmatpush1.xpose.msra.mxu0 %v1281
    %1283 = vmatprep.subr.mxu0 0.0
    %1284 = vmatpush2.xpose.msra.mxu0 0.0
    %1285 = vmatprep.subr.mxu0 0.0
    %1286 = vmatpush2.xpose.msra.mxu0 0.0
    %1287 = vmatprep.subr.mxu0 0.0
    %1288 = vmatpush2.xpose.msra.mxu0 0.0
    %1289 = vmatprep.subr.mxu0 0.0
    %1290 = vmatpush2.xpose.msra.mxu0 0.0
    %1291 = vmatprep.subr.mxu0 0.0
    %1292 = vmatpush2.xpose.msra.mxu0 0.0
    %1293 = vmatprep.subr.mxu0 0.0
    %1294 = vmatpush2.xpose.msra.mxu0 0.0
    %1295 = vmatprep.subr.mxu0 0.0
    %1296 = vmatpush2.xpose.msra.mxu0 0.0
    %1297 = vmatprep.subr.mxu0 0.0
    %1298 = vmatpush2.xpose.msra.mxu0 0.0
    %1299 = vmatprep.subr.mxu0 0.0
    %1300 = vmatpush2.xpose.msra.mxu0 0.0
    %1301 = vmatprep.subr.mxu0 0.0
    %1302 = vmatpush2.xpose.msra.mxu0 0.0
    %1303 = vmatprep.subr.mxu0 0.0
    %1304 = vmatpush2.xpose.msra.mxu0 0.0
    %1305 = vmatprep.subr.mxu0 0.0
    %1306 = vmatpush2.xpose.msra.mxu0 0.0
    %1307 = vmatprep.subr.mxu0 0.0
    %1308 = vmatpush2.xpose.msra.mxu0 0.0
    %1309 = vmatprep.subr.mxu0 0.0
    %1310 = vmatpush2.xpose.msra.mxu0 0.0
    %1311 = vmatprep.subr.mxu0 0.0
    %1312 = vmatpush2.xpose.msra.mxu0 0.0
    %1313 = vmatprep.subr.mxu0 0.0
    %1314 = vmatpush2.xpose.msra.mxu0 0.0
    %1315 = vmatprep.mubr.f32.mxu0 0.0
    %v1316 = vand.u32 %v1240, 4294901760
    %v1317 = vsub.f32 %v1240, %v1316
    %v1318 = vand.u32 %v1317, 4294901760
    %v1319 = vsub.f32 %v1317, %v1318
    %v1320 = vand.u32 %v1319, 4294901760
    %1321 = vmatmul.mubr.f32.gmra.mxu0 %v1320
    %v1322 = vpop.f32.mrf.mxu0
    %v1323 = vadd.f32 %v1230, %v1322
    %v1324 = vpop.f32.mrf.mxu0
    %1325 = vmatprep.mubr.f32.mxu0 0.0
    %v1326 = vand.u32 %v1243, 4294901760
    %v1327 = vsub.f32 %v1243, %v1326
    %v1328 = vand.u32 %v1327, 4294901760
    %v1329 = vsub.f32 %v1327, %v1328
    %v1330 = vand.u32 %v1329, 4294901760
    %1331 = vmatmul.mubr.f32.gmra.mxu0 %v1330
    %v1332 = vpop.f32.mrf.mxu0
    %v1333 = vadd.f32 %v1231, %v1332
    %v1334 = vpop.f32.mrf.mxu0
    %1335 = vdwg.mxu0
    %1336 = vmatprep.subr.mxu0 0.0
    %1337 = vmatpush1.xpose.msra.mxu0 0.0
    %1338 = vmatprep.subr.mxu0 0.0
    %1339 = vmatpush1.xpose.msra.mxu0 0.0
    %1340 = vmatprep.subr.mxu0 0.0
    %1341 = vmatpush1.xpose.msra.mxu0 0.0
    %1342 = vmatprep.subr.mxu0 0.0
    %1343 = vmatpush1.xpose.msra.mxu0 0.0
    %1344 = vmatprep.subr.mxu0 0.0
    %1345 = vmatpush1.xpose.msra.mxu0 0.0
    %1346 = vmatprep.subr.mxu0 0.0
    %1347 = vmatpush1.xpose.msra.mxu0 0.0
    %1348 = vmatprep.subr.mxu0 0.0
    %1349 = vmatpush1.xpose.msra.mxu0 0.0
    %1350 = vmatprep.subr.mxu0 0.0
    %1351 = vmatpush1.xpose.msra.mxu0 0.0
    %1352 = vmatprep.subr.mxu0 0.0
    %1353 = vmatpush1.xpose.msra.mxu0 0.0
    %1354 = vmatprep.subr.mxu0 0.0
    %1355 = vmatpush1.xpose.msra.mxu0 0.0
    %1356 = vmatprep.subr.mxu0 0.0
    %1357 = vmatpush1.xpose.msra.mxu0 0.0
    %1358 = vmatprep.subr.mxu0 0.0
    %1359 = vmatpush1.xpose.msra.mxu0 0.0
    %1360 = vmatprep.subr.mxu0 0.0
    %1361 = vmatpush1.xpose.msra.mxu0 0.0
    %1362 = vmatprep.subr.mxu0 0.0
    %1363 = vmatpush1.xpose.msra.mxu0 0.0
    %1364 = vmatprep.subr.mxu0 0.0
    %v1365 = vand.u32 %v1247, 4294901760
    %v1366 = vsub.f32 %v1247, %v1365
    %v1367 = vand.u32 %v1366, 4294901760
    %v1368 = vsub.f32 %v1366, %v1367
    %v1369 = vand.u32 %v1368, 4294901760
    %1370 = vmatpush1.xpose.msra.mxu0 %v1369
    %1371 = vmatprep.subr.mxu0 0.0
    %v1372 = vand.u32 %v1245, 4294901760
    %v1373 = vsub.f32 %v1245, %v1372
    %v1374 = vand.u32 %v1373, 4294901760
    %v1375 = vsub.f32 %v1373, %v1374
    %v1376 = vand.u32 %v1375, 4294901760
    %1377 = vmatpush1.xpose.msra.mxu0 %v1376
    %1378 = vmatprep.subr.mxu0 0.0
    %1379 = vmatpush2.xpose.msra.mxu0 0.0
    %1380 = vmatprep.subr.mxu0 0.0
    %1381 = vmatpush2.xpose.msra.mxu0 0.0
    %1382 = vmatprep.subr.mxu0 0.0
    %1383 = vmatpush2.xpose.msra.mxu0 0.0
    %1384 = vmatprep.subr.mxu0 0.0
    %1385 = vmatpush2.xpose.msra.mxu0 0.0
    %1386 = vmatprep.subr.mxu0 0.0
    %1387 = vmatpush2.xpose.msra.mxu0 0.0
    %1388 = vmatprep.subr.mxu0 0.0
    %1389 = vmatpush2.xpose.msra.mxu0 0.0
    %1390 = vmatprep.subr.mxu0 0.0
    %1391 = vmatpush2.xpose.msra.mxu0 0.0
    %1392 = vmatprep.subr.mxu0 0.0
    %1393 = vmatpush2.xpose.msra.mxu0 0.0
    %1394 = vmatprep.subr.mxu0 0.0
    %1395 = vmatpush2.xpose.msra.mxu0 0.0
    %1396 = vmatprep.subr.mxu0 0.0
    %1397 = vmatpush2.xpose.msra.mxu0 0.0
    %1398 = vmatprep.subr.mxu0 0.0
    %1399 = vmatpush2.xpose.msra.mxu0 0.0
    %1400 = vmatprep.subr.mxu0 0.0
    %1401 = vmatpush2.xpose.msra.mxu0 0.0
    %1402 = vmatprep.subr.mxu0 0.0
    %1403 = vmatpush2.xpose.msra.mxu0 0.0
    %1404 = vmatprep.subr.mxu0 0.0
    %1405 = vmatpush2.xpose.msra.mxu0 0.0
    %1406 = vmatprep.subr.mxu0 0.0
    %1407 = vmatpush2.xpose.msra.mxu0 0.0
    %1408 = vmatprep.subr.mxu0 0.0
    %1409 = vmatpush2.xpose.msra.mxu0 0.0
    %1410 = vmatprep.mubr.f32.mxu0 0.0
    %v1411 = vand.u32 %v1240, 4294901760
    %1412 = vmatmul.mubr.f32.gmra.mxu0 %v1411
    %v1413 = vpop.f32.mrf.mxu0
    %v1414 = vadd.f32 %v1323, %v1413
    %v1415 = vpop.f32.mrf.mxu0
    %1416 = vmatprep.mubr.f32.mxu0 0.0
    %v1417 = vand.u32 %v1243, 4294901760
    %1418 = vmatmul.mubr.f32.gmra.mxu0 %v1417
    %v1419 = vpop.f32.mrf.mxu0
    %v1420 = vadd.f32 %v1333, %v1419
    %v1421 = vpop.f32.mrf.mxu0
    %1422 = vdwg.mxu0
    %1423 = vmatprep.subr.mxu0 0.0
    %1424 = vmatpush1.xpose.msra.mxu0 0.0
    %1425 = vmatprep.subr.mxu0 0.0
    %1426 = vmatpush1.xpose.msra.mxu0 0.0
    %1427 = vmatprep.subr.mxu0 0.0
    %1428 = vmatpush1.xpose.msra.mxu0 0.0
    %1429 = vmatprep.subr.mxu0 0.0
    %1430 = vmatpush1.xpose.msra.mxu0 0.0
    %1431 = vmatprep.subr.mxu0 0.0
    %1432 = vmatpush1.xpose.msra.mxu0 0.0
    %1433 = vmatprep.subr.mxu0 0.0
    %1434 = vmatpush1.xpose.msra.mxu0 0.0
    %1435 = vmatprep.subr.mxu0 0.0
    %1436 = vmatpush1.xpose.msra.mxu0 0.0
    %1437 = vmatprep.subr.mxu0 0.0
    %1438 = vmatpush1.xpose.msra.mxu0 0.0
    %1439 = vmatprep.subr.mxu0 0.0
    %1440 = vmatpush1.xpose.msra.mxu0 0.0
    %1441 = vmatprep.subr.mxu0 0.0
    %1442 = vmatpush1.xpose.msra.mxu0 0.0
    %1443 = vmatprep.subr.mxu0 0.0
    %1444 = vmatpush1.xpose.msra.mxu0 0.0
    %1445 = vmatprep.subr.mxu0 0.0
    %1446 = vmatpush1.xpose.msra.mxu0 0.0
    %1447 = vmatprep.subr.mxu0 0.0
    %1448 = vmatpush1.xpose.msra.mxu0 0.0
    %1449 = vmatprep.subr.mxu0 0.0
    %1450 = vmatpush1.xpose.msra.mxu0 0.0
    %1451 = vmatprep.subr.mxu0 0.0
    %v1452 = vand.u32 %v1247, 4294901760
    %v1453 = vsub.f32 %v1247, %v1452
    %1454 = vmatpush1.xpose.msra.mxu0 %v1453
    %1455 = vmatprep.subr.mxu0 0.0
    %v1456 = vand.u32 %v1245, 4294901760
    %v1457 = vsub.f32 %v1245, %v1456
    %1458 = vmatpush1.xpose.msra.mxu0 %v1457
    %1459 = vmatprep.subr.mxu0 0.0
    %1460 = vmatpush2.xpose.msra.mxu0 0.0
    %1461 = vmatprep.subr.mxu0 0.0
    %1462 = vmatpush2.xpose.msra.mxu0 0.0
    %1463 = vmatprep.subr.mxu0 0.0
    %1464 = vmatpush2.xpose.msra.mxu0 0.0
    %1465 = vmatprep.subr.mxu0 0.0
    %1466 = vmatpush2.xpose.msra.mxu0 0.0
    %1467 = vmatprep.subr.mxu0 0.0
    %1468 = vmatpush2.xpose.msra.mxu0 0.0
    %1469 = vmatprep.subr.mxu0 0.0
    %1470 = vmatpush2.xpose.msra.mxu0 0.0
    %1471 = vmatprep.subr.mxu0 0.0
    %1472 = vmatpush2.xpose.msra.mxu0 0.0
    %1473 = vmatprep.subr.mxu0 0.0
    %1474 = vmatpush2.xpose.msra.mxu0 0.0
    %1475 = vmatprep.subr.mxu0 0.0
    %1476 = vmatpush2.xpose.msra.mxu0 0.0
    %1477 = vmatprep.subr.mxu0 0.0
    %1478 = vmatpush2.xpose.msra.mxu0 0.0
    %1479 = vmatprep.subr.mxu0 0.0
    %1480 = vmatpush2.xpose.msra.mxu0 0.0
    %1481 = vmatprep.subr.mxu0 0.0
    %1482 = vmatpush2.xpose.msra.mxu0 0.0
    %1483 = vmatprep.subr.mxu0 0.0
    %1484 = vmatpush2.xpose.msra.mxu0 0.0
    %1485 = vmatprep.subr.mxu0 0.0
    %1486 = vmatpush2.xpose.msra.mxu0 0.0
    %1487 = vmatprep.subr.mxu0 0.0
    %1488 = vmatpush2.xpose.msra.mxu0 0.0
    %1489 = vmatprep.subr.mxu0 0.0
    %1490 = vmatpush2.xpose.msra.mxu0 0.0
    %1491 = vmatprep.mubr.f32.mxu0 0.0
    %v1492 = vand.u32 %v1240, 4294901760
    %v1493 = vsub.f32 %v1240, %v1492
    %1494 = vmatmul.mubr.f32.gmra.mxu0 %v1493
    %v1495 = vpop.f32.mrf.mxu0
    %v1496 = vadd.f32 %v1414, %v1495
    %v1497 = vpop.f32.mrf.mxu0
    %1498 = vmatprep.mubr.f32.mxu0 0.0
    %v1499 = vand.u32 %v1243, 4294901760
    %v1500 = vsub.f32 %v1243, %v1499
    %1501 = vmatmul.mubr.f32.gmra.mxu0 %v1500
    %v1502 = vpop.f32.mrf.mxu0
    %v1503 = vadd.f32 %v1420, %v1502
    %v1504 = vpop.f32.mrf.mxu0
    %1505 = vdwg.mxu0
    %1506 = vmatprep.subr.mxu0 0.0
    %1507 = vmatpush1.xpose.msra.mxu0 0.0
    %1508 = vmatprep.subr.mxu0 0.0
    %1509 = vmatpush1.xpose.msra.mxu0 0.0
    %1510 = vmatprep.subr.mxu0 0.0
    %1511 = vmatpush1.xpose.msra.mxu0 0.0
    %1512 = vmatprep.subr.mxu0 0.0
    %1513 = vmatpush1.xpose.msra.mxu0 0.0
    %1514 = vmatprep.subr.mxu0 0.0
    %1515 = vmatpush1.xpose.msra.mxu0 0.0
    %1516 = vmatprep.subr.mxu0 0.0
    %1517 = vmatpush1.xpose.msra.mxu0 0.0
    %1518 = vmatprep.subr.mxu0 0.0
    %1519 = vmatpush1.xpose.msra.mxu0 0.0
    %1520 = vmatprep.subr.mxu0 0.0
    %1521 = vmatpush1.xpose.msra.mxu0 0.0
    %1522 = vmatprep.subr.mxu0 0.0
    %1523 = vmatpush1.xpose.msra.mxu0 0.0
    %1524 = vmatprep.subr.mxu0 0.0
    %1525 = vmatpush1.xpose.msra.mxu0 0.0
    %1526 = vmatprep.subr.mxu0 0.0
    %1527 = vmatpush1.xpose.msra.mxu0 0.0
    %1528 = vmatprep.subr.mxu0 0.0
    %1529 = vmatpush1.xpose.msra.mxu0 0.0
    %1530 = vmatprep.subr.mxu0 0.0
    %1531 = vmatpush1.xpose.msra.mxu0 0.0
    %1532 = vmatprep.subr.mxu0 0.0
    %1533 = vmatpush1.xpose.msra.mxu0 0.0
    %1534 = vmatprep.subr.mxu0 0.0
    %v1535 = vand.u32 %v1247, 4294901760
    %1536 = vmatpush1.xpose.msra.mxu0 %v1535
    %1537 = vmatprep.subr.mxu0 0.0
    %v1538 = vand.u32 %v1245, 4294901760
    %1539 = vmatpush1.xpose.msra.mxu0 %v1538
    %1540 = vmatprep.subr.mxu0 0.0
    %1541 = vmatpush2.xpose.msra.mxu0 0.0
    %1542 = vmatprep.subr.mxu0 0.0
    %1543 = vmatpush2.xpose.msra.mxu0 0.0
    %1544 = vmatprep.subr.mxu0 0.0
    %1545 = vmatpush2.xpose.msra.mxu0 0.0
    %1546 = vmatprep.subr.mxu0 0.0
    %1547 = vmatpush2.xpose.msra.mxu0 0.0
    %1548 = vmatprep.subr.mxu0 0.0
    %1549 = vmatpush2.xpose.msra.mxu0 0.0
    %1550 = vmatprep.subr.mxu0 0.0
    %1551 = vmatpush2.xpose.msra.mxu0 0.0
    %1552 = vmatprep.subr.mxu0 0.0
    %1553 = vmatpush2.xpose.msra.mxu0 0.0
    %1554 = vmatprep.subr.mxu0 0.0
    %1555 = vmatpush2.xpose.msra.mxu0 0.0
    %1556 = vmatprep.subr.mxu0 0.0
    %1557 = vmatpush2.xpose.msra.mxu0 0.0
    %1558 = vmatprep.subr.mxu0 0.0
    %1559 = vmatpush2.xpose.msra.mxu0 0.0
    %1560 = vmatprep.subr.mxu0 0.0
    %1561 = vmatpush2.xpose.msra.mxu0 0.0
    %1562 = vmatprep.subr.mxu0 0.0
    %1563 = vmatpush2.xpose.msra.mxu0 0.0
    %1564 = vmatprep.subr.mxu0 0.0
    %1565 = vmatpush2.xpose.msra.mxu0 0.0
    %1566 = vmatprep.subr.mxu0 0.0
    %1567 = vmatpush2.xpose.msra.mxu0 0.0
    %1568 = vmatprep.subr.mxu0 0.0
    %1569 = vmatpush2.xpose.msra.mxu0 0.0
    %1570 = vmatprep.subr.mxu0 0.0
    %1571 = vmatpush2.xpose.msra.mxu0 0.0
    %1572 = vmatprep.mubr.f32.mxu0 0.0
    %v1573 = vand.u32 %v1240, 4294901760
    %v1574 = vsub.f32 %v1240, %v1573
    %v1575 = vand.u32 %v1574, 4294901760
    %1576 = vmatmul.mubr.f32.gmra.mxu0 %v1575
    %v1577 = vpop.f32.mrf.mxu0
    %v1578 = vadd.f32 %v1496, %v1577
    %v1579 = vpop.f32.mrf.mxu0
    %1580 = vmatprep.mubr.f32.mxu0 0.0
    %v1581 = vand.u32 %v1243, 4294901760
    %v1582 = vsub.f32 %v1243, %v1581
    %v1583 = vand.u32 %v1582, 4294901760
    %1584 = vmatmul.mubr.f32.gmra.mxu0 %v1583
    %v1585 = vpop.f32.mrf.mxu0
    %v1586 = vadd.f32 %v1503, %v1585
    %v1587 = vpop.f32.mrf.mxu0
    %1588 = vdwg.mxu0
    %1589 = vmatprep.subr.mxu0 0.0
    %1590 = vmatpush1.xpose.msra.mxu0 0.0
    %1591 = vmatprep.subr.mxu0 0.0
    %1592 = vmatpush1.xpose.msra.mxu0 0.0
    %1593 = vmatprep.subr.mxu0 0.0
    %1594 = vmatpush1.xpose.msra.mxu0 0.0
    %1595 = vmatprep.subr.mxu0 0.0
    %1596 = vmatpush1.xpose.msra.mxu0 0.0
    %1597 = vmatprep.subr.mxu0 0.0
    %1598 = vmatpush1.xpose.msra.mxu0 0.0
    %1599 = vmatprep.subr.mxu0 0.0
    %1600 = vmatpush1.xpose.msra.mxu0 0.0
    %1601 = vmatprep.subr.mxu0 0.0
    %1602 = vmatpush1.xpose.msra.mxu0 0.0
    %1603 = vmatprep.subr.mxu0 0.0
    %1604 = vmatpush1.xpose.msra.mxu0 0.0
    %1605 = vmatprep.subr.mxu0 0.0
    %1606 = vmatpush1.xpose.msra.mxu0 0.0
    %1607 = vmatprep.subr.mxu0 0.0
    %1608 = vmatpush1.xpose.msra.mxu0 0.0
    %1609 = vmatprep.subr.mxu0 0.0
    %1610 = vmatpush1.xpose.msra.mxu0 0.0
    %1611 = vmatprep.subr.mxu0 0.0
    %1612 = vmatpush1.xpose.msra.mxu0 0.0
    %1613 = vmatprep.subr.mxu0 0.0
    %1614 = vmatpush1.xpose.msra.mxu0 0.0
    %1615 = vmatprep.subr.mxu0 0.0
    %1616 = vmatpush1.xpose.msra.mxu0 0.0
    %1617 = vmatprep.subr.mxu0 0.0
    %v1618 = vand.u32 %v1247, 4294901760
    %v1619 = vsub.f32 %v1247, %v1618
    %v1620 = vand.u32 %v1619, 4294901760
    %1621 = vmatpush1.xpose.msra.mxu0 %v1620
    %1622 = vmatprep.subr.mxu0 0.0
    %v1623 = vand.u32 %v1245, 4294901760
    %v1624 = vsub.f32 %v1245, %v1623
    %v1625 = vand.u32 %v1624, 4294901760
    %1626 = vmatpush1.xpose.msra.mxu0 %v1625
    %1627 = vmatprep.subr.mxu0 0.0
    %1628 = vmatpush2.xpose.msra.mxu0 0.0
    %1629 = vmatprep.subr.mxu0 0.0
    %1630 = vmatpush2.xpose.msra.mxu0 0.0
    %1631 = vmatprep.subr.mxu0 0.0
    %1632 = vmatpush2.xpose.msra.mxu0 0.0
    %1633 = vmatprep.subr.mxu0 0.0
    %1634 = vmatpush2.xpose.msra.mxu0 0.0
    %1635 = vmatprep.subr.mxu0 0.0
    %1636 = vmatpush2.xpose.msra.mxu0 0.0
    %1637 = vmatprep.subr.mxu0 0.0
    %1638 = vmatpush2.xpose.msra.mxu0 0.0
    %1639 = vmatprep.subr.mxu0 0.0
    %1640 = vmatpush2.xpose.msra.mxu0 0.0
    %1641 = vmatprep.subr.mxu0 0.0
    %1642 = vmatpush2.xpose.msra.mxu0 0.0
    %1643 = vmatprep.subr.mxu0 0.0
    %1644 = vmatpush2.xpose.msra.mxu0 0.0
    %1645 = vmatprep.subr.mxu0 0.0
    %1646 = vmatpush2.xpose.msra.mxu0 0.0
    %1647 = vmatprep.subr.mxu0 0.0
    %1648 = vmatpush2.xpose.msra.mxu0 0.0
    %1649 = vmatprep.subr.mxu0 0.0
    %1650 = vmatpush2.xpose.msra.mxu0 0.0
    %1651 = vmatprep.subr.mxu0 0.0
    %1652 = vmatpush2.xpose.msra.mxu0 0.0
    %1653 = vmatprep.subr.mxu0 0.0
    %1654 = vmatpush2.xpose.msra.mxu0 0.0
    %1655 = vmatprep.subr.mxu0 0.0
    %1656 = vmatpush2.xpose.msra.mxu0 0.0
    %1657 = vmatprep.subr.mxu0 0.0
    %1658 = vmatpush2.xpose.msra.mxu0 0.0
    %1659 = vmatprep.mubr.f32.mxu0 0.0
    %v1660 = vand.u32 %v1240, 4294901760
    %1661 = vmatmul.mubr.f32.gmra.mxu0 %v1660
    %v1662 = vpop.f32.mrf.mxu0
    %v1663 = vadd.f32 %v1578, %v1662
    %v1664 = vpop.f32.mrf.mxu0
    %1665 = vmatprep.mubr.f32.mxu0 0.0
    %v1666 = vand.u32 %v1243, 4294901760
    %1667 = vmatmul.mubr.f32.gmra.mxu0 %v1666
    %v1668 = vpop.f32.mrf.mxu0
    %v1669 = vadd.f32 %v1586, %v1668
    %v1670 = vpop.f32.mrf.mxu0
    %1671 = vdwg.mxu0
    %1672 = vmatprep.subr.mxu0 0.0
    %1673 = vmatpush1.xpose.msra.mxu0 0.0
    %1674 = vmatprep.subr.mxu0 0.0
    %1675 = vmatpush1.xpose.msra.mxu0 0.0
    %1676 = vmatprep.subr.mxu0 0.0
    %1677 = vmatpush1.xpose.msra.mxu0 0.0
    %1678 = vmatprep.subr.mxu0 0.0
    %1679 = vmatpush1.xpose.msra.mxu0 0.0
    %1680 = vmatprep.subr.mxu0 0.0
    %1681 = vmatpush1.xpose.msra.mxu0 0.0
    %1682 = vmatprep.subr.mxu0 0.0
    %1683 = vmatpush1.xpose.msra.mxu0 0.0
    %1684 = vmatprep.subr.mxu0 0.0
    %1685 = vmatpush1.xpose.msra.mxu0 0.0
    %1686 = vmatprep.subr.mxu0 0.0
    %1687 = vmatpush1.xpose.msra.mxu0 0.0
    %1688 = vmatprep.subr.mxu0 0.0
    %1689 = vmatpush1.xpose.msra.mxu0 0.0
    %1690 = vmatprep.subr.mxu0 0.0
    %1691 = vmatpush1.xpose.msra.mxu0 0.0
    %1692 = vmatprep.subr.mxu0 0.0
    %1693 = vmatpush1.xpose.msra.mxu0 0.0
    %1694 = vmatprep.subr.mxu0 0.0
    %1695 = vmatpush1.xpose.msra.mxu0 0.0
    %1696 = vmatprep.subr.mxu0 0.0
    %1697 = vmatpush1.xpose.msra.mxu0 0.0
    %1698 = vmatprep.subr.mxu0 0.0
    %1699 = vmatpush1.xpose.msra.mxu0 0.0
    %1700 = vmatprep.subr.mxu0 0.0
    %v1701 = vand.u32 %v1247, 4294901760
    %1702 = vmatpush1.xpose.msra.mxu0 %v1701
    %1703 = vmatprep.subr.mxu0 0.0
    %v1704 = vand.u32 %v1245, 4294901760
    %1705 = vmatpush1.xpose.msra.mxu0 %v1704
    %1706 = vmatprep.subr.mxu0 0.0
    %1707 = vmatpush2.xpose.msra.mxu0 0.0
    %1708 = vmatprep.subr.mxu0 0.0
    %1709 = vmatpush2.xpose.msra.mxu0 0.0
    %1710 = vmatprep.subr.mxu0 0.0
    %1711 = vmatpush2.xpose.msra.mxu0 0.0
    %1712 = vmatprep.subr.mxu0 0.0
    %1713 = vmatpush2.xpose.msra.mxu0 0.0
    %1714 = vmatprep.subr.mxu0 0.0
    %1715 = vmatpush2.xpose.msra.mxu0 0.0
    %1716 = vmatprep.subr.mxu0 0.0
    %1717 = vmatpush2.xpose.msra.mxu0 0.0
    %1718 = vmatprep.subr.mxu0 0.0
    %1719 = vmatpush2.xpose.msra.mxu0 0.0
    %1720 = vmatprep.subr.mxu0 0.0
    %1721 = vmatpush2.xpose.msra.mxu0 0.0
    %1722 = vmatprep.subr.mxu0 0.0
    %1723 = vmatpush2.xpose.msra.mxu0 0.0
    %1724 = vmatprep.subr.mxu0 0.0
    %1725 = vmatpush2.xpose.msra.mxu0 0.0
    %1726 = vmatprep.subr.mxu0 0.0
    %1727 = vmatpush2.xpose.msra.mxu0 0.0
    %1728 = vmatprep.subr.mxu0 0.0
    %1729 = vmatpush2.xpose.msra.mxu0 0.0
    %1730 = vmatprep.subr.mxu0 0.0
    %1731 = vmatpush2.xpose.msra.mxu0 0.0
    %1732 = vmatprep.subr.mxu0 0.0
    %1733 = vmatpush2.xpose.msra.mxu0 0.0
    %1734 = vmatprep.subr.mxu0 0.0
    %1735 = vmatpush2.xpose.msra.mxu0 0.0
    %1736 = vmatprep.subr.mxu0 0.0
    %1737 = vmatpush2.xpose.msra.mxu0 0.0
    %1738 = vmatprep.mubr.f32.mxu0 0.0
    %v1739 = vand.u32 %v1240, 4294901760
    %1740 = vmatmul.mubr.f32.gmra.mxu0 %v1739
    %v1741 = vpop.f32.mrf.mxu0
    %v1742 = vadd.f32 %v1663, %v1741
    %v1743 = vpop.f32.mrf.mxu0
    %1744 = vmatprep.mubr.f32.mxu0 0.0
    %v1745 = vand.u32 %v1243, 4294901760
    %1746 = vmatmul.mubr.f32.gmra.mxu0 %v1745
    %v1747 = vpop.f32.mrf.mxu0
    %v1748 = vadd.f32 %v1669, %v1747
    %v1749 = vpop.f32.mrf.mxu0
    %1750 = vdwg.mxu0
    %vm1751 = vcmask 130048
    %v1752 = vsel %vm1751, %v1742, -inf
    %1753 = vmax.xlane.f32.xlu0 %v1752
    %v1754 = vpop.xlane.xlu0 %1753
    %v1755 = vsel %vm1751, %v1748, -inf
    %1756 = vmax.xlane.f32.xlu0 %v1755
    %v1757 = vpop.xlane.xlu0 %1756
    %v1758 = vsub.f32 %v1742, %v1754
    %v1759 = vsub.f32 %v1748, %v1757
    %v1760 = vmul.f32 %v1758, 1.442695
    %v1761 = vpow.pop %v1760
    %v1762 = vmul.f32 %v1759, 1.442695
    %v1763 = vpow.pop %v1762
    %v1764 = vsel %vm1751, %v1761, 0.0
    %1765 = vadd.xlane.f32.xlu0 %v1764
    %v1766 = vpop.xlane.xlu0 %1765
    %v1767 = vsel %vm1751, %v1763, 0.0
    %1768 = vadd.xlane.f32.xlu0 %v1767
    %v1769 = vpop.xlane.xlu0 %1768
    %v1770 = vrcp.pop %v1766
    %v1771 = vrcp.pop %v1769
    %v1772 = vmul.f32 %v1761, %v1770
    %v1773 = vmul.f32 %v1763, %v1771
    %v1775 = vsel %vm1751, %v1772, 0
    %v1778 = vsel %vm1751, %v1773, 0
    %1780 = vmatprep.subr.mxu0 0.0
    %1781 = vmatpush1.msra.mxu0 0.0
    %1782 = vmatprep.subr.mxu0 0.0
    %1783 = vmatpush1.msra.mxu0 0.0
    %1784 = vmatprep.subr.mxu0 0.0
    %1785 = vmatpush1.msra.mxu0 0.0
    %1786 = vmatprep.subr.mxu0 0.0
    %1787 = vmatpush1.msra.mxu0 0.0
    %1788 = vmatprep.subr.mxu0 0.0
    %1789 = vmatpush1.msra.mxu0 0.0
    %1790 = vmatprep.subr.mxu0 0.0
    %1791 = vmatpush1.msra.mxu0 0.0
    %1792 = vmatprep.subr.mxu0 0.0
    %1793 = vmatpush1.msra.mxu0 0.0
    %1794 = vmatprep.subr.mxu0 0.0
    %1795 = vmatpush1.msra.mxu0 0.0
    %1796 = vmatprep.subr.mxu0 0.0
    %1797 = vmatpush1.msra.mxu0 0.0
    %1798 = vmatprep.subr.mxu0 0.0
    %1799 = vmatpush1.msra.mxu0 0.0
    %1800 = vmatprep.subr.mxu0 0.0
    %1801 = vmatpush1.msra.mxu0 0.0
    %1802 = vmatprep.subr.mxu0 0.0
    %1803 = vmatpush1.msra.mxu0 0.0
    %1804 = vmatprep.subr.mxu0 0.0
    %1805 = vmatpush1.msra.mxu0 0.0
    %1806 = vmatprep.subr.mxu0 0.0
    %1807 = vmatpush1.msra.mxu0 0.0
    %1808 = vmatprep.subr.mxu0 0.0
    %v1809 = vand.u32 %v1184, 4294901760
    %1810 = vmatpush1.msra.mxu0 %v1809
    %1811 = vmatprep.subr.mxu0 0.0
    %v1812 = vand.u32 %v1178, 4294901760
    %1813 = vmatpush1.msra.mxu0 %v1812
    %1814 = vmatprep.subr.mxu0 0.0
    %1815 = vmatpush2.msra.mxu0 0.0
    %1816 = vmatprep.subr.mxu0 0.0
    %1817 = vmatpush2.msra.mxu0 0.0
    %1818 = vmatprep.subr.mxu0 0.0
    %1819 = vmatpush2.msra.mxu0 0.0
    %1820 = vmatprep.subr.mxu0 0.0
    %1821 = vmatpush2.msra.mxu0 0.0
    %1822 = vmatprep.subr.mxu0 0.0
    %1823 = vmatpush2.msra.mxu0 0.0
    %1824 = vmatprep.subr.mxu0 0.0
    %1825 = vmatpush2.msra.mxu0 0.0
    %1826 = vmatprep.subr.mxu0 0.0
    %1827 = vmatpush2.msra.mxu0 0.0
    %1828 = vmatprep.subr.mxu0 0.0
    %1829 = vmatpush2.msra.mxu0 0.0
    %1830 = vmatprep.subr.mxu0 0.0
    %1831 = vmatpush2.msra.mxu0 0.0
    %1832 = vmatprep.subr.mxu0 0.0
    %1833 = vmatpush2.msra.mxu0 0.0
    %1834 = vmatprep.subr.mxu0 0.0
    %1835 = vmatpush2.msra.mxu0 0.0
    %1836 = vmatprep.subr.mxu0 0.0
    %1837 = vmatpush2.msra.mxu0 0.0
    %1838 = vmatprep.subr.mxu0 0.0
    %1839 = vmatpush2.msra.mxu0 0.0
    %1840 = vmatprep.subr.mxu0 0.0
    %1841 = vmatpush2.msra.mxu0 0.0
    %1842 = vmatprep.subr.mxu0 0.0
    %1843 = vmatpush2.msra.mxu0 0.0
    %1844 = vmatprep.subr.mxu0 0.0
    %1845 = vmatpush2.msra.mxu0 0.0
    %1846 = vmatprep.mubr.f32.mxu0 0.0
    %v1847 = vand.u32 %v1775, 4294901760
    %v1848 = vsub.f32 %v1775, %v1847
    %v1849 = vand.u32 %v1848, 4294901760
    %v1850 = vsub.f32 %v1848, %v1849
    %v1851 = vand.u32 %v1850, 4294901760
    %1852 = vmatmul.mubr.f32.gmra.mxu0 %v1851
    %v1853 = vpop.f32.mrf.mxu0
    %v1854 = vadd.f32 0.0, %v1853
    %v1855 = vpop.f32.mrf.mxu0
    %1856 = vmatprep.mubr.f32.mxu0 0.0
    %v1857 = vand.u32 %v1778, 4294901760
    %v1858 = vsub.f32 %v1778, %v1857
    %v1859 = vand.u32 %v1858, 4294901760
    %v1860 = vsub.f32 %v1858, %v1859
    %v1861 = vand.u32 %v1860, 4294901760
    %1862 = vmatmul.mubr.f32.gmra.mxu0 %v1861
    %v1863 = vpop.f32.mrf.mxu0
    %v1864 = vadd.f32 0.0, %v1863
    %v1865 = vpop.f32.mrf.mxu0
    %1866 = vdwg.mxu0
    %1867 = vmatprep.subr.mxu0 0.0
    %1868 = vmatpush1.msra.mxu0 0.0
    %1869 = vmatprep.subr.mxu0 0.0
    %1870 = vmatpush1.msra.mxu0 0.0
    %1871 = vmatprep.subr.mxu0 0.0
    %1872 = vmatpush1.msra.mxu0 0.0
    %1873 = vmatprep.subr.mxu0 0.0
    %1874 = vmatpush1.msra.mxu0 0.0
    %1875 = vmatprep.subr.mxu0 0.0
    %1876 = vmatpush1.msra.mxu0 0.0
    %1877 = vmatprep.subr.mxu0 0.0
    %1878 = vmatpush1.msra.mxu0 0.0
    %1879 = vmatprep.subr.mxu0 0.0
    %1880 = vmatpush1.msra.mxu0 0.0
    %1881 = vmatprep.subr.mxu0 0.0
    %1882 = vmatpush1.msra.mxu0 0.0
    %1883 = vmatprep.subr.mxu0 0.0
    %1884 = vmatpush1.msra.mxu0 0.0
    %1885 = vmatprep.subr.mxu0 0.0
    %1886 = vmatpush1.msra.mxu0 0.0
    %1887 = vmatprep.subr.mxu0 0.0
    %1888 = vmatpush1.msra.mxu0 0.0
    %1889 = vmatprep.subr.mxu0 0.0
    %1890 = vmatpush1.msra.mxu0 0.0
    %1891 = vmatprep.subr.mxu0 0.0
    %1892 = vmatpush1.msra.mxu0 0.0
    %1893 = vmatprep.subr.mxu0 0.0
    %1894 = vmatpush1.msra.mxu0 0.0
    %1895 = vmatprep.subr.mxu0 0.0
    %v1896 = vand.u32 %v1184, 4294901760
    %v1897 = vsub.f32 %v1184, %v1896
    %v1898 = vand.u32 %v1897, 4294901760
    %v1899 = vsub.f32 %v1897, %v1898
    %v1900 = vand.u32 %v1899, 4294901760
    %1901 = vmatpush1.msra.mxu0 %v1900
    %1902 = vmatprep.subr.mxu0 0.0
    %v1903 = vand.u32 %v1178, 4294901760
    %v1904 = vsub.f32 %v1178, %v1903
    %v1905 = vand.u32 %v1904, 4294901760
    %v1906 = vsub.f32 %v1904, %v1905
    %v1907 = vand.u32 %v1906, 4294901760
    %1908 = vmatpush1.msra.mxu0 %v1907
    %1909 = vmatprep.subr.mxu0 0.0
    %1910 = vmatpush2.msra.mxu0 0.0
    %1911 = vmatprep.subr.mxu0 0.0
    %1912 = vmatpush2.msra.mxu0 0.0
    %1913 = vmatprep.subr.mxu0 0.0
    %1914 = vmatpush2.msra.mxu0 0.0
    %1915 = vmatprep.subr.mxu0 0.0
    %1916 = vmatpush2.msra.mxu0 0.0
    %1917 = vmatprep.subr.mxu0 0.0
    %1918 = vmatpush2.msra.mxu0 0.0
    %1919 = vmatprep.subr.mxu0 0.0
    %1920 = vmatpush2.msra.mxu0 0.0
    %1921 = vmatprep.subr.mxu0 0.0
    %1922 = vmatpush2.msra.mxu0 0.0
    %1923 = vmatprep.subr.mxu0 0.0
    %1924 = vmatpush2.msra.mxu0 0.0
    %1925 = vmatprep.subr.mxu0 0.0
    %1926 = vmatpush2.msra.mxu0 0.0
    %1927 = vmatprep.subr.mxu0 0.0
    %1928 = vmatpush2.msra.mxu0 0.0
    %1929 = vmatprep.subr.mxu0 0.0
    %1930 = vmatpush2.msra.mxu0 0.0
    %1931 = vmatprep.subr.mxu0 0.0
    %1932 = vmatpush2.msra.mxu0 0.0
    %1933 = vmatprep.subr.mxu0 0.0
    %1934 = vmatpush2.msra.mxu0 0.0
    %1935 = vmatprep.subr.mxu0 0.0
    %1936 = vmatpush2.msra.mxu0 0.0
    %1937 = vmatprep.subr.mxu0 0.0
    %1938 = vmatpush2.msra.mxu0 0.0
    %1939 = vmatprep.subr.mxu0 0.0
    %1940 = vmatpush2.msra.mxu0 0.0
    %1941 = vmatprep.mubr.f32.mxu0 0.0
    %v1942 = vand.u32 %v1775, 4294901760
    %1943 = vmatmul.mubr.f32.gmra.mxu0 %v1942
    %v1944 = vpop.f32.mrf.mxu0
    %v1945 = vadd.f32 %v1854, %v1944
    %v1946 = vpop.f32.mrf.mxu0
    %1947 = vmatprep.mubr.f32.mxu0 0.0
    %v1948 = vand.u32 %v1778, 4294901760
    %1949 = vmatmul.mubr.f32.gmra.mxu0 %v1948
    %v1950 = vpop.f32.mrf.mxu0
    %v1951 = vadd.f32 %v1864, %v1950
    %v1952 = vpop.f32.mrf.mxu0
    %1953 = vdwg.mxu0
    %1954 = vmatprep.subr.mxu0 0.0
    %1955 = vmatpush1.msra.mxu0 0.0
    %1956 = vmatprep.subr.mxu0 0.0
    %1957 = vmatpush1.msra.mxu0 0.0
    %1958 = vmatprep.subr.mxu0 0.0
    %1959 = vmatpush1.msra.mxu0 0.0
    %1960 = vmatprep.subr.mxu0 0.0
    %1961 = vmatpush1.msra.mxu0 0.0
    %1962 = vmatprep.subr.mxu0 0.0
    %1963 = vmatpush1.msra.mxu0 0.0
    %1964 = vmatprep.subr.mxu0 0.0
    %1965 = vmatpush1.msra.mxu0 0.0
    %1966 = vmatprep.subr.mxu0 0.0
    %1967 = vmatpush1.msra.mxu0 0.0
    %1968 = vmatprep.subr.mxu0 0.0
    %1969 = vmatpush1.msra.mxu0 0.0
    %1970 = vmatprep.subr.mxu0 0.0
    %1971 = vmatpush1.msra.mxu0 0.0
    %1972 = vmatprep.subr.mxu0 0.0
    %1973 = vmatpush1.msra.mxu0 0.0
    %1974 = vmatprep.subr.mxu0 0.0
    %1975 = vmatpush1.msra.mxu0 0.0
    %1976 = vmatprep.subr.mxu0 0.0
    %1977 = vmatpush1.msra.mxu0 0.0
    %1978 = vmatprep.subr.mxu0 0.0
    %1979 = vmatpush1.msra.mxu0 0.0
    %1980 = vmatprep.subr.mxu0 0.0
    %1981 = vmatpush1.msra.mxu0 0.0
    %1982 = vmatprep.subr.mxu0 0.0
    %v1983 = vand.u32 %v1184, 4294901760
    %v1984 = vsub.f32 %v1184, %v1983
    %1985 = vmatpush1.msra.mxu0 %v1984
    %1986 = vmatprep.subr.mxu0 0.0
    %v1987 = vand.u32 %v1178, 4294901760
    %v1988 = vsub.f32 %v1178, %v1987
    %1989 = vmatpush1.msra.mxu0 %v1988
    %1990 = vmatprep.subr.mxu0 0.0
    %1991 = vmatpush2.msra.mxu0 0.0
    %1992 = vmatprep.subr.mxu0 0.0
    %1993 = vmatpush2.msra.mxu0 0.0
    %1994 = vmatprep.subr.mxu0 0.0
    %1995 = vmatpush2.msra.mxu0 0.0
    %1996 = vmatprep.subr.mxu0 0.0
    %1997 = vmatpush2.msra.mxu0 0.0
    %1998 = vmatprep.subr.mxu0 0.0
    %1999 = vmatpush2.msra.mxu0 0.0
    %2000 = vmatprep.subr.mxu0 0.0
    %2001 = vmatpush2.msra.mxu0 0.0
    %2002 = vmatprep.subr.mxu0 0.0
    %2003 = vmatpush2.msra.mxu0 0.0
    %2004 = vmatprep.subr.mxu0 0.0
    %2005 = vmatpush2.msra.mxu0 0.0
    %2006 = vmatprep.subr.mxu0 0.0
    %2007 = vmatpush2.msra.mxu0 0.0
    %2008 = vmatprep.subr.mxu0 0.0
    %2009 = vmatpush2.msra.mxu0 0.0
    %2010 = vmatprep.subr.mxu0 0.0
    %2011 = vmatpush2.msra.mxu0 0.0
    %2012 = vmatprep.subr.mxu0 0.0
    %2013 = vmatpush2.msra.mxu0 0.0
    %2014 = vmatprep.subr.mxu0 0.0
    %2015 = vmatpush2.msra.mxu0 0.0
    %2016 = vmatprep.subr.mxu0 0.0
    %2017 = vmatpush2.msra.mxu0 0.0
    %2018 = vmatprep.subr.mxu0 0.0
    %2019 = vmatpush2.msra.mxu0 0.0
    %2020 = vmatprep.subr.mxu0 0.0
    %2021 = vmatpush2.msra.mxu0 0.0
    %2022 = vmatprep.mubr.f32.mxu0 0.0
    %v2023 = vand.u32 %v1775, 4294901760
    %v2024 = vsub.f32 %v1775, %v2023
    %2025 = vmatmul.mubr.f32.gmra.mxu0 %v2024
    %v2026 = vpop.f32.mrf.mxu0
    %v2027 = vadd.f32 %v1945, %v2026
    %v2028 = vpop.f32.mrf.mxu0
    %2029 = vmatprep.mubr.f32.mxu0 0.0
    %v2030 = vand.u32 %v1778, 4294901760
    %v2031 = vsub.f32 %v1778, %v2030
    %2032 = vmatmul.mubr.f32.gmra.mxu0 %v2031
    %v2033 = vpop.f32.mrf.mxu0
    %v2034 = vadd.f32 %v1951, %v2033
    %v2035 = vpop.f32.mrf.mxu0
    %2036 = vdwg.mxu0
    %2037 = vmatprep.subr.mxu0 0.0
    %2038 = vmatpush1.msra.mxu0 0.0
    %2039 = vmatprep.subr.mxu0 0.0
    %2040 = vmatpush1.msra.mxu0 0.0
    %2041 = vmatprep.subr.mxu0 0.0
    %2042 = vmatpush1.msra.mxu0 0.0
    %2043 = vmatprep.subr.mxu0 0.0
    %2044 = vmatpush1.msra.mxu0 0.0
    %2045 = vmatprep.subr.mxu0 0.0
    %2046 = vmatpush1.msra.mxu0 0.0
    %2047 = vmatprep.subr.mxu0 0.0
    %2048 = vmatpush1.msra.mxu0 0.0
    %2049 = vmatprep.subr.mxu0 0.0
    %2050 = vmatpush1.msra.mxu0 0.0
    %2051 = vmatprep.subr.mxu0 0.0
    %2052 = vmatpush1.msra.mxu0 0.0
    %2053 = vmatprep.subr.mxu0 0.0
    %2054 = vmatpush1.msra.mxu0 0.0
    %2055 = vmatprep.subr.mxu0 0.0
    %2056 = vmatpush1.msra.mxu0 0.0
    %2057 = vmatprep.subr.mxu0 0.0
    %2058 = vmatpush1.msra.mxu0 0.0
    %2059 = vmatprep.subr.mxu0 0.0
    %2060 = vmatpush1.msra.mxu0 0.0
    %2061 = vmatprep.subr.mxu0 0.0
    %2062 = vmatpush1.msra.mxu0 0.0
    %2063 = vmatprep.subr.mxu0 0.0
    %2064 = vmatpush1.msra.mxu0 0.0
    %2065 = vmatprep.subr.mxu0 0.0
    %v2066 = vand.u32 %v1184, 4294901760
    %2067 = vmatpush1.msra.mxu0 %v2066
    %2068 = vmatprep.subr.mxu0 0.0
    %v2069 = vand.u32 %v1178, 4294901760
    %2070 = vmatpush1.msra.mxu0 %v2069
    %2071 = vmatprep.subr.mxu0 0.0
    %2072 = vmatpush2.msra.mxu0 0.0
    %2073 = vmatprep.subr.mxu0 0.0
    %2074 = vmatpush2.msra.mxu0 0.0
    %2075 = vmatprep.subr.mxu0 0.0
    %2076 = vmatpush2.msra.mxu0 0.0
    %2077 = vmatprep.subr.mxu0 0.0
    %2078 = vmatpush2.msra.mxu0 0.0
    %2079 = vmatprep.subr.mxu0 0.0
    %2080 = vmatpush2.msra.mxu0 0.0
    %2081 = vmatprep.subr.mxu0 0.0
    %2082 = vmatpush2.msra.mxu0 0.0
    %2083 = vmatprep.subr.mxu0 0.0
    %2084 = vmatpush2.msra.mxu0 0.0
    %2085 = vmatprep.subr.mxu0 0.0
    %2086 = vmatpush2.msra.mxu0 0.0
    %2087 = vmatprep.subr.mxu0 0.0
    %2088 = vmatpush2.msra.mxu0 0.0
    %2089 = vmatprep.subr.mxu0 0.0
    %2090 = vmatpush2.msra.mxu0 0.0
    %2091 = vmatprep.subr.mxu0 0.0
    %2092 = vmatpush2.msra.mxu0 0.0
    %2093 = vmatprep.subr.mxu0 0.0
    %2094 = vmatpush2.msra.mxu0 0.0
    %2095 = vmatprep.subr.mxu0 0.0
    %2096 = vmatpush2.msra.mxu0 0.0
    %2097 = vmatprep.subr.mxu0 0.0
    %2098 = vmatpush2.msra.mxu0 0.0
    %2099 = vmatprep.subr.mxu0 0.0
    %2100 = vmatpush2.msra.mxu0 0.0
    %2101 = vmatprep.subr.mxu0 0.0
    %2102 = vmatpush2.msra.mxu0 0.0
    %2103 = vmatprep.mubr.f32.mxu0 0.0
    %v2104 = vand.u32 %v1775, 4294901760
    %v2105 = vsub.f32 %v1775, %v2104
    %v2106 = vand.u32 %v2105, 4294901760
    %2107 = vmatmul.mubr.f32.gmra.mxu0 %v2106
    %v2108 = vpop.f32.mrf.mxu0
    %v2109 = vadd.f32 %v2027, %v2108
    %v2110 = vpop.f32.mrf.mxu0
    %2111 = vmatprep.mubr.f32.mxu0 0.0
    %v2112 = vand.u32 %v1778, 4294901760
    %v2113 = vsub.f32 %v1778, %v2112
    %v2114 = vand.u32 %v2113, 4294901760
    %2115 = vmatmul.mubr.f32.gmra.mxu0 %v2114
    %v2116 = vpop.f32.mrf.mxu0
    %v2117 = vadd.f32 %v2034, %v2116
    %v2118 = vpop.f32.mrf.mxu0
    %2119 = vdwg.mxu0
    %2120 = vmatprep.subr.mxu0 0.0
    %2121 = vmatpush1.msra.mxu0 0.0
    %2122 = vmatprep.subr.mxu0 0.0
    %2123 = vmatpush1.msra.mxu0 0.0
    %2124 = vmatprep.subr.mxu0 0.0
    %2125 = vmatpush1.msra.mxu0 0.0
    %2126 = vmatprep.subr.mxu0 0.0
    %2127 = vmatpush1.msra.mxu0 0.0
    %2128 = vmatprep.subr.mxu0 0.0
    %2129 = vmatpush1.msra.mxu0 0.0
    %2130 = vmatprep.subr.mxu0 0.0
    %2131 = vmatpush1.msra.mxu0 0.0
    %2132 = vmatprep.subr.mxu0 0.0
    %2133 = vmatpush1.msra.mxu0 0.0
    %2134 = vmatprep.subr.mxu0 0.0
    %2135 = vmatpush1.msra.mxu0 0.0
    %2136 = vmatprep.subr.mxu0 0.0
    %2137 = vmatpush1.msra.mxu0 0.0
    %2138 = vmatprep.subr.mxu0 0.0
    %2139 = vmatpush1.msra.mxu0 0.0
    %2140 = vmatprep.subr.mxu0 0.0
    %2141 = vmatpush1.msra.mxu0 0.0
    %2142 = vmatprep.subr.mxu0 0.0
    %2143 = vmatpush1.msra.mxu0 0.0
    %2144 = vmatprep.subr.mxu0 0.0
    %2145 = vmatpush1.msra.mxu0 0.0
    %2146 = vmatprep.subr.mxu0 0.0
    %2147 = vmatpush1.msra.mxu0 0.0
    %2148 = vmatprep.subr.mxu0 0.0
    %v2149 = vand.u32 %v1184, 4294901760
    %v2150 = vsub.f32 %v1184, %v2149
    %v2151 = vand.u32 %v2150, 4294901760
    %2152 = vmatpush1.msra.mxu0 %v2151
    %2153 = vmatprep.subr.mxu0 0.0
    %v2154 = vand.u32 %v1178, 4294901760
    %v2155 = vsub.f32 %v1178, %v2154
    %v2156 = vand.u32 %v2155, 4294901760
    %2157 = vmatpush1.msra.mxu0 %v2156
    %2158 = vmatprep.subr.mxu0 0.0
    %2159 = vmatpush2.msra.mxu0 0.0
    %2160 = vmatprep.subr.mxu0 0.0
    %2161 = vmatpush2.msra.mxu0 0.0
    %2162 = vmatprep.subr.mxu0 0.0
    %2163 = vmatpush2.msra.mxu0 0.0
    %2164 = vmatprep.subr.mxu0 0.0
    %2165 = vmatpush2.msra.mxu0 0.0
    %2166 = vmatprep.subr.mxu0 0.0
    %2167 = vmatpush2.msra.mxu0 0.0
    %2168 = vmatprep.subr.mxu0 0.0
    %2169 = vmatpush2.msra.mxu0 0.0
    %2170 = vmatprep.subr.mxu0 0.0
    %2171 = vmatpush2.msra.mxu0 0.0
    %2172 = vmatprep.subr.mxu0 0.0
    %2173 = vmatpush2.msra.mxu0 0.0
    %2174 = vmatprep.subr.mxu0 0.0
    %2175 = vmatpush2.msra.mxu0 0.0
    %2176 = vmatprep.subr.mxu0 0.0
    %2177 = vmatpush2.msra.mxu0 0.0
    %2178 = vmatprep.subr.mxu0 0.0
    %2179 = vmatpush2.msra.mxu0 0.0
    %2180 = vmatprep.subr.mxu0 0.0
    %2181 = vmatpush2.msra.mxu0 0.0
    %2182 = vmatprep.subr.mxu0 0.0
    %2183 = vmatpush2.msra.mxu0 0.0
    %2184 = vmatprep.subr.mxu0 0.0
    %2185 = vmatpush2.msra.mxu0 0.0
    %2186 = vmatprep.subr.mxu0 0.0
    %2187 = vmatpush2.msra.mxu0 0.0
    %2188 = vmatprep.subr.mxu0 0.0
    %2189 = vmatpush2.msra.mxu0 0.0
    %2190 = vmatprep.mubr.f32.mxu0 0.0
    %v2191 = vand.u32 %v1775, 4294901760
    %2192 = vmatmul.mubr.f32.gmra.mxu0 %v2191
    %v2193 = vpop.f32.mrf.mxu0
    %v2194 = vadd.f32 %v2109, %v2193
    %v2195 = vpop.f32.mrf.mxu0
    %2196 = vmatprep.mubr.f32.mxu0 0.0
    %v2197 = vand.u32 %v1778, 4294901760
    %2198 = vmatmul.mubr.f32.gmra.mxu0 %v2197
    %v2199 = vpop.f32.mrf.mxu0
    %v2200 = vadd.f32 %v2117, %v2199
    %v2201 = vpop.f32.mrf.mxu0
    %2202 = vdwg.mxu0
    %2203 = vmatprep.subr.mxu0 0.0
    %2204 = vmatpush1.msra.mxu0 0.0
    %2205 = vmatprep.subr.mxu0 0.0
    %2206 = vmatpush1.msra.mxu0 0.0
    %2207 = vmatprep.subr.mxu0 0.0
    %2208 = vmatpush1.msra.mxu0 0.0
    %2209 = vmatprep.subr.mxu0 0.0
    %2210 = vmatpush1.msra.mxu0 0.0
    %2211 = vmatprep.subr.mxu0 0.0
    %2212 = vmatpush1.msra.mxu0 0.0
    %2213 = vmatprep.subr.mxu0 0.0
    %2214 = vmatpush1.msra.mxu0 0.0
    %2215 = vmatprep.subr.mxu0 0.0
    %2216 = vmatpush1.msra.mxu0 0.0
    %2217 = vmatprep.subr.mxu0 0.0
    %2218 = vmatpush1.msra.mxu0 0.0
    %2219 = vmatprep.subr.mxu0 0.0
    %2220 = vmatpush1.msra.mxu0 0.0
    %2221 = vmatprep.subr.mxu0 0.0
    %2222 = vmatpush1.msra.mxu0 0.0
    %2223 = vmatprep.subr.mxu0 0.0
    %2224 = vmatpush1.msra.mxu0 0.0
    %2225 = vmatprep.subr.mxu0 0.0
    %2226 = vmatpush1.msra.mxu0 0.0
    %2227 = vmatprep.subr.mxu0 0.0
    %2228 = vmatpush1.msra.mxu0 0.0
    %2229 = vmatprep.subr.mxu0 0.0
    %2230 = vmatpush1.msra.mxu0 0.0
    %2231 = vmatprep.subr.mxu0 0.0
    %v2232 = vand.u32 %v1184, 4294901760
    %2233 = vmatpush1.msra.mxu0 %v2232
    %2234 = vmatprep.subr.mxu0 0.0
    %v2235 = vand.u32 %v1178, 4294901760
    %2236 = vmatpush1.msra.mxu0 %v2235
    %2237 = vmatprep.subr.mxu0 0.0
    %2238 = vmatpush2.msra.mxu0 0.0
    %2239 = vmatprep.subr.mxu0 0.0
    %2240 = vmatpush2.msra.mxu0 0.0
    %2241 = vmatprep.subr.mxu0 0.0
    %2242 = vmatpush2.msra.mxu0 0.0
    %2243 = vmatprep.subr.mxu0 0.0
    %2244 = vmatpush2.msra.mxu0 0.0
    %2245 = vmatprep.subr.mxu0 0.0
    %2246 = vmatpush2.msra.mxu0 0.0
    %2247 = vmatprep.subr.mxu0 0.0
    %2248 = vmatpush2.msra.mxu0 0.0
    %2249 = vmatprep.subr.mxu0 0.0
    %2250 = vmatpush2.msra.mxu0 0.0
    %2251 = vmatprep.subr.mxu0 0.0
    %2252 = vmatpush2.msra.mxu0 0.0
    %2253 = vmatprep.subr.mxu0 0.0
    %2254 = vmatpush2.msra.mxu0 0.0
    %2255 = vmatprep.subr.mxu0 0.0
    %2256 = vmatpush2.msra.mxu0 0.0
    %2257 = vmatprep.subr.mxu0 0.0
    %2258 = vmatpush2.msra.mxu0 0.0
    %2259 = vmatprep.subr.mxu0 0.0
    %2260 = vmatpush2.msra.mxu0 0.0
    %2261 = vmatprep.subr.mxu0 0.0
    %2262 = vmatpush2.msra.mxu0 0.0
    %2263 = vmatprep.subr.mxu0 0.0
    %2264 = vmatpush2.msra.mxu0 0.0
    %2265 = vmatprep.subr.mxu0 0.0
    %2266 = vmatpush2.msra.mxu0 0.0
    %2267 = vmatprep.subr.mxu0 0.0
    %2268 = vmatpush2.msra.mxu0 0.0
    %2269 = vmatprep.mubr.f32.mxu0 0.0
    %v2270 = vand.u32 %v1775, 4294901760
    %2271 = vmatmul.mubr.f32.gmra.mxu0 %v2270
    %v2272 = vpop.f32.mrf.mxu0
    %v2273 = vadd.f32 %v2194, %v2272
    %v2274 = vpop.f32.mrf.mxu0
    %2275 = vmatprep.mubr.f32.mxu0 0.0
    %v2276 = vand.u32 %v1778, 4294901760
    %2277 = vmatmul.mubr.f32.gmra.mxu0 %v2276
    %v2278 = vpop.f32.mrf.mxu0
    %v2279 = vadd.f32 %v2200, %v2278
    %v2280 = vpop.f32.mrf.mxu0
    %2281 = vdwg.mxu0
    %2282 = vrot.lane.b32.xlu0 %v621, 120
    %v2283 = vpop.permute.xlu0 %2282
    %2284 = vrot.lane.b32.xlu0 %v622, 120
    %v2285 = vpop.permute.xlu0 %2284
    %2286 = vrot.lane.b32.xlu0 %v631, 88
    %v2287 = vpop.permute.xlu0 %2286
    %2288 = vrot.lane.b32.xlu0 %v632, 88
    %v2289 = vpop.permute.xlu0 %2288
    %v2290 = vsel %vm1238, %v2283, 0
    %v2292 = vsel %vm1238, %v2285, 0
    %v2294 = vsel %vm1238, %v2287, 0
    %v2296 = vsel %vm1238, %v2289, 0
    %2298 = vmatprep.subr.mxu0 0.0
    %2299 = vmatpush1.xpose.msra.mxu0 0.0
    %2300 = vmatprep.subr.mxu0 0.0
    %2301 = vmatpush1.xpose.msra.mxu0 0.0
    %2302 = vmatprep.subr.mxu0 0.0
    %2303 = vmatpush1.xpose.msra.mxu0 0.0
    %2304 = vmatprep.subr.mxu0 0.0
    %2305 = vmatpush1.xpose.msra.mxu0 0.0
    %2306 = vmatprep.subr.mxu0 0.0
    %2307 = vmatpush1.xpose.msra.mxu0 0.0
    %2308 = vmatprep.subr.mxu0 0.0
    %2309 = vmatpush1.xpose.msra.mxu0 0.0
    %2310 = vmatprep.subr.mxu0 0.0
    %2311 = vmatpush1.xpose.msra.mxu0 0.0
    %2312 = vmatprep.subr.mxu0 0.0
    %2313 = vmatpush1.xpose.msra.mxu0 0.0
    %2314 = vmatprep.subr.mxu0 0.0
    %2315 = vmatpush1.xpose.msra.mxu0 0.0
    %2316 = vmatprep.subr.mxu0 0.0
    %2317 = vmatpush1.xpose.msra.mxu0 0.0
    %2318 = vmatprep.subr.mxu0 0.0
    %2319 = vmatpush1.xpose.msra.mxu0 0.0
    %2320 = vmatprep.subr.mxu0 0.0
    %2321 = vmatpush1.xpose.msra.mxu0 0.0
    %2322 = vmatprep.subr.mxu0 0.0
    %2323 = vmatpush1.xpose.msra.mxu0 0.0
    %2324 = vmatprep.subr.mxu0 0.0
    %2325 = vmatpush1.xpose.msra.mxu0 0.0
    %2326 = vmatprep.subr.mxu0 0.0
    %v2327 = vand.u32 %v2296, 4294901760
    %2328 = vmatpush1.xpose.msra.mxu0 %v2327
    %2329 = vmatprep.subr.mxu0 0.0
    %v2330 = vand.u32 %v2294, 4294901760
    %2331 = vmatpush1.xpose.msra.mxu0 %v2330
    %2332 = vmatprep.subr.mxu0 0.0
    %2333 = vmatpush2.xpose.msra.mxu0 0.0
    %2334 = vmatprep.subr.mxu0 0.0
    %2335 = vmatpush2.xpose.msra.mxu0 0.0
    %2336 = vmatprep.subr.mxu0 0.0
    %2337 = vmatpush2.xpose.msra.mxu0 0.0
    %2338 = vmatprep.subr.mxu0 0.0
    %2339 = vmatpush2.xpose.msra.mxu0 0.0
    %2340 = vmatprep.subr.mxu0 0.0
    %2341 = vmatpush2.xpose.msra.mxu0 0.0
    %2342 = vmatprep.subr.mxu0 0.0
    %2343 = vmatpush2.xpose.msra.mxu0 0.0
    %2344 = vmatprep.subr.mxu0 0.0
    %2345 = vmatpush2.xpose.msra.mxu0 0.0
    %2346 = vmatprep.subr.mxu0 0.0
    %2347 = vmatpush2.xpose.msra.mxu0 0.0
    %2348 = vmatprep.subr.mxu0 0.0
    %2349 = vmatpush2.xpose.msra.mxu0 0.0
    %2350 = vmatprep.subr.mxu0 0.0
    %2351 = vmatpush2.xpose.msra.mxu0 0.0
    %2352 = vmatprep.subr.mxu0 0.0
    %2353 = vmatpush2.xpose.msra.mxu0 0.0
    %2354 = vmatprep.subr.mxu0 0.0
    %2355 = vmatpush2.xpose.msra.mxu0 0.0
    %2356 = vmatprep.subr.mxu0 0.0
    %2357 = vmatpush2.xpose.msra.mxu0 0.0
    %2358 = vmatprep.subr.mxu0 0.0
    %2359 = vmatpush2.xpose.msra.mxu0 0.0
    %2360 = vmatprep.subr.mxu0 0.0
    %2361 = vmatpush2.xpose.msra.mxu0 0.0
    %2362 = vmatprep.subr.mxu0 0.0
    %2363 = vmatpush2.xpose.msra.mxu0 0.0
    %2364 = vmatprep.mubr.f32.mxu0 0.0
    %v2365 = vand.u32 %v2290, 4294901760
    %v2366 = vsub.f32 %v2290, %v2365
    %v2367 = vand.u32 %v2366, 4294901760
    %v2368 = vsub.f32 %v2366, %v2367
    %v2369 = vand.u32 %v2368, 4294901760
    %2370 = vmatmul.mubr.f32.gmra.mxu0 %v2369
    %v2371 = vpop.f32.mrf.mxu0
    %v2372 = vadd.f32 %v1230, %v2371
    %v2373 = vpop.f32.mrf.mxu0
    %2374 = vmatprep.mubr.f32.mxu0 0.0
    %v2375 = vand.u32 %v2292, 4294901760
    %v2376 = vsub.f32 %v2292, %v2375
    %v2377 = vand.u32 %v2376, 4294901760
    %v2378 = vsub.f32 %v2376, %v2377
    %v2379 = vand.u32 %v2378, 4294901760
    %2380 = vmatmul.mubr.f32.gmra.mxu0 %v2379
    %v2381 = vpop.f32.mrf.mxu0
    %v2382 = vadd.f32 %v1231, %v2381
    %v2383 = vpop.f32.mrf.mxu0
    %2384 = vdwg.mxu0
    %2385 = vmatprep.subr.mxu0 0.0
    %2386 = vmatpush1.xpose.msra.mxu0 0.0
    %2387 = vmatprep.subr.mxu0 0.0
    %2388 = vmatpush1.xpose.msra.mxu0 0.0
    %2389 = vmatprep.subr.mxu0 0.0
    %2390 = vmatpush1.xpose.msra.mxu0 0.0
    %2391 = vmatprep.subr.mxu0 0.0
    %2392 = vmatpush1.xpose.msra.mxu0 0.0
    %2393 = vmatprep.subr.mxu0 0.0
    %2394 = vmatpush1.xpose.msra.mxu0 0.0
    %2395 = vmatprep.subr.mxu0 0.0
    %2396 = vmatpush1.xpose.msra.mxu0 0.0
    %2397 = vmatprep.subr.mxu0 0.0
    %2398 = vmatpush1.xpose.msra.mxu0 0.0
    %2399 = vmatprep.subr.mxu0 0.0
    %2400 = vmatpush1.xpose.msra.mxu0 0.0
    %2401 = vmatprep.subr.mxu0 0.0
    %2402 = vmatpush1.xpose.msra.mxu0 0.0
    %2403 = vmatprep.subr.mxu0 0.0
    %2404 = vmatpush1.xpose.msra.mxu0 0.0
    %2405 = vmatprep.subr.mxu0 0.0
    %2406 = vmatpush1.xpose.msra.mxu0 0.0
    %2407 = vmatprep.subr.mxu0 0.0
    %2408 = vmatpush1.xpose.msra.mxu0 0.0
    %2409 = vmatprep.subr.mxu0 0.0
    %2410 = vmatpush1.xpose.msra.mxu0 0.0
    %2411 = vmatprep.subr.mxu0 0.0
    %2412 = vmatpush1.xpose.msra.mxu0 0.0
    %2413 = vmatprep.subr.mxu0 0.0
    %v2414 = vand.u32 %v2296, 4294901760
    %v2415 = vsub.f32 %v2296, %v2414
    %v2416 = vand.u32 %v2415, 4294901760
    %v2417 = vsub.f32 %v2415, %v2416
    %v2418 = vand.u32 %v2417, 4294901760
    %2419 = vmatpush1.xpose.msra.mxu0 %v2418
    %2420 = vmatprep.subr.mxu0 0.0
    %v2421 = vand.u32 %v2294, 4294901760
    %v2422 = vsub.f32 %v2294, %v2421
    %v2423 = vand.u32 %v2422, 4294901760
    %v2424 = vsub.f32 %v2422, %v2423
    %v2425 = vand.u32 %v2424, 4294901760
    %2426 = vmatpush1.xpose.msra.mxu0 %v2425
    %2427 = vmatprep.subr.mxu0 0.0
    %2428 = vmatpush2.xpose.msra.mxu0 0.0
    %2429 = vmatprep.subr.mxu0 0.0
    %2430 = vmatpush2.xpose.msra.mxu0 0.0
    %2431 = vmatprep.subr.mxu0 0.0
    %2432 = vmatpush2.xpose.msra.mxu0 0.0
    %2433 = vmatprep.subr.mxu0 0.0
    %2434 = vmatpush2.xpose.msra.mxu0 0.0
    %2435 = vmatprep.subr.mxu0 0.0
    %2436 = vmatpush2.xpose.msra.mxu0 0.0
    %2437 = vmatprep.subr.mxu0 0.0
    %2438 = vmatpush2.xpose.msra.mxu0 0.0
    %2439 = vmatprep.subr.mxu0 0.0
    %2440 = vmatpush2.xpose.msra.mxu0 0.0
    %2441 = vmatprep.subr.mxu0 0.0
    %2442 = vmatpush2.xpose.msra.mxu0 0.0
    %2443 = vmatprep.subr.mxu0 0.0
    %2444 = vmatpush2.xpose.msra.mxu0 0.0
    %2445 = vmatprep.subr.mxu0 0.0
    %2446 = vmatpush2.xpose.msra.mxu0 0.0
    %2447 = vmatprep.subr.mxu0 0.0
    %2448 = vmatpush2.xpose.msra.mxu0 0.0
    %2449 = vmatprep.subr.mxu0 0.0
    %2450 = vmatpush2.xpose.msra.mxu0 0.0
    %2451 = vmatprep.subr.mxu0 0.0
    %2452 = vmatpush2.xpose.msra.mxu0 0.0
    %2453 = vmatprep.subr.mxu0 0.0
    %2454 = vmatpush2.xpose.msra.mxu0 0.0
    %2455 = vmatprep.subr.mxu0 0.0
    %2456 = vmatpush2.xpose.msra.mxu0 0.0
    %2457 = vmatprep.subr.mxu0 0.0
    %2458 = vmatpush2.xpose.msra.mxu0 0.0
    %2459 = vmatprep.mubr.f32.mxu0 0.0
    %v2460 = vand.u32 %v2290, 4294901760
    %2461 = vmatmul.mubr.f32.gmra.mxu0 %v2460
    %v2462 = vpop.f32.mrf.mxu0
    %v2463 = vadd.f32 %v2372, %v2462
    %v2464 = vpop.f32.mrf.mxu0
    %2465 = vmatprep.mubr.f32.mxu0 0.0
    %v2466 = vand.u32 %v2292, 4294901760
    %2467 = vmatmul.mubr.f32.gmra.mxu0 %v2466
    %v2468 = vpop.f32.mrf.mxu0
    %v2469 = vadd.f32 %v2382, %v2468
    %v2470 = vpop.f32.mrf.mxu0
    %2471 = vdwg.mxu0
    %2472 = vmatprep.subr.mxu0 0.0
    %2473 = vmatpush1.xpose.msra.mxu0 0.0
    %2474 = vmatprep.subr.mxu0 0.0
    %2475 = vmatpush1.xpose.msra.mxu0 0.0
    %2476 = vmatprep.subr.mxu0 0.0
    %2477 = vmatpush1.xpose.msra.mxu0 0.0
    %2478 = vmatprep.subr.mxu0 0.0
    %2479 = vmatpush1.xpose.msra.mxu0 0.0
    %2480 = vmatprep.subr.mxu0 0.0
    %2481 = vmatpush1.xpose.msra.mxu0 0.0
    %2482 = vmatprep.subr.mxu0 0.0
    %2483 = vmatpush1.xpose.msra.mxu0 0.0
    %2484 = vmatprep.subr.mxu0 0.0
    %2485 = vmatpush1.xpose.msra.mxu0 0.0
    %2486 = vmatprep.subr.mxu0 0.0
    %2487 = vmatpush1.xpose.msra.mxu0 0.0
    %2488 = vmatprep.subr.mxu0 0.0
    %2489 = vmatpush1.xpose.msra.mxu0 0.0
    %2490 = vmatprep.subr.mxu0 0.0
    %2491 = vmatpush1.xpose.msra.mxu0 0.0
    %2492 = vmatprep.subr.mxu0 0.0
    %2493 = vmatpush1.xpose.msra.mxu0 0.0
    %2494 = vmatprep.subr.mxu0 0.0
    %2495 = vmatpush1.xpose.msra.mxu0 0.0
    %2496 = vmatprep.subr.mxu0 0.0
    %2497 = vmatpush1.xpose.msra.mxu0 0.0
    %2498 = vmatprep.subr.mxu0 0.0
    %2499 = vmatpush1.xpose.msra.mxu0 0.0
    %2500 = vmatprep.subr.mxu0 0.0
    %v2501 = vand.u32 %v2296, 4294901760
    %v2502 = vsub.f32 %v2296, %v2501
    %2503 = vmatpush1.xpose.msra.mxu0 %v2502
    %2504 = vmatprep.subr.mxu0 0.0
    %v2505 = vand.u32 %v2294, 4294901760
    %v2506 = vsub.f32 %v2294, %v2505
    %2507 = vmatpush1.xpose.msra.mxu0 %v2506
    %2508 = vmatprep.subr.mxu0 0.0
    %2509 = vmatpush2.xpose.msra.mxu0 0.0
    %2510 = vmatprep.subr.mxu0 0.0
    %2511 = vmatpush2.xpose.msra.mxu0 0.0
    %2512 = vmatprep.subr.mxu0 0.0
    %2513 = vmatpush2.xpose.msra.mxu0 0.0
    %2514 = vmatprep.subr.mxu0 0.0
    %2515 = vmatpush2.xpose.msra.mxu0 0.0
    %2516 = vmatprep.subr.mxu0 0.0
    %2517 = vmatpush2.xpose.msra.mxu0 0.0
    %2518 = vmatprep.subr.mxu0 0.0
    %2519 = vmatpush2.xpose.msra.mxu0 0.0
    %2520 = vmatprep.subr.mxu0 0.0
    %2521 = vmatpush2.xpose.msra.mxu0 0.0
    %2522 = vmatprep.subr.mxu0 0.0
    %2523 = vmatpush2.xpose.msra.mxu0 0.0
    %2524 = vmatprep.subr.mxu0 0.0
    %2525 = vmatpush2.xpose.msra.mxu0 0.0
    %2526 = vmatprep.subr.mxu0 0.0
    %2527 = vmatpush2.xpose.msra.mxu0 0.0
    %2528 = vmatprep.subr.mxu0 0.0
    %2529 = vmatpush2.xpose.msra.mxu0 0.0
    %2530 = vmatprep.subr.mxu0 0.0
    %2531 = vmatpush2.xpose.msra.mxu0 0.0
    %2532 = vmatprep.subr.mxu0 0.0
    %2533 = vmatpush2.xpose.msra.mxu0 0.0
    %2534 = vmatprep.subr.mxu0 0.0
    %2535 = vmatpush2.xpose.msra.mxu0 0.0
    %2536 = vmatprep.subr.mxu0 0.0
    %2537 = vmatpush2.xpose.msra.mxu0 0.0
    %2538 = vmatprep.subr.mxu0 0.0
    %2539 = vmatpush2.xpose.msra.mxu0 0.0
    %2540 = vmatprep.mubr.f32.mxu0 0.0
    %v2541 = vand.u32 %v2290, 4294901760
    %v2542 = vsub.f32 %v2290, %v2541
    %2543 = vmatmul.mubr.f32.gmra.mxu0 %v2542
    %v2544 = vpop.f32.mrf.mxu0
    %v2545 = vadd.f32 %v2463, %v2544
    %v2546 = vpop.f32.mrf.mxu0
    %2547 = vmatprep.mubr.f32.mxu0 0.0
    %v2548 = vand.u32 %v2292, 4294901760
    %v2549 = vsub.f32 %v2292, %v2548
    %2550 = vmatmul.mubr.f32.gmra.mxu0 %v2549
    %v2551 = vpop.f32.mrf.mxu0
    %v2552 = vadd.f32 %v2469, %v2551
    %v2553 = vpop.f32.mrf.mxu0
    %2554 = vdwg.mxu0
    %2555 = vmatprep.subr.mxu0 0.0
    %2556 = vmatpush1.xpose.msra.mxu0 0.0
    %2557 = vmatprep.subr.mxu0 0.0
    %2558 = vmatpush1.xpose.msra.mxu0 0.0
    %2559 = vmatprep.subr.mxu0 0.0
    %2560 = vmatpush1.xpose.msra.mxu0 0.0
    %2561 = vmatprep.subr.mxu0 0.0
    %2562 = vmatpush1.xpose.msra.mxu0 0.0
    %2563 = vmatprep.subr.mxu0 0.0
    %2564 = vmatpush1.xpose.msra.mxu0 0.0
    %2565 = vmatprep.subr.mxu0 0.0
    %2566 = vmatpush1.xpose.msra.mxu0 0.0
    %2567 = vmatprep.subr.mxu0 0.0
    %2568 = vmatpush1.xpose.msra.mxu0 0.0
    %2569 = vmatprep.subr.mxu0 0.0
    %2570 = vmatpush1.xpose.msra.mxu0 0.0
    %2571 = vmatprep.subr.mxu0 0.0
    %2572 = vmatpush1.xpose.msra.mxu0 0.0
    %2573 = vmatprep.subr.mxu0 0.0
    %2574 = vmatpush1.xpose.msra.mxu0 0.0
    %2575 = vmatprep.subr.mxu0 0.0
    %2576 = vmatpush1.xpose.msra.mxu0 0.0
    %2577 = vmatprep.subr.mxu0 0.0
    %2578 = vmatpush1.xpose.msra.mxu0 0.0
    %2579 = vmatprep.subr.mxu0 0.0
    %2580 = vmatpush1.xpose.msra.mxu0 0.0
    %2581 = vmatprep.subr.mxu0 0.0
    %2582 = vmatpush1.xpose.msra.mxu0 0.0
    %2583 = vmatprep.subr.mxu0 0.0
    %v2584 = vand.u32 %v2296, 4294901760
    %2585 = vmatpush1.xpose.msra.mxu0 %v2584
    %2586 = vmatprep.subr.mxu0 0.0
    %v2587 = vand.u32 %v2294, 4294901760
    %2588 = vmatpush1.xpose.msra.mxu0 %v2587
    %2589 = vmatprep.subr.mxu0 0.0
    %2590 = vmatpush2.xpose.msra.mxu0 0.0
    %2591 = vmatprep.subr.mxu0 0.0
    %2592 = vmatpush2.xpose.msra.mxu0 0.0
    %2593 = vmatprep.subr.mxu0 0.0
    %2594 = vmatpush2.xpose.msra.mxu0 0.0
    %2595 = vmatprep.subr.mxu0 0.0
    %2596 = vmatpush2.xpose.msra.mxu0 0.0
    %2597 = vmatprep.subr.mxu0 0.0
    %2598 = vmatpush2.xpose.msra.mxu0 0.0
    %2599 = vmatprep.subr.mxu0 0.0
    %2600 = vmatpush2.xpose.msra.mxu0 0.0
    %2601 = vmatprep.subr.mxu0 0.0
    %2602 = vmatpush2.xpose.msra.mxu0 0.0
    %2603 = vmatprep.subr.mxu0 0.0
    %2604 = vmatpush2.xpose.msra.mxu0 0.0
    %2605 = vmatprep.subr.mxu0 0.0
    %2606 = vmatpush2.xpose.msra.mxu0 0.0
    %2607 = vmatprep.subr.mxu0 0.0
    %2608 = vmatpush2.xpose.msra.mxu0 0.0
    %2609 = vmatprep.subr.mxu0 0.0
    %2610 = vmatpush2.xpose.msra.mxu0 0.0
    %2611 = vmatprep.subr.mxu0 0.0
    %2612 = vmatpush2.xpose.msra.mxu0 0.0
    %2613 = vmatprep.subr.mxu0 0.0
    %2614 = vmatpush2.xpose.msra.mxu0 0.0
    %2615 = vmatprep.subr.mxu0 0.0
    %2616 = vmatpush2.xpose.msra.mxu0 0.0
    %2617 = vmatprep.subr.mxu0 0.0
    %2618 = vmatpush2.xpose.msra.mxu0 0.0
    %2619 = vmatprep.subr.mxu0 0.0
    %2620 = vmatpush2.xpose.msra.mxu0 0.0
    %2621 = vmatprep.mubr.f32.mxu0 0.0
    %v2622 = vand.u32 %v2290, 4294901760
    %v2623 = vsub.f32 %v2290, %v2622
    %v2624 = vand.u32 %v2623, 4294901760
    %2625 = vmatmul.mubr.f32.gmra.mxu0 %v2624
    %v2626 = vpop.f32.mrf.mxu0
    %v2627 = vadd.f32 %v2545, %v2626
    %v2628 = vpop.f32.mrf.mxu0
    %2629 = vmatprep.mubr.f32.mxu0 0.0
    %v2630 = vand.u32 %v2292, 4294901760
    %v2631 = vsub.f32 %v2292, %v2630
    %v2632 = vand.u32 %v2631, 4294901760
    %2633 = vmatmul.mubr.f32.gmra.mxu0 %v2632
    %v2634 = vpop.f32.mrf.mxu0
    %v2635 = vadd.f32 %v2552, %v2634
    %v2636 = vpop.f32.mrf.mxu0
    %2637 = vdwg.mxu0
    %2638 = vmatprep.subr.mxu0 0.0
    %2639 = vmatpush1.xpose.msra.mxu0 0.0
    %2640 = vmatprep.subr.mxu0 0.0
    %2641 = vmatpush1.xpose.msra.mxu0 0.0
    %2642 = vmatprep.subr.mxu0 0.0
    %2643 = vmatpush1.xpose.msra.mxu0 0.0
    %2644 = vmatprep.subr.mxu0 0.0
    %2645 = vmatpush1.xpose.msra.mxu0 0.0
    %2646 = vmatprep.subr.mxu0 0.0
    %2647 = vmatpush1.xpose.msra.mxu0 0.0
    %2648 = vmatprep.subr.mxu0 0.0
    %2649 = vmatpush1.xpose.msra.mxu0 0.0
    %2650 = vmatprep.subr.mxu0 0.0
    %2651 = vmatpush1.xpose.msra.mxu0 0.0
    %2652 = vmatprep.subr.mxu0 0.0
    %2653 = vmatpush1.xpose.msra.mxu0 0.0
    %2654 = vmatprep.subr.mxu0 0.0
    %2655 = vmatpush1.xpose.msra.mxu0 0.0
    %2656 = vmatprep.subr.mxu0 0.0
    %2657 = vmatpush1.xpose.msra.mxu0 0.0
    %2658 = vmatprep.subr.mxu0 0.0
    %2659 = vmatpush1.xpose.msra.mxu0 0.0
    %2660 = vmatprep.subr.mxu0 0.0
    %2661 = vmatpush1.xpose.msra.mxu0 0.0
    %2662 = vmatprep.subr.mxu0 0.0
    %2663 = vmatpush1.xpose.msra.mxu0 0.0
    %2664 = vmatprep.subr.mxu0 0.0
    %2665 = vmatpush1.xpose.msra.mxu0 0.0
    %2666 = vmatprep.subr.mxu0 0.0
    %v2667 = vand.u32 %v2296, 4294901760
    %v2668 = vsub.f32 %v2296, %v2667
    %v2669 = vand.u32 %v2668, 4294901760
    %2670 = vmatpush1.xpose.msra.mxu0 %v2669
    %2671 = vmatprep.subr.mxu0 0.0
    %v2672 = vand.u32 %v2294, 4294901760
    %v2673 = vsub.f32 %v2294, %v2672
    %v2674 = vand.u32 %v2673, 4294901760
    %2675 = vmatpush1.xpose.msra.mxu0 %v2674
    %2676 = vmatprep.subr.mxu0 0.0
    %2677 = vmatpush2.xpose.msra.mxu0 0.0
    %2678 = vmatprep.subr.mxu0 0.0
    %2679 = vmatpush2.xpose.msra.mxu0 0.0
    %2680 = vmatprep.subr.mxu0 0.0
    %2681 = vmatpush2.xpose.msra.mxu0 0.0
    %2682 = vmatprep.subr.mxu0 0.0
    %2683 = vmatpush2.xpose.msra.mxu0 0.0
    %2684 = vmatprep.subr.mxu0 0.0
    %2685 = vmatpush2.xpose.msra.mxu0 0.0
    %2686 = vmatprep.subr.mxu0 0.0
    %2687 = vmatpush2.xpose.msra.mxu0 0.0
    %2688 = vmatprep.subr.mxu0 0.0
    %2689 = vmatpush2.xpose.msra.mxu0 0.0
    %2690 = vmatprep.subr.mxu0 0.0
    %2691 = vmatpush2.xpose.msra.mxu0 0.0
    %2692 = vmatprep.subr.mxu0 0.0
    %2693 = vmatpush2.xpose.msra.mxu0 0.0
    %2694 = vmatprep.subr.mxu0 0.0
    %2695 = vmatpush2.xpose.msra.mxu0 0.0
    %2696 = vmatprep.subr.mxu0 0.0
    %2697 = vmatpush2.xpose.msra.mxu0 0.0
    %2698 = vmatprep.subr.mxu0 0.0
    %2699 = vmatpush2.xpose.msra.mxu0 0.0
    %2700 = vmatprep.subr.mxu0 0.0
    %2701 = vmatpush2.xpose.msra.mxu0 0.0
    %2702 = vmatprep.subr.mxu0 0.0
    %2703 = vmatpush2.xpose.msra.mxu0 0.0
    %2704 = vmatprep.subr.mxu0 0.0
    %2705 = vmatpush2.xpose.msra.mxu0 0.0
    %2706 = vmatprep.subr.mxu0 0.0
    %2707 = vmatpush2.xpose.msra.mxu0 0.0
    %2708 = vmatprep.mubr.f32.mxu0 0.0
    %v2709 = vand.u32 %v2290, 4294901760
    %2710 = vmatmul.mubr.f32.gmra.mxu0 %v2709
    %v2711 = vpop.f32.mrf.mxu0
    %v2712 = vadd.f32 %v2627, %v2711
    %v2713 = vpop.f32.mrf.mxu0
    %2714 = vmatprep.mubr.f32.mxu0 0.0
    %v2715 = vand.u32 %v2292, 4294901760
    %2716 = vmatmul.mubr.f32.gmra.mxu0 %v2715
    %v2717 = vpop.f32.mrf.mxu0
    %v2718 = vadd.f32 %v2635, %v2717
    %v2719 = vpop.f32.mrf.mxu0
    %2720 = vdwg.mxu0
    %2721 = vmatprep.subr.mxu0 0.0
    %2722 = vmatpush1.xpose.msra.mxu0 0.0
    %2723 = vmatprep.subr.mxu0 0.0
    %2724 = vmatpush1.xpose.msra.mxu0 0.0
    %2725 = vmatprep.subr.mxu0 0.0
    %2726 = vmatpush1.xpose.msra.mxu0 0.0
    %2727 = vmatprep.subr.mxu0 0.0
    %2728 = vmatpush1.xpose.msra.mxu0 0.0
    %2729 = vmatprep.subr.mxu0 0.0
    %2730 = vmatpush1.xpose.msra.mxu0 0.0
    %2731 = vmatprep.subr.mxu0 0.0
    %2732 = vmatpush1.xpose.msra.mxu0 0.0
    %2733 = vmatprep.subr.mxu0 0.0
    %2734 = vmatpush1.xpose.msra.mxu0 0.0
    %2735 = vmatprep.subr.mxu0 0.0
    %2736 = vmatpush1.xpose.msra.mxu0 0.0
    %2737 = vmatprep.subr.mxu0 0.0
    %2738 = vmatpush1.xpose.msra.mxu0 0.0
    %2739 = vmatprep.subr.mxu0 0.0
    %2740 = vmatpush1.xpose.msra.mxu0 0.0
    %2741 = vmatprep.subr.mxu0 0.0
    %2742 = vmatpush1.xpose.msra.mxu0 0.0
    %2743 = vmatprep.subr.mxu0 0.0
    %2744 = vmatpush1.xpose.msra.mxu0 0.0
    %2745 = vmatprep.subr.mxu0 0.0
    %2746 = vmatpush1.xpose.msra.mxu0 0.0
    %2747 = vmatprep.subr.mxu0 0.0
    %2748 = vmatpush1.xpose.msra.mxu0 0.0
    %2749 = vmatprep.subr.mxu0 0.0
    %v2750 = vand.u32 %v2296, 4294901760
    %2751 = vmatpush1.xpose.msra.mxu0 %v2750
    %2752 = vmatprep.subr.mxu0 0.0
    %v2753 = vand.u32 %v2294, 4294901760
    %2754 = vmatpush1.xpose.msra.mxu0 %v2753
    %2755 = vmatprep.subr.mxu0 0.0
    %2756 = vmatpush2.xpose.msra.mxu0 0.0
    %2757 = vmatprep.subr.mxu0 0.0
    %2758 = vmatpush2.xpose.msra.mxu0 0.0
    %2759 = vmatprep.subr.mxu0 0.0
    %2760 = vmatpush2.xpose.msra.mxu0 0.0
    %2761 = vmatprep.subr.mxu0 0.0
    %2762 = vmatpush2.xpose.msra.mxu0 0.0
    %2763 = vmatprep.subr.mxu0 0.0
    %2764 = vmatpush2.xpose.msra.mxu0 0.0
    %2765 = vmatprep.subr.mxu0 0.0
    %2766 = vmatpush2.xpose.msra.mxu0 0.0
    %2767 = vmatprep.subr.mxu0 0.0
    %2768 = vmatpush2.xpose.msra.mxu0 0.0
    %2769 = vmatprep.subr.mxu0 0.0
    %2770 = vmatpush2.xpose.msra.mxu0 0.0
    %2771 = vmatprep.subr.mxu0 0.0
    %2772 = vmatpush2.xpose.msra.mxu0 0.0
    %2773 = vmatprep.subr.mxu0 0.0
    %2774 = vmatpush2.xpose.msra.mxu0 0.0
    %2775 = vmatprep.subr.mxu0 0.0
    %2776 = vmatpush2.xpose.msra.mxu0 0.0
    %2777 = vmatprep.subr.mxu0 0.0
    %2778 = vmatpush2.xpose.msra.mxu0 0.0
    %2779 = vmatprep.subr.mxu0 0.0
    %2780 = vmatpush2.xpose.msra.mxu0 0.0
    %2781 = vmatprep.subr.mxu0 0.0
    %2782 = vmatpush2.xpose.msra.mxu0 0.0
    %2783 = vmatprep.subr.mxu0 0.0
    %2784 = vmatpush2.xpose.msra.mxu0 0.0
    %2785 = vmatprep.subr.mxu0 0.0
    %2786 = vmatpush2.xpose.msra.mxu0 0.0
    %2787 = vmatprep.mubr.f32.mxu0 0.0
    %v2788 = vand.u32 %v2290, 4294901760
    %2789 = vmatmul.mubr.f32.gmra.mxu0 %v2788
    %v2790 = vpop.f32.mrf.mxu0
    %v2791 = vadd.f32 %v2712, %v2790
    %v2792 = vpop.f32.mrf.mxu0
    %2793 = vmatprep.mubr.f32.mxu0 0.0
    %v2794 = vand.u32 %v2292, 4294901760
    %2795 = vmatmul.mubr.f32.gmra.mxu0 %v2794
    %v2796 = vpop.f32.mrf.mxu0
    %v2797 = vadd.f32 %v2718, %v2796
    %v2798 = vpop.f32.mrf.mxu0
    %2799 = vdwg.mxu0
    %v2800 = vsel %vm1751, %v2791, -inf
    %2801 = vmax.xlane.f32.xlu0 %v2800
    %v2802 = vpop.xlane.xlu0 %2801
    %v2803 = vsel %vm1751, %v2797, -inf
    %2804 = vmax.xlane.f32.xlu0 %v2803
    %v2805 = vpop.xlane.xlu0 %2804
    %v2806 = vsub.f32 %v2791, %v2802
    %v2807 = vsub.f32 %v2797, %v2805
    %v2808 = vmul.f32 %v2806, 1.442695
    %v2809 = vpow.pop %v2808
    %v2810 = vmul.f32 %v2807, 1.442695
    %v2811 = vpow.pop %v2810
    %v2812 = vsel %vm1751, %v2809, 0.0
    %2813 = vadd.xlane.f32.xlu0 %v2812
    %v2814 = vpop.xlane.xlu0 %2813
    %v2815 = vsel %vm1751, %v2811, 0.0
    %2816 = vadd.xlane.f32.xlu0 %v2815
    %v2817 = vpop.xlane.xlu0 %2816
    %v2818 = vrcp.pop %v2814
    %v2819 = vrcp.pop %v2817
    %v2820 = vmul.f32 %v2809, %v2818
    %v2821 = vmul.f32 %v2811, %v2819
    %2824 = vrot.lane.b32.xlu0 %v1178, 120
    %v2825 = vpop.permute.xlu0 %2824
    %2826 = vrot.lane.b32.xlu0 %v1184, 120
    %v2827 = vpop.permute.xlu0 %2826
    %v2831 = vsel %vm1751, %v2820, 0
    %v2834 = vsel %vm1751, %v2821, 0
    %2836 = vmatprep.subr.mxu0 0.0
    %2837 = vmatpush1.msra.mxu0 0.0
    %2838 = vmatprep.subr.mxu0 0.0
    %2839 = vmatpush1.msra.mxu0 0.0
    %2840 = vmatprep.subr.mxu0 0.0
    %2841 = vmatpush1.msra.mxu0 0.0
    %2842 = vmatprep.subr.mxu0 0.0
    %2843 = vmatpush1.msra.mxu0 0.0
    %2844 = vmatprep.subr.mxu0 0.0
    %2845 = vmatpush1.msra.mxu0 0.0
    %2846 = vmatprep.subr.mxu0 0.0
    %2847 = vmatpush1.msra.mxu0 0.0
    %2848 = vmatprep.subr.mxu0 0.0
    %2849 = vmatpush1.msra.mxu0 0.0
    %2850 = vmatprep.subr.mxu0 0.0
    %2851 = vmatpush1.msra.mxu0 0.0
    %2852 = vmatprep.subr.mxu0 0.0
    %2853 = vmatpush1.msra.mxu0 0.0
    %2854 = vmatprep.subr.mxu0 0.0
    %2855 = vmatpush1.msra.mxu0 0.0
    %2856 = vmatprep.subr.mxu0 0.0
    %2857 = vmatpush1.msra.mxu0 0.0
    %2858 = vmatprep.subr.mxu0 0.0
    %2859 = vmatpush1.msra.mxu0 0.0
    %2860 = vmatprep.subr.mxu0 0.0
    %2861 = vmatpush1.msra.mxu0 0.0
    %2862 = vmatprep.subr.mxu0 0.0
    %2863 = vmatpush1.msra.mxu0 0.0
    %2864 = vmatprep.subr.mxu0 0.0
    %v2865 = vand.u32 %v2827, 4294901760
    %2866 = vmatpush1.msra.mxu0 %v2865
    %2867 = vmatprep.subr.mxu0 0.0
    %v2868 = vand.u32 %v2825, 4294901760
    %2869 = vmatpush1.msra.mxu0 %v2868
    %2870 = vmatprep.subr.mxu0 0.0
    %2871 = vmatpush2.msra.mxu0 0.0
    %2872 = vmatprep.subr.mxu0 0.0
    %2873 = vmatpush2.msra.mxu0 0.0
    %2874 = vmatprep.subr.mxu0 0.0
    %2875 = vmatpush2.msra.mxu0 0.0
    %2876 = vmatprep.subr.mxu0 0.0
    %2877 = vmatpush2.msra.mxu0 0.0
    %2878 = vmatprep.subr.mxu0 0.0
    %2879 = vmatpush2.msra.mxu0 0.0
    %2880 = vmatprep.subr.mxu0 0.0
    %2881 = vmatpush2.msra.mxu0 0.0
    %2882 = vmatprep.subr.mxu0 0.0
    %2883 = vmatpush2.msra.mxu0 0.0
    %2884 = vmatprep.subr.mxu0 0.0
    %2885 = vmatpush2.msra.mxu0 0.0
    %2886 = vmatprep.subr.mxu0 0.0
    %2887 = vmatpush2.msra.mxu0 0.0
    %2888 = vmatprep.subr.mxu0 0.0
    %2889 = vmatpush2.msra.mxu0 0.0
    %2890 = vmatprep.subr.mxu0 0.0
    %2891 = vmatpush2.msra.mxu0 0.0
    %2892 = vmatprep.subr.mxu0 0.0
    %2893 = vmatpush2.msra.mxu0 0.0
    %2894 = vmatprep.subr.mxu0 0.0
    %2895 = vmatpush2.msra.mxu0 0.0
    %2896 = vmatprep.subr.mxu0 0.0
    %2897 = vmatpush2.msra.mxu0 0.0
    %2898 = vmatprep.subr.mxu0 0.0
    %2899 = vmatpush2.msra.mxu0 0.0
    %2900 = vmatprep.subr.mxu0 0.0
    %2901 = vmatpush2.msra.mxu0 0.0
    %2902 = vmatprep.mubr.f32.mxu0 0.0
    %v2903 = vand.u32 %v2831, 4294901760
    %v2904 = vsub.f32 %v2831, %v2903
    %v2905 = vand.u32 %v2904, 4294901760
    %v2906 = vsub.f32 %v2904, %v2905
    %v2907 = vand.u32 %v2906, 4294901760
    %2908 = vmatmul.mubr.f32.gmra.mxu0 %v2907
    %v2909 = vpop.f32.mrf.mxu0
    %v2910 = vadd.f32 0.0, %v2909
    %v2911 = vpop.f32.mrf.mxu0
    %2912 = vmatprep.mubr.f32.mxu0 0.0
    %v2913 = vand.u32 %v2834, 4294901760
    %v2914 = vsub.f32 %v2834, %v2913
    %v2915 = vand.u32 %v2914, 4294901760
    %v2916 = vsub.f32 %v2914, %v2915
    %v2917 = vand.u32 %v2916, 4294901760
    %2918 = vmatmul.mubr.f32.gmra.mxu0 %v2917
    %v2919 = vpop.f32.mrf.mxu0
    %v2920 = vadd.f32 0.0, %v2919
    %v2921 = vpop.f32.mrf.mxu0
    %2922 = vdwg.mxu0
    %2923 = vmatprep.subr.mxu0 0.0
    %2924 = vmatpush1.msra.mxu0 0.0
    %2925 = vmatprep.subr.mxu0 0.0
    %2926 = vmatpush1.msra.mxu0 0.0
    %2927 = vmatprep.subr.mxu0 0.0
    %2928 = vmatpush1.msra.mxu0 0.0
    %2929 = vmatprep.subr.mxu0 0.0
    %2930 = vmatpush1.msra.mxu0 0.0
    %2931 = vmatprep.subr.mxu0 0.0
    %2932 = vmatpush1.msra.mxu0 0.0
    %2933 = vmatprep.subr.mxu0 0.0
    %2934 = vmatpush1.msra.mxu0 0.0
    %2935 = vmatprep.subr.mxu0 0.0
    %2936 = vmatpush1.msra.mxu0 0.0
    %2937 = vmatprep.subr.mxu0 0.0
    %2938 = vmatpush1.msra.mxu0 0.0
    %2939 = vmatprep.subr.mxu0 0.0
    %2940 = vmatpush1.msra.mxu0 0.0
    %2941 = vmatprep.subr.mxu0 0.0
    %2942 = vmatpush1.msra.mxu0 0.0
    %2943 = vmatprep.subr.mxu0 0.0
    %2944 = vmatpush1.msra.mxu0 0.0
    %2945 = vmatprep.subr.mxu0 0.0
    %2946 = vmatpush1.msra.mxu0 0.0
    %2947 = vmatprep.subr.mxu0 0.0
    %2948 = vmatpush1.msra.mxu0 0.0
    %2949 = vmatprep.subr.mxu0 0.0
    %2950 = vmatpush1.msra.mxu0 0.0
    %2951 = vmatprep.subr.mxu0 0.0
    %v2952 = vand.u32 %v2827, 4294901760
    %v2953 = vsub.f32 %v2827, %v2952
    %v2954 = vand.u32 %v2953, 4294901760
    %v2955 = vsub.f32 %v2953, %v2954
    %v2956 = vand.u32 %v2955, 4294901760
    %2957 = vmatpush1.msra.mxu0 %v2956
    %2958 = vmatprep.subr.mxu0 0.0
    %v2959 = vand.u32 %v2825, 4294901760
    %v2960 = vsub.f32 %v2825, %v2959
    %v2961 = vand.u32 %v2960, 4294901760
    %v2962 = vsub.f32 %v2960, %v2961
    %v2963 = vand.u32 %v2962, 4294901760
    %2964 = vmatpush1.msra.mxu0 %v2963
    %2965 = vmatprep.subr.mxu0 0.0
    %2966 = vmatpush2.msra.mxu0 0.0
    %2967 = vmatprep.subr.mxu0 0.0
    %2968 = vmatpush2.msra.mxu0 0.0
    %2969 = vmatprep.subr.mxu0 0.0
    %2970 = vmatpush2.msra.mxu0 0.0
    %2971 = vmatprep.subr.mxu0 0.0
    %2972 = vmatpush2.msra.mxu0 0.0
    %2973 = vmatprep.subr.mxu0 0.0
    %2974 = vmatpush2.msra.mxu0 0.0
    %2975 = vmatprep.subr.mxu0 0.0
    %2976 = vmatpush2.msra.mxu0 0.0
    %2977 = vmatprep.subr.mxu0 0.0
    %2978 = vmatpush2.msra.mxu0 0.0
    %2979 = vmatprep.subr.mxu0 0.0
    %2980 = vmatpush2.msra.mxu0 0.0
    %2981 = vmatprep.subr.mxu0 0.0
    %2982 = vmatpush2.msra.mxu0 0.0
    %2983 = vmatprep.subr.mxu0 0.0
    %2984 = vmatpush2.msra.mxu0 0.0
    %2985 = vmatprep.subr.mxu0 0.0
    %2986 = vmatpush2.msra.mxu0 0.0
    %2987 = vmatprep.subr.mxu0 0.0
    %2988 = vmatpush2.msra.mxu0 0.0
    %2989 = vmatprep.subr.mxu0 0.0
    %2990 = vmatpush2.msra.mxu0 0.0
    %2991 = vmatprep.subr.mxu0 0.0
    %2992 = vmatpush2.msra.mxu0 0.0
    %2993 = vmatprep.subr.mxu0 0.0
    %2994 = vmatpush2.msra.mxu0 0.0
    %2995 = vmatprep.subr.mxu0 0.0
    %2996 = vmatpush2.msra.mxu0 0.0
    %2997 = vmatprep.mubr.f32.mxu0 0.0
    %v2998 = vand.u32 %v2831, 4294901760
    %2999 = vmatmul.mubr.f32.gmra.mxu0 %v2998
    %v3000 = vpop.f32.mrf.mxu0
    %v3001 = vadd.f32 %v2910, %v3000
    %v3002 = vpop.f32.mrf.mxu0
    %3003 = vmatprep.mubr.f32.mxu0 0.0
    %v3004 = vand.u32 %v2834, 4294901760
    %3005 = vmatmul.mubr.f32.gmra.mxu0 %v3004
    %v3006 = vpop.f32.mrf.mxu0
    %v3007 = vadd.f32 %v2920, %v3006
    %v3008 = vpop.f32.mrf.mxu0
    %3009 = vdwg.mxu0
    %3010 = vmatprep.subr.mxu0 0.0
    %3011 = vmatpush1.msra.mxu0 0.0
    %3012 = vmatprep.subr.mxu0 0.0
    %3013 = vmatpush1.msra.mxu0 0.0
    %3014 = vmatprep.subr.mxu0 0.0
    %3015 = vmatpush1.msra.mxu0 0.0
    %3016 = vmatprep.subr.mxu0 0.0
    %3017 = vmatpush1.msra.mxu0 0.0
    %3018 = vmatprep.subr.mxu0 0.0
    %3019 = vmatpush1.msra.mxu0 0.0
    %3020 = vmatprep.subr.mxu0 0.0
    %3021 = vmatpush1.msra.mxu0 0.0
    %3022 = vmatprep.subr.mxu0 0.0
    %3023 = vmatpush1.msra.mxu0 0.0
    %3024 = vmatprep.subr.mxu0 0.0
    %3025 = vmatpush1.msra.mxu0 0.0
    %3026 = vmatprep.subr.mxu0 0.0
    %3027 = vmatpush1.msra.mxu0 0.0
    %3028 = vmatprep.subr.mxu0 0.0
    %3029 = vmatpush1.msra.mxu0 0.0
    %3030 = vmatprep.subr.mxu0 0.0
    %3031 = vmatpush1.msra.mxu0 0.0
    %3032 = vmatprep.subr.mxu0 0.0
    %3033 = vmatpush1.msra.mxu0 0.0
    %3034 = vmatprep.subr.mxu0 0.0
    %3035 = vmatpush1.msra.mxu0 0.0
    %3036 = vmatprep.subr.mxu0 0.0
    %3037 = vmatpush1.msra.mxu0 0.0
    %3038 = vmatprep.subr.mxu0 0.0
    %v3039 = vand.u32 %v2827, 4294901760
    %v3040 = vsub.f32 %v2827, %v3039
    %3041 = vmatpush1.msra.mxu0 %v3040
    %3042 = vmatprep.subr.mxu0 0.0
    %v3043 = vand.u32 %v2825, 4294901760
    %v3044 = vsub.f32 %v2825, %v3043
    %3045 = vmatpush1.msra.mxu0 %v3044
    %3046 = vmatprep.subr.mxu0 0.0
    %3047 = vmatpush2.msra.mxu0 0.0
    %3048 = vmatprep.subr.mxu0 0.0
    %3049 = vmatpush2.msra.mxu0 0.0
    %3050 = vmatprep.subr.mxu0 0.0
    %3051 = vmatpush2.msra.mxu0 0.0
    %3052 = vmatprep.subr.mxu0 0.0
    %3053 = vmatpush2.msra.mxu0 0.0
    %3054 = vmatprep.subr.mxu0 0.0
    %3055 = vmatpush2.msra.mxu0 0.0
    %3056 = vmatprep.subr.mxu0 0.0
    %3057 = vmatpush2.msra.mxu0 0.0
    %3058 = vmatprep.subr.mxu0 0.0
    %3059 = vmatpush2.msra.mxu0 0.0
    %3060 = vmatprep.subr.mxu0 0.0
    %3061 = vmatpush2.msra.mxu0 0.0
    %3062 = vmatprep.subr.mxu0 0.0
    %3063 = vmatpush2.msra.mxu0 0.0
    %3064 = vmatprep.subr.mxu0 0.0
    %3065 = vmatpush2.msra.mxu0 0.0
    %3066 = vmatprep.subr.mxu0 0.0
    %3067 = vmatpush2.msra.mxu0 0.0
    %3068 = vmatprep.subr.mxu0 0.0
    %3069 = vmatpush2.msra.mxu0 0.0
    %3070 = vmatprep.subr.mxu0 0.0
    %3071 = vmatpush2.msra.mxu0 0.0
    %3072 = vmatprep.subr.mxu0 0.0
    %3073 = vmatpush2.msra.mxu0 0.0
    %3074 = vmatprep.subr.mxu0 0.0
    %3075 = vmatpush2.msra.mxu0 0.0
    %3076 = vmatprep.subr.mxu0 0.0
    %3077 = vmatpush2.msra.mxu0 0.0
    %3078 = vmatprep.mubr.f32.mxu0 0.0
    %v3079 = vand.u32 %v2831, 4294901760
    %v3080 = vsub.f32 %v2831, %v3079
    %3081 = vmatmul.mubr.f32.gmra.mxu0 %v3080
    %v3082 = vpop.f32.mrf.mxu0
    %v3083 = vadd.f32 %v3001, %v3082
    %v3084 = vpop.f32.mrf.mxu0
    %3085 = vmatprep.mubr.f32.mxu0 0.0
    %v3086 = vand.u32 %v2834, 4294901760
    %v3087 = vsub.f32 %v2834, %v3086
    %3088 = vmatmul.mubr.f32.gmra.mxu0 %v3087
    %v3089 = vpop.f32.mrf.mxu0
    %v3090 = vadd.f32 %v3007, %v3089
    %v3091 = vpop.f32.mrf.mxu0
    %3092 = vdwg.mxu0
    %3093 = vmatprep.subr.mxu0 0.0
    %3094 = vmatpush1.msra.mxu0 0.0
    %3095 = vmatprep.subr.mxu0 0.0
    %3096 = vmatpush1.msra.mxu0 0.0
    %3097 = vmatprep.subr.mxu0 0.0
    %3098 = vmatpush1.msra.mxu0 0.0
    %3099 = vmatprep.subr.mxu0 0.0
    %3100 = vmatpush1.msra.mxu0 0.0
    %3101 = vmatprep.subr.mxu0 0.0
    %3102 = vmatpush1.msra.mxu0 0.0
    %3103 = vmatprep.subr.mxu0 0.0
    %3104 = vmatpush1.msra.mxu0 0.0
    %3105 = vmatprep.subr.mxu0 0.0
    %3106 = vmatpush1.msra.mxu0 0.0
    %3107 = vmatprep.subr.mxu0 0.0
    %3108 = vmatpush1.msra.mxu0 0.0
    %3109 = vmatprep.subr.mxu0 0.0
    %3110 = vmatpush1.msra.mxu0 0.0
    %3111 = vmatprep.subr.mxu0 0.0
    %3112 = vmatpush1.msra.mxu0 0.0
    %3113 = vmatprep.subr.mxu0 0.0
    %3114 = vmatpush1.msra.mxu0 0.0
    %3115 = vmatprep.subr.mxu0 0.0
    %3116 = vmatpush1.msra.mxu0 0.0
    %3117 = vmatprep.subr.mxu0 0.0
    %3118 = vmatpush1.msra.mxu0 0.0
    %3119 = vmatprep.subr.mxu0 0.0
    %3120 = vmatpush1.msra.mxu0 0.0
    %3121 = vmatprep.subr.mxu0 0.0
    %v3122 = vand.u32 %v2827, 4294901760
    %3123 = vmatpush1.msra.mxu0 %v3122
    %3124 = vmatprep.subr.mxu0 0.0
    %v3125 = vand.u32 %v2825, 4294901760
    %3126 = vmatpush1.msra.mxu0 %v3125
    %3127 = vmatprep.subr.mxu0 0.0
    %3128 = vmatpush2.msra.mxu0 0.0
    %3129 = vmatprep.subr.mxu0 0.0
    %3130 = vmatpush2.msra.mxu0 0.0
    %3131 = vmatprep.subr.mxu0 0.0
    %3132 = vmatpush2.msra.mxu0 0.0
    %3133 = vmatprep.subr.mxu0 0.0
    %3134 = vmatpush2.msra.mxu0 0.0
    %3135 = vmatprep.subr.mxu0 0.0
    %3136 = vmatpush2.msra.mxu0 0.0
    %3137 = vmatprep.subr.mxu0 0.0
    %3138 = vmatpush2.msra.mxu0 0.0
    %3139 = vmatprep.subr.mxu0 0.0
    %3140 = vmatpush2.msra.mxu0 0.0
    %3141 = vmatprep.subr.mxu0 0.0
    %3142 = vmatpush2.msra.mxu0 0.0
    %3143 = vmatprep.subr.mxu0 0.0
    %3144 = vmatpush2.msra.mxu0 0.0
    %3145 = vmatprep.subr.mxu0 0.0
    %3146 = vmatpush2.msra.mxu0 0.0
    %3147 = vmatprep.subr.mxu0 0.0
    %3148 = vmatpush2.msra.mxu0 0.0
    %3149 = vmatprep.subr.mxu0 0.0
    %3150 = vmatpush2.msra.mxu0 0.0
    %3151 = vmatprep.subr.mxu0 0.0
    %3152 = vmatpush2.msra.mxu0 0.0
    %3153 = vmatprep.subr.mxu0 0.0
    %3154 = vmatpush2.msra.mxu0 0.0
    %3155 = vmatprep.subr.mxu0 0.0
    %3156 = vmatpush2.msra.mxu0 0.0
    %3157 = vmatprep.subr.mxu0 0.0
    %3158 = vmatpush2.msra.mxu0 0.0
    %3159 = vmatprep.mubr.f32.mxu0 0.0
    %v3160 = vand.u32 %v2831, 4294901760
    %v3161 = vsub.f32 %v2831, %v3160
    %v3162 = vand.u32 %v3161, 4294901760
    %3163 = vmatmul.mubr.f32.gmra.mxu0 %v3162
    %v3164 = vpop.f32.mrf.mxu0
    %v3165 = vadd.f32 %v3083, %v3164
    %v3166 = vpop.f32.mrf.mxu0
    %3167 = vmatprep.mubr.f32.mxu0 0.0
    %v3168 = vand.u32 %v2834, 4294901760
    %v3169 = vsub.f32 %v2834, %v3168
    %v3170 = vand.u32 %v3169, 4294901760
    %3171 = vmatmul.mubr.f32.gmra.mxu0 %v3170
    %v3172 = vpop.f32.mrf.mxu0
    %v3173 = vadd.f32 %v3090, %v3172
    %v3174 = vpop.f32.mrf.mxu0
    %3175 = vdwg.mxu0
    %3176 = vmatprep.subr.mxu0 0.0
    %3177 = vmatpush1.msra.mxu0 0.0
    %3178 = vmatprep.subr.mxu0 0.0
    %3179 = vmatpush1.msra.mxu0 0.0
    %3180 = vmatprep.subr.mxu0 0.0
    %3181 = vmatpush1.msra.mxu0 0.0
    %3182 = vmatprep.subr.mxu0 0.0
    %3183 = vmatpush1.msra.mxu0 0.0
    %3184 = vmatprep.subr.mxu0 0.0
    %3185 = vmatpush1.msra.mxu0 0.0
    %3186 = vmatprep.subr.mxu0 0.0
    %3187 = vmatpush1.msra.mxu0 0.0
    %3188 = vmatprep.subr.mxu0 0.0
    %3189 = vmatpush1.msra.mxu0 0.0
    %3190 = vmatprep.subr.mxu0 0.0
    %3191 = vmatpush1.msra.mxu0 0.0
    %3192 = vmatprep.subr.mxu0 0.0
    %3193 = vmatpush1.msra.mxu0 0.0
    %3194 = vmatprep.subr.mxu0 0.0
    %3195 = vmatpush1.msra.mxu0 0.0
    %3196 = vmatprep.subr.mxu0 0.0
    %3197 = vmatpush1.msra.mxu0 0.0
    %3198 = vmatprep.subr.mxu0 0.0
    %3199 = vmatpush1.msra.mxu0 0.0
    %3200 = vmatprep.subr.mxu0 0.0
    %3201 = vmatpush1.msra.mxu0 0.0
    %3202 = vmatprep.subr.mxu0 0.0
    %3203 = vmatpush1.msra.mxu0 0.0
    %3204 = vmatprep.subr.mxu0 0.0
    %v3205 = vand.u32 %v2827, 4294901760
    %v3206 = vsub.f32 %v2827, %v3205
    %v3207 = vand.u32 %v3206, 4294901760
    %3208 = vmatpush1.msra.mxu0 %v3207
    %3209 = vmatprep.subr.mxu0 0.0
    %v3210 = vand.u32 %v2825, 4294901760
    %v3211 = vsub.f32 %v2825, %v3210
    %v3212 = vand.u32 %v3211, 4294901760
    %3213 = vmatpush1.msra.mxu0 %v3212
    %3214 = vmatprep.subr.mxu0 0.0
    %3215 = vmatpush2.msra.mxu0 0.0
    %3216 = vmatprep.subr.mxu0 0.0
    %3217 = vmatpush2.msra.mxu0 0.0
    %3218 = vmatprep.subr.mxu0 0.0
    %3219 = vmatpush2.msra.mxu0 0.0
    %3220 = vmatprep.subr.mxu0 0.0
    %3221 = vmatpush2.msra.mxu0 0.0
    %3222 = vmatprep.subr.mxu0 0.0
    %3223 = vmatpush2.msra.mxu0 0.0
    %3224 = vmatprep.subr.mxu0 0.0
    %3225 = vmatpush2.msra.mxu0 0.0
    %3226 = vmatprep.subr.mxu0 0.0
    %3227 = vmatpush2.msra.mxu0 0.0
    %3228 = vmatprep.subr.mxu0 0.0
    %3229 = vmatpush2.msra.mxu0 0.0
    %3230 = vmatprep.subr.mxu0 0.0
    %3231 = vmatpush2.msra.mxu0 0.0
    %3232 = vmatprep.subr.mxu0 0.0
    %3233 = vmatpush2.msra.mxu0 0.0
    %3234 = vmatprep.subr.mxu0 0.0
    %3235 = vmatpush2.msra.mxu0 0.0
    %3236 = vmatprep.subr.mxu0 0.0
    %3237 = vmatpush2.msra.mxu0 0.0
    %3238 = vmatprep.subr.mxu0 0.0
    %3239 = vmatpush2.msra.mxu0 0.0
    %3240 = vmatprep.subr.mxu0 0.0
    %3241 = vmatpush2.msra.mxu0 0.0
    %3242 = vmatprep.subr.mxu0 0.0
    %3243 = vmatpush2.msra.mxu0 0.0
    %3244 = vmatprep.subr.mxu0 0.0
    %3245 = vmatpush2.msra.mxu0 0.0
    %3246 = vmatprep.mubr.f32.mxu0 0.0
    %v3247 = vand.u32 %v2831, 4294901760
    %3248 = vmatmul.mubr.f32.gmra.mxu0 %v3247
    %v3249 = vpop.f32.mrf.mxu0
    %v3250 = vadd.f32 %v3165, %v3249
    %v3251 = vpop.f32.mrf.mxu0
    %3252 = vmatprep.mubr.f32.mxu0 0.0
    %v3253 = vand.u32 %v2834, 4294901760
    %3254 = vmatmul.mubr.f32.gmra.mxu0 %v3253
    %v3255 = vpop.f32.mrf.mxu0
    %v3256 = vadd.f32 %v3173, %v3255
    %v3257 = vpop.f32.mrf.mxu0
    %3258 = vdwg.mxu0
    %3259 = vmatprep.subr.mxu0 0.0
    %3260 = vmatpush1.msra.mxu0 0.0
    %3261 = vmatprep.subr.mxu0 0.0
    %3262 = vmatpush1.msra.mxu0 0.0
    %3263 = vmatprep.subr.mxu0 0.0
    %3264 = vmatpush1.msra.mxu0 0.0
    %3265 = vmatprep.subr.mxu0 0.0
    %3266 = vmatpush1.msra.mxu0 0.0
    %3267 = vmatprep.subr.mxu0 0.0
    %3268 = vmatpush1.msra.mxu0 0.0
    %3269 = vmatprep.subr.mxu0 0.0
    %3270 = vmatpush1.msra.mxu0 0.0
    %3271 = vmatprep.subr.mxu0 0.0
    %3272 = vmatpush1.msra.mxu0 0.0
    %3273 = vmatprep.subr.mxu0 0.0
    %3274 = vmatpush1.msra.mxu0 0.0
    %3275 = vmatprep.subr.mxu0 0.0
    %3276 = vmatpush1.msra.mxu0 0.0
    %3277 = vmatprep.subr.mxu0 0.0
    %3278 = vmatpush1.msra.mxu0 0.0
    %3279 = vmatprep.subr.mxu0 0.0
    %3280 = vmatpush1.msra.mxu0 0.0
    %3281 = vmatprep.subr.mxu0 0.0
    %3282 = vmatpush1.msra.mxu0 0.0
    %3283 = vmatprep.subr.mxu0 0.0
    %3284 = vmatpush1.msra.mxu0 0.0
    %3285 = vmatprep.subr.mxu0 0.0
    %3286 = vmatpush1.msra.mxu0 0.0
    %3287 = vmatprep.subr.mxu0 0.0
    %v3288 = vand.u32 %v2827, 4294901760
    %3289 = vmatpush1.msra.mxu0 %v3288
    %3290 = vmatprep.subr.mxu0 0.0
    %v3291 = vand.u32 %v2825, 4294901760
    %3292 = vmatpush1.msra.mxu0 %v3291
    %3293 = vmatprep.subr.mxu0 0.0
    %3294 = vmatpush2.msra.mxu0 0.0
    %3295 = vmatprep.subr.mxu0 0.0
    %3296 = vmatpush2.msra.mxu0 0.0
    %3297 = vmatprep.subr.mxu0 0.0
    %3298 = vmatpush2.msra.mxu0 0.0
    %3299 = vmatprep.subr.mxu0 0.0
    %3300 = vmatpush2.msra.mxu0 0.0
    %3301 = vmatprep.subr.mxu0 0.0
    %3302 = vmatpush2.msra.mxu0 0.0
    %3303 = vmatprep.subr.mxu0 0.0
    %3304 = vmatpush2.msra.mxu0 0.0
    %3305 = vmatprep.subr.mxu0 0.0
    %3306 = vmatpush2.msra.mxu0 0.0
    %3307 = vmatprep.subr.mxu0 0.0
    %3308 = vmatpush2.msra.mxu0 0.0
    %3309 = vmatprep.subr.mxu0 0.0
    %3310 = vmatpush2.msra.mxu0 0.0
    %3311 = vmatprep.subr.mxu0 0.0
    %3312 = vmatpush2.msra.mxu0 0.0
    %3313 = vmatprep.subr.mxu0 0.0
    %3314 = vmatpush2.msra.mxu0 0.0
    %3315 = vmatprep.subr.mxu0 0.0
    %3316 = vmatpush2.msra.mxu0 0.0
    %3317 = vmatprep.subr.mxu0 0.0
    %3318 = vmatpush2.msra.mxu0 0.0
    %3319 = vmatprep.subr.mxu0 0.0
    %3320 = vmatpush2.msra.mxu0 0.0
    %3321 = vmatprep.subr.mxu0 0.0
    %3322 = vmatpush2.msra.mxu0 0.0
    %3323 = vmatprep.subr.mxu0 0.0
    %3324 = vmatpush2.msra.mxu0 0.0
    %3325 = vmatprep.mubr.f32.mxu0 0.0
    %v3326 = vand.u32 %v2831, 4294901760
    %3327 = vmatmul.mubr.f32.gmra.mxu0 %v3326
    %v3328 = vpop.f32.mrf.mxu0
    %v3329 = vadd.f32 %v3250, %v3328
    %v3330 = vpop.f32.mrf.mxu0
    %3331 = vmatprep.mubr.f32.mxu0 0.0
    %v3332 = vand.u32 %v2834, 4294901760
    %3333 = vmatmul.mubr.f32.gmra.mxu0 %v3332
    %v3334 = vpop.f32.mrf.mxu0
    %v3335 = vadd.f32 %v3256, %v3334
    %v3336 = vpop.f32.mrf.mxu0
    %3337 = vdwg.mxu0
    %3338 = vrot.lane.b32.xlu0 %v621, 112
    %v3339 = vpop.permute.xlu0 %3338
    %3340 = vrot.lane.b32.xlu0 %v622, 112
    %v3341 = vpop.permute.xlu0 %3340
    %3342 = vrot.lane.b32.xlu0 %v631, 80
    %v3343 = vpop.permute.xlu0 %3342
    %3344 = vrot.lane.b32.xlu0 %v632, 80
    %v3345 = vpop.permute.xlu0 %3344
    %v3346 = vsel %vm1238, %v3339, 0
    %v3348 = vsel %vm1238, %v3341, 0
    %v3350 = vsel %vm1238, %v3343, 0
    %v3352 = vsel %vm1238, %v3345, 0
    %3354 = vmatprep.subr.mxu0 0.0
    %3355 = vmatpush1.xpose.msra.mxu0 0.0
    %3356 = vmatprep.subr.mxu0 0.0
    %3357 = vmatpush1.xpose.msra.mxu0 0.0
    %3358 = vmatprep.subr.mxu0 0.0
    %3359 = vmatpush1.xpose.msra.mxu0 0.0
    %3360 = vmatprep.subr.mxu0 0.0
    %3361 = vmatpush1.xpose.msra.mxu0 0.0
    %3362 = vmatprep.subr.mxu0 0.0
    %3363 = vmatpush1.xpose.msra.mxu0 0.0
    %3364 = vmatprep.subr.mxu0 0.0
    %3365 = vmatpush1.xpose.msra.mxu0 0.0
    %3366 = vmatprep.subr.mxu0 0.0
    %3367 = vmatpush1.xpose.msra.mxu0 0.0
    %3368 = vmatprep.subr.mxu0 0.0
    %3369 = vmatpush1.xpose.msra.mxu0 0.0
    %3370 = vmatprep.subr.mxu0 0.0
    %3371 = vmatpush1.xpose.msra.mxu0 0.0
    %3372 = vmatprep.subr.mxu0 0.0
    %3373 = vmatpush1.xpose.msra.mxu0 0.0
    %3374 = vmatprep.subr.mxu0 0.0
    %3375 = vmatpush1.xpose.msra.mxu0 0.0
    %3376 = vmatprep.subr.mxu0 0.0
    %3377 = vmatpush1.xpose.msra.mxu0 0.0
    %3378 = vmatprep.subr.mxu0 0.0
    %3379 = vmatpush1.xpose.msra.mxu0 0.0
    %3380 = vmatprep.subr.mxu0 0.0
    %3381 = vmatpush1.xpose.msra.mxu0 0.0
    %3382 = vmatprep.subr.mxu0 0.0
    %v3383 = vand.u32 %v3352, 4294901760
    %3384 = vmatpush1.xpose.msra.mxu0 %v3383
    %3385 = vmatprep.subr.mxu0 0.0
    %v3386 = vand.u32 %v3350, 4294901760
    %3387 = vmatpush1.xpose.msra.mxu0 %v3386
    %3388 = vmatprep.subr.mxu0 0.0
    %3389 = vmatpush2.xpose.msra.mxu0 0.0
    %3390 = vmatprep.subr.mxu0 0.0
    %3391 = vmatpush2.xpose.msra.mxu0 0.0
    %3392 = vmatprep.subr.mxu0 0.0
    %3393 = vmatpush2.xpose.msra.mxu0 0.0
    %3394 = vmatprep.subr.mxu0 0.0
    %3395 = vmatpush2.xpose.msra.mxu0 0.0
    %3396 = vmatprep.subr.mxu0 0.0
    %3397 = vmatpush2.xpose.msra.mxu0 0.0
    %3398 = vmatprep.subr.mxu0 0.0
    %3399 = vmatpush2.xpose.msra.mxu0 0.0
    %3400 = vmatprep.subr.mxu0 0.0
    %3401 = vmatpush2.xpose.msra.mxu0 0.0
    %3402 = vmatprep.subr.mxu0 0.0
    %3403 = vmatpush2.xpose.msra.mxu0 0.0
    %3404 = vmatprep.subr.mxu0 0.0
    %3405 = vmatpush2.xpose.msra.mxu0 0.0
    %3406 = vmatprep.subr.mxu0 0.0
    %3407 = vmatpush2.xpose.msra.mxu0 0.0
    %3408 = vmatprep.subr.mxu0 0.0
    %3409 = vmatpush2.xpose.msra.mxu0 0.0
    %3410 = vmatprep.subr.mxu0 0.0
    %3411 = vmatpush2.xpose.msra.mxu0 0.0
    %3412 = vmatprep.subr.mxu0 0.0
    %3413 = vmatpush2.xpose.msra.mxu0 0.0
    %3414 = vmatprep.subr.mxu0 0.0
    %3415 = vmatpush2.xpose.msra.mxu0 0.0
    %3416 = vmatprep.subr.mxu0 0.0
    %3417 = vmatpush2.xpose.msra.mxu0 0.0
    %3418 = vmatprep.subr.mxu0 0.0
    %3419 = vmatpush2.xpose.msra.mxu0 0.0
    %3420 = vmatprep.mubr.f32.mxu0 0.0
    %v3421 = vand.u32 %v3346, 4294901760
    %v3422 = vsub.f32 %v3346, %v3421
    %v3423 = vand.u32 %v3422, 4294901760
    %v3424 = vsub.f32 %v3422, %v3423
    %v3425 = vand.u32 %v3424, 4294901760
    %3426 = vmatmul.mubr.f32.gmra.mxu0 %v3425
    %v3427 = vpop.f32.mrf.mxu0
    %v3428 = vadd.f32 %v1230, %v3427
    %v3429 = vpop.f32.mrf.mxu0
    %3430 = vmatprep.mubr.f32.mxu0 0.0
    %v3431 = vand.u32 %v3348, 4294901760
    %v3432 = vsub.f32 %v3348, %v3431
    %v3433 = vand.u32 %v3432, 4294901760
    %v3434 = vsub.f32 %v3432, %v3433
    %v3435 = vand.u32 %v3434, 4294901760
    %3436 = vmatmul.mubr.f32.gmra.mxu0 %v3435
    %v3437 = vpop.f32.mrf.mxu0
    %v3438 = vadd.f32 %v1231, %v3437
    %v3439 = vpop.f32.mrf.mxu0
    %3440 = vdwg.mxu0
    %3441 = vmatprep.subr.mxu0 0.0
    %3442 = vmatpush1.xpose.msra.mxu0 0.0
    %3443 = vmatprep.subr.mxu0 0.0
    %3444 = vmatpush1.xpose.msra.mxu0 0.0
    %3445 = vmatprep.subr.mxu0 0.0
    %3446 = vmatpush1.xpose.msra.mxu0 0.0
    %3447 = vmatprep.subr.mxu0 0.0
    %3448 = vmatpush1.xpose.msra.mxu0 0.0
    %3449 = vmatprep.subr.mxu0 0.0
    %3450 = vmatpush1.xpose.msra.mxu0 0.0
    %3451 = vmatprep.subr.mxu0 0.0
    %3452 = vmatpush1.xpose.msra.mxu0 0.0
    %3453 = vmatprep.subr.mxu0 0.0
    %3454 = vmatpush1.xpose.msra.mxu0 0.0
    %3455 = vmatprep.subr.mxu0 0.0
    %3456 = vmatpush1.xpose.msra.mxu0 0.0
    %3457 = vmatprep.subr.mxu0 0.0
    %3458 = vmatpush1.xpose.msra.mxu0 0.0
    %3459 = vmatprep.subr.mxu0 0.0
    %3460 = vmatpush1.xpose.msra.mxu0 0.0
    %3461 = vmatprep.subr.mxu0 0.0
    %3462 = vmatpush1.xpose.msra.mxu0 0.0
    %3463 = vmatprep.subr.mxu0 0.0
    %3464 = vmatpush1.xpose.msra.mxu0 0.0
    %3465 = vmatprep.subr.mxu0 0.0
    %3466 = vmatpush1.xpose.msra.mxu0 0.0
    %3467 = vmatprep.subr.mxu0 0.0
    %3468 = vmatpush1.xpose.msra.mxu0 0.0
    %3469 = vmatprep.subr.mxu0 0.0
    %v3470 = vand.u32 %v3352, 4294901760
    %v3471 = vsub.f32 %v3352, %v3470
    %v3472 = vand.u32 %v3471, 4294901760
    %v3473 = vsub.f32 %v3471, %v3472
    %v3474 = vand.u32 %v3473, 4294901760
    %3475 = vmatpush1.xpose.msra.mxu0 %v3474
    %3476 = vmatprep.subr.mxu0 0.0
    %v3477 = vand.u32 %v3350, 4294901760
    %v3478 = vsub.f32 %v3350, %v3477
    %v3479 = vand.u32 %v3478, 4294901760
    %v3480 = vsub.f32 %v3478, %v3479
    %v3481 = vand.u32 %v3480, 4294901760
    %3482 = vmatpush1.xpose.msra.mxu0 %v3481
    %3483 = vmatprep.subr.mxu0 0.0
    %3484 = vmatpush2.xpose.msra.mxu0 0.0
    %3485 = vmatprep.subr.mxu0 0.0
    %3486 = vmatpush2.xpose.msra.mxu0 0.0
    %3487 = vmatprep.subr.mxu0 0.0
    %3488 = vmatpush2.xpose.msra.mxu0 0.0
    %3489 = vmatprep.subr.mxu0 0.0
    %3490 = vmatpush2.xpose.msra.mxu0 0.0
    %3491 = vmatprep.subr.mxu0 0.0
    %3492 = vmatpush2.xpose.msra.mxu0 0.0
    %3493 = vmatprep.subr.mxu0 0.0
    %3494 = vmatpush2.xpose.msra.mxu0 0.0
    %3495 = vmatprep.subr.mxu0 0.0
    %3496 = vmatpush2.xpose.msra.mxu0 0.0
    %3497 = vmatprep.subr.mxu0 0.0
    %3498 = vmatpush2.xpose.msra.mxu0 0.0
    %3499 = vmatprep.subr.mxu0 0.0
    %3500 = vmatpush2.xpose.msra.mxu0 0.0
    %3501 = vmatprep.subr.mxu0 0.0
    %3502 = vmatpush2.xpose.msra.mxu0 0.0
    %3503 = vmatprep.subr.mxu0 0.0
    %3504 = vmatpush2.xpose.msra.mxu0 0.0
    %3505 = vmatprep.subr.mxu0 0.0
    %3506 = vmatpush2.xpose.msra.mxu0 0.0
    %3507 = vmatprep.subr.mxu0 0.0
    %3508 = vmatpush2.xpose.msra.mxu0 0.0
    %3509 = vmatprep.subr.mxu0 0.0
    %3510 = vmatpush2.xpose.msra.mxu0 0.0
    %3511 = vmatprep.subr.mxu0 0.0
    %3512 = vmatpush2.xpose.msra.mxu0 0.0
    %3513 = vmatprep.subr.mxu0 0.0
    %3514 = vmatpush2.xpose.msra.mxu0 0.0
    %3515 = vmatprep.mubr.f32.mxu0 0.0
    %v3516 = vand.u32 %v3346, 4294901760
    %3517 = vmatmul.mubr.f32.gmra.mxu0 %v3516
    %v3518 = vpop.f32.mrf.mxu0
    %v3519 = vadd.f32 %v3428, %v3518
    %v3520 = vpop.f32.mrf.mxu0
    %3521 = vmatprep.mubr.f32.mxu0 0.0
    %v3522 = vand.u32 %v3348, 4294901760
    %3523 = vmatmul.mubr.f32.gmra.mxu0 %v3522
    %v3524 = vpop.f32.mrf.mxu0
    %v3525 = vadd.f32 %v3438, %v3524
    %v3526 = vpop.f32.mrf.mxu0
    %3527 = vdwg.mxu0
    %3528 = vmatprep.subr.mxu0 0.0
    %3529 = vmatpush1.xpose.msra.mxu0 0.0
    %3530 = vmatprep.subr.mxu0 0.0
    %3531 = vmatpush1.xpose.msra.mxu0 0.0
    %3532 = vmatprep.subr.mxu0 0.0
    %3533 = vmatpush1.xpose.msra.mxu0 0.0
    %3534 = vmatprep.subr.mxu0 0.0
    %3535 = vmatpush1.xpose.msra.mxu0 0.0
    %3536 = vmatprep.subr.mxu0 0.0
    %3537 = vmatpush1.xpose.msra.mxu0 0.0
    %3538 = vmatprep.subr.mxu0 0.0
    %3539 = vmatpush1.xpose.msra.mxu0 0.0
    %3540 = vmatprep.subr.mxu0 0.0
    %3541 = vmatpush1.xpose.msra.mxu0 0.0
    %3542 = vmatprep.subr.mxu0 0.0
    %3543 = vmatpush1.xpose.msra.mxu0 0.0
    %3544 = vmatprep.subr.mxu0 0.0
    %3545 = vmatpush1.xpose.msra.mxu0 0.0
    %3546 = vmatprep.subr.mxu0 0.0
    %3547 = vmatpush1.xpose.msra.mxu0 0.0
    %3548 = vmatprep.subr.mxu0 0.0
    %3549 = vmatpush1.xpose.msra.mxu0 0.0
    %3550 = vmatprep.subr.mxu0 0.0
    %3551 = vmatpush1.xpose.msra.mxu0 0.0
    %3552 = vmatprep.subr.mxu0 0.0
    %3553 = vmatpush1.xpose.msra.mxu0 0.0
    %3554 = vmatprep.subr.mxu0 0.0
    %3555 = vmatpush1.xpose.msra.mxu0 0.0
    %3556 = vmatprep.subr.mxu0 0.0
    %v3557 = vand.u32 %v3352, 4294901760
    %v3558 = vsub.f32 %v3352, %v3557
    %3559 = vmatpush1.xpose.msra.mxu0 %v3558
    %3560 = vmatprep.subr.mxu0 0.0
    %v3561 = vand.u32 %v3350, 4294901760
    %v3562 = vsub.f32 %v3350, %v3561
    %3563 = vmatpush1.xpose.msra.mxu0 %v3562
    %3564 = vmatprep.subr.mxu0 0.0
    %3565 = vmatpush2.xpose.msra.mxu0 0.0
    %3566 = vmatprep.subr.mxu0 0.0
    %3567 = vmatpush2.xpose.msra.mxu0 0.0
    %3568 = vmatprep.subr.mxu0 0.0
    %3569 = vmatpush2.xpose.msra.mxu0 0.0
    %3570 = vmatprep.subr.mxu0 0.0
    %3571 = vmatpush2.xpose.msra.mxu0 0.0
    %3572 = vmatprep.subr.mxu0 0.0
    %3573 = vmatpush2.xpose.msra.mxu0 0.0
    %3574 = vmatprep.subr.mxu0 0.0
    %3575 = vmatpush2.xpose.msra.mxu0 0.0
    %3576 = vmatprep.subr.mxu0 0.0
    %3577 = vmatpush2.xpose.msra.mxu0 0.0
    %3578 = vmatprep.subr.mxu0 0.0
    %3579 = vmatpush2.xpose.msra.mxu0 0.0
    %3580 = vmatprep.subr.mxu0 0.0
    %3581 = vmatpush2.xpose.msra.mxu0 0.0
    %3582 = vmatprep.subr.mxu0 0.0
    %3583 = vmatpush2.xpose.msra.mxu0 0.0
    %3584 = vmatprep.subr.mxu0 0.0
    %3585 = vmatpush2.xpose.msra.mxu0 0.0
    %3586 = vmatprep.subr.mxu0 0.0
    %3587 = vmatpush2.xpose.msra.mxu0 0.0
    %3588 = vmatprep.subr.mxu0 0.0
    %3589 = vmatpush2.xpose.msra.mxu0 0.0
    %3590 = vmatprep.subr.mxu0 0.0
    %3591 = vmatpush2.xpose.msra.mxu0 0.0
    %3592 = vmatprep.subr.mxu0 0.0
    %3593 = vmatpush2.xpose.msra.mxu0 0.0
    %3594 = vmatprep.subr.mxu0 0.0
    %3595 = vmatpush2.xpose.msra.mxu0 0.0
    %3596 = vmatprep.mubr.f32.mxu0 0.0
    %v3597 = vand.u32 %v3346, 4294901760
    %v3598 = vsub.f32 %v3346, %v3597
    %3599 = vmatmul.mubr.f32.gmra.mxu0 %v3598
    %v3600 = vpop.f32.mrf.mxu0
    %v3601 = vadd.f32 %v3519, %v3600
    %v3602 = vpop.f32.mrf.mxu0
    %3603 = vmatprep.mubr.f32.mxu0 0.0
    %v3604 = vand.u32 %v3348, 4294901760
    %v3605 = vsub.f32 %v3348, %v3604
    %3606 = vmatmul.mubr.f32.gmra.mxu0 %v3605
    %v3607 = vpop.f32.mrf.mxu0
    %v3608 = vadd.f32 %v3525, %v3607
    %v3609 = vpop.f32.mrf.mxu0
    %3610 = vdwg.mxu0
    %3611 = vmatprep.subr.mxu0 0.0
    %3612 = vmatpush1.xpose.msra.mxu0 0.0
    %3613 = vmatprep.subr.mxu0 0.0
    %3614 = vmatpush1.xpose.msra.mxu0 0.0
    %3615 = vmatprep.subr.mxu0 0.0
    %3616 = vmatpush1.xpose.msra.mxu0 0.0
    %3617 = vmatprep.subr.mxu0 0.0
    %3618 = vmatpush1.xpose.msra.mxu0 0.0
    %3619 = vmatprep.subr.mxu0 0.0
    %3620 = vmatpush1.xpose.msra.mxu0 0.0
    %3621 = vmatprep.subr.mxu0 0.0
    %3622 = vmatpush1.xpose.msra.mxu0 0.0
    %3623 = vmatprep.subr.mxu0 0.0
    %3624 = vmatpush1.xpose.msra.mxu0 0.0
    %3625 = vmatprep.subr.mxu0 0.0
    %3626 = vmatpush1.xpose.msra.mxu0 0.0
    %3627 = vmatprep.subr.mxu0 0.0
    %3628 = vmatpush1.xpose.msra.mxu0 0.0
    %3629 = vmatprep.subr.mxu0 0.0
    %3630 = vmatpush1.xpose.msra.mxu0 0.0
    %3631 = vmatprep.subr.mxu0 0.0
    %3632 = vmatpush1.xpose.msra.mxu0 0.0
    %3633 = vmatprep.subr.mxu0 0.0
    %3634 = vmatpush1.xpose.msra.mxu0 0.0
    %3635 = vmatprep.subr.mxu0 0.0
    %3636 = vmatpush1.xpose.msra.mxu0 0.0
    %3637 = vmatprep.subr.mxu0 0.0
    %3638 = vmatpush1.xpose.msra.mxu0 0.0
    %3639 = vmatprep.subr.mxu0 0.0
    %v3640 = vand.u32 %v3352, 4294901760
    %3641 = vmatpush1.xpose.msra.mxu0 %v3640
    %3642 = vmatprep.subr.mxu0 0.0
    %v3643 = vand.u32 %v3350, 4294901760
    %3644 = vmatpush1.xpose.msra.mxu0 %v3643
    %3645 = vmatprep.subr.mxu0 0.0
    %3646 = vmatpush2.xpose.msra.mxu0 0.0
    %3647 = vmatprep.subr.mxu0 0.0
    %3648 = vmatpush2.xpose.msra.mxu0 0.0
    %3649 = vmatprep.subr.mxu0 0.0
    %3650 = vmatpush2.xpose.msra.mxu0 0.0
    %3651 = vmatprep.subr.mxu0 0.0
    %3652 = vmatpush2.xpose.msra.mxu0 0.0
    %3653 = vmatprep.subr.mxu0 0.0
    %3654 = vmatpush2.xpose.msra.mxu0 0.0
    %3655 = vmatprep.subr.mxu0 0.0
    %3656 = vmatpush2.xpose.msra.mxu0 0.0
    %3657 = vmatprep.subr.mxu0 0.0
    %3658 = vmatpush2.xpose.msra.mxu0 0.0
    %3659 = vmatprep.subr.mxu0 0.0
    %3660 = vmatpush2.xpose.msra.mxu0 0.0
    %3661 = vmatprep.subr.mxu0 0.0
    %3662 = vmatpush2.xpose.msra.mxu0 0.0
    %3663 = vmatprep.subr.mxu0 0.0
    %3664 = vmatpush2.xpose.msra.mxu0 0.0
    %3665 = vmatprep.subr.mxu0 0.0
    %3666 = vmatpush2.xpose.msra.mxu0 0.0
    %3667 = vmatprep.subr.mxu0 0.0
    %3668 = vmatpush2.xpose.msra.mxu0 0.0
    %3669 = vmatprep.subr.mxu0 0.0
    %3670 = vmatpush2.xpose.msra.mxu0 0.0
    %3671 = vmatprep.subr.mxu0 0.0
    %3672 = vmatpush2.xpose.msra.mxu0 0.0
    %3673 = vmatprep.subr.mxu0 0.0
    %3674 = vmatpush2.xpose.msra.mxu0 0.0
    %3675 = vmatprep.subr.mxu0 0.0
    %3676 = vmatpush2.xpose.msra.mxu0 0.0
    %3677 = vmatprep.mubr.f32.mxu0 0.0
    %v3678 = vand.u32 %v3346, 4294901760
    %v3679 = vsub.f32 %v3346, %v3678
    %v3680 = vand.u32 %v3679, 4294901760
    %3681 = vmatmul.mubr.f32.gmra.mxu0 %v3680
    %v3682 = vpop.f32.mrf.mxu0
    %v3683 = vadd.f32 %v3601, %v3682
    %v3684 = vpop.f32.mrf.mxu0
    %3685 = vmatprep.mubr.f32.mxu0 0.0
    %v3686 = vand.u32 %v3348, 4294901760
    %v3687 = vsub.f32 %v3348, %v3686
    %v3688 = vand.u32 %v3687, 4294901760
    %3689 = vmatmul.mubr.f32.gmra.mxu0 %v3688
    %v3690 = vpop.f32.mrf.mxu0
    %v3691 = vadd.f32 %v3608, %v3690
    %v3692 = vpop.f32.mrf.mxu0
    %3693 = vdwg.mxu0
    %3694 = vmatprep.subr.mxu0 0.0
    %3695 = vmatpush1.xpose.msra.mxu0 0.0
    %3696 = vmatprep.subr.mxu0 0.0
    %3697 = vmatpush1.xpose.msra.mxu0 0.0
    %3698 = vmatprep.subr.mxu0 0.0
    %3699 = vmatpush1.xpose.msra.mxu0 0.0
    %3700 = vmatprep.subr.mxu0 0.0
    %3701 = vmatpush1.xpose.msra.mxu0 0.0
    %3702 = vmatprep.subr.mxu0 0.0
    %3703 = vmatpush1.xpose.msra.mxu0 0.0
    %3704 = vmatprep.subr.mxu0 0.0
    %3705 = vmatpush1.xpose.msra.mxu0 0.0
    %3706 = vmatprep.subr.mxu0 0.0
    %3707 = vmatpush1.xpose.msra.mxu0 0.0
    %3708 = vmatprep.subr.mxu0 0.0
    %3709 = vmatpush1.xpose.msra.mxu0 0.0
    %3710 = vmatprep.subr.mxu0 0.0
    %3711 = vmatpush1.xpose.msra.mxu0 0.0
    %3712 = vmatprep.subr.mxu0 0.0
    %3713 = vmatpush1.xpose.msra.mxu0 0.0
    %3714 = vmatprep.subr.mxu0 0.0
    %3715 = vmatpush1.xpose.msra.mxu0 0.0
    %3716 = vmatprep.subr.mxu0 0.0
    %3717 = vmatpush1.xpose.msra.mxu0 0.0
    %3718 = vmatprep.subr.mxu0 0.0
    %3719 = vmatpush1.xpose.msra.mxu0 0.0
    %3720 = vmatprep.subr.mxu0 0.0
    %3721 = vmatpush1.xpose.msra.mxu0 0.0
    %3722 = vmatprep.subr.mxu0 0.0
    %v3723 = vand.u32 %v3352, 4294901760
    %v3724 = vsub.f32 %v3352, %v3723
    %v3725 = vand.u32 %v3724, 4294901760
    %3726 = vmatpush1.xpose.msra.mxu0 %v3725
    %3727 = vmatprep.subr.mxu0 0.0
    %v3728 = vand.u32 %v3350, 4294901760
    %v3729 = vsub.f32 %v3350, %v3728
    %v3730 = vand.u32 %v3729, 4294901760
    %3731 = vmatpush1.xpose.msra.mxu0 %v3730
    %3732 = vmatprep.subr.mxu0 0.0
    %3733 = vmatpush2.xpose.msra.mxu0 0.0
    %3734 = vmatprep.subr.mxu0 0.0
    %3735 = vmatpush2.xpose.msra.mxu0 0.0
    %3736 = vmatprep.subr.mxu0 0.0
    %3737 = vmatpush2.xpose.msra.mxu0 0.0
    %3738 = vmatprep.subr.mxu0 0.0
    %3739 = vmatpush2.xpose.msra.mxu0 0.0
    %3740 = vmatprep.subr.mxu0 0.0
    %3741 = vmatpush2.xpose.msra.mxu0 0.0
    %3742 = vmatprep.subr.mxu0 0.0
    %3743 = vmatpush2.xpose.msra.mxu0 0.0
    %3744 = vmatprep.subr.mxu0 0.0
    %3745 = vmatpush2.xpose.msra.mxu0 0.0
    %3746 = vmatprep.subr.mxu0 0.0
    %3747 = vmatpush2.xpose.msra.mxu0 0.0
    %3748 = vmatprep.subr.mxu0 0.0
    %3749 = vmatpush2.xpose.msra.mxu0 0.0
    %3750 = vmatprep.subr.mxu0 0.0
    %3751 = vmatpush2.xpose.msra.mxu0 0.0
    %3752 = vmatprep.subr.mxu0 0.0
    %3753 = vmatpush2.xpose.msra.mxu0 0.0
    %3754 = vmatprep.subr.mxu0 0.0
    %3755 = vmatpush2.xpose.msra.mxu0 0.0
    %3756 = vmatprep.subr.mxu0 0.0
    %3757 = vmatpush2.xpose.msra.mxu0 0.0
    %3758 = vmatprep.subr.mxu0 0.0
    %3759 = vmatpush2.xpose.msra.mxu0 0.0
    %3760 = vmatprep.subr.mxu0 0.0
    %3761 = vmatpush2.xpose.msra.mxu0 0.0
    %3762 = vmatprep.subr.mxu0 0.0
    %3763 = vmatpush2.xpose.msra.mxu0 0.0
    %3764 = vmatprep.mubr.f32.mxu0 0.0
    %v3765 = vand.u32 %v3346, 4294901760
    %3766 = vmatmul.mubr.f32.gmra.mxu0 %v3765
    %v3767 = vpop.f32.mrf.mxu0
    %v3768 = vadd.f32 %v3683, %v3767
    %v3769 = vpop.f32.mrf.mxu0
    %3770 = vmatprep.mubr.f32.mxu0 0.0
    %v3771 = vand.u32 %v3348, 4294901760
    %3772 = vmatmul.mubr.f32.gmra.mxu0 %v3771
    %v3773 = vpop.f32.mrf.mxu0
    %v3774 = vadd.f32 %v3691, %v3773
    %v3775 = vpop.f32.mrf.mxu0
    %3776 = vdwg.mxu0
    %3777 = vmatprep.subr.mxu0 0.0
    %3778 = vmatpush1.xpose.msra.mxu0 0.0
    %3779 = vmatprep.subr.mxu0 0.0
    %3780 = vmatpush1.xpose.msra.mxu0 0.0
    %3781 = vmatprep.subr.mxu0 0.0
    %3782 = vmatpush1.xpose.msra.mxu0 0.0
    %3783 = vmatprep.subr.mxu0 0.0
    %3784 = vmatpush1.xpose.msra.mxu0 0.0
    %3785 = vmatprep.subr.mxu0 0.0
    %3786 = vmatpush1.xpose.msra.mxu0 0.0
    %3787 = vmatprep.subr.mxu0 0.0
    %3788 = vmatpush1.xpose.msra.mxu0 0.0
    %3789 = vmatprep.subr.mxu0 0.0
    %3790 = vmatpush1.xpose.msra.mxu0 0.0
    %3791 = vmatprep.subr.mxu0 0.0
    %3792 = vmatpush1.xpose.msra.mxu0 0.0
    %3793 = vmatprep.subr.mxu0 0.0
    %3794 = vmatpush1.xpose.msra.mxu0 0.0
    %3795 = vmatprep.subr.mxu0 0.0
    %3796 = vmatpush1.xpose.msra.mxu0 0.0
    %3797 = vmatprep.subr.mxu0 0.0
    %3798 = vmatpush1.xpose.msra.mxu0 0.0
    %3799 = vmatprep.subr.mxu0 0.0
    %3800 = vmatpush1.xpose.msra.mxu0 0.0
    %3801 = vmatprep.subr.mxu0 0.0
    %3802 = vmatpush1.xpose.msra.mxu0 0.0
    %3803 = vmatprep.subr.mxu0 0.0
    %3804 = vmatpush1.xpose.msra.mxu0 0.0
    %3805 = vmatprep.subr.mxu0 0.0
    %v3806 = vand.u32 %v3352, 4294901760
    %3807 = vmatpush1.xpose.msra.mxu0 %v3806
    %3808 = vmatprep.subr.mxu0 0.0
    %v3809 = vand.u32 %v3350, 4294901760
    %3810 = vmatpush1.xpose.msra.mxu0 %v3809
    %3811 = vmatprep.subr.mxu0 0.0
    %3812 = vmatpush2.xpose.msra.mxu0 0.0
    %3813 = vmatprep.subr.mxu0 0.0
    %3814 = vmatpush2.xpose.msra.mxu0 0.0
    %3815 = vmatprep.subr.mxu0 0.0
    %3816 = vmatpush2.xpose.msra.mxu0 0.0
    %3817 = vmatprep.subr.mxu0 0.0
    %3818 = vmatpush2.xpose.msra.mxu0 0.0
    %3819 = vmatprep.subr.mxu0 0.0
    %3820 = vmatpush2.xpose.msra.mxu0 0.0
    %3821 = vmatprep.subr.mxu0 0.0
    %3822 = vmatpush2.xpose.msra.mxu0 0.0
    %3823 = vmatprep.subr.mxu0 0.0
    %3824 = vmatpush2.xpose.msra.mxu0 0.0
    %3825 = vmatprep.subr.mxu0 0.0
    %3826 = vmatpush2.xpose.msra.mxu0 0.0
    %3827 = vmatprep.subr.mxu0 0.0
    %3828 = vmatpush2.xpose.msra.mxu0 0.0
    %3829 = vmatprep.subr.mxu0 0.0
    %3830 = vmatpush2.xpose.msra.mxu0 0.0
    %3831 = vmatprep.subr.mxu0 0.0
    %3832 = vmatpush2.xpose.msra.mxu0 0.0
    %3833 = vmatprep.subr.mxu0 0.0
    %3834 = vmatpush2.xpose.msra.mxu0 0.0
    %3835 = vmatprep.subr.mxu0 0.0
    %3836 = vmatpush2.xpose.msra.mxu0 0.0
    %3837 = vmatprep.subr.mxu0 0.0
    %3838 = vmatpush2.xpose.msra.mxu0 0.0
    %3839 = vmatprep.subr.mxu0 0.0
    %3840 = vmatpush2.xpose.msra.mxu0 0.0
    %3841 = vmatprep.subr.mxu0 0.0
    %3842 = vmatpush2.xpose.msra.mxu0 0.0
    %3843 = vmatprep.mubr.f32.mxu0 0.0
    %v3844 = vand.u32 %v3346, 4294901760
    %3845 = vmatmul.mubr.f32.gmra.mxu0 %v3844
    %v3846 = vpop.f32.mrf.mxu0
    %v3847 = vadd.f32 %v3768, %v3846
    %v3848 = vpop.f32.mrf.mxu0
    %3849 = vmatprep.mubr.f32.mxu0 0.0
    %v3850 = vand.u32 %v3348, 4294901760
    %3851 = vmatmul.mubr.f32.gmra.mxu0 %v3850
    %v3852 = vpop.f32.mrf.mxu0
    %v3853 = vadd.f32 %v3774, %v3852
    %v3854 = vpop.f32.mrf.mxu0
    %3855 = vdwg.mxu0
    %v3856 = vsel %vm1751, %v3847, -inf
    %3857 = vmax.xlane.f32.xlu0 %v3856
    %v3858 = vpop.xlane.xlu0 %3857
    %v3859 = vsel %vm1751, %v3853, -inf
    %3860 = vmax.xlane.f32.xlu0 %v3859
    %v3861 = vpop.xlane.xlu0 %3860
    %v3862 = vsub.f32 %v3847, %v3858
    %v3863 = vsub.f32 %v3853, %v3861
    %v3864 = vmul.f32 %v3862, 1.442695
    %v3865 = vpow.pop %v3864
    %v3866 = vmul.f32 %v3863, 1.442695
    %v3867 = vpow.pop %v3866
    %v3868 = vsel %vm1751, %v3865, 0.0
    %3869 = vadd.xlane.f32.xlu0 %v3868
    %v3870 = vpop.xlane.xlu0 %3869
    %v3871 = vsel %vm1751, %v3867, 0.0
    %3872 = vadd.xlane.f32.xlu0 %v3871
    %v3873 = vpop.xlane.xlu0 %3872
    %v3874 = vrcp.pop %v3870
    %v3875 = vrcp.pop %v3873
    %v3876 = vmul.f32 %v3865, %v3874
    %v3877 = vmul.f32 %v3867, %v3875
    %3878 = vrot.lane.b32.xlu0 %v1178, 112
    %v3879 = vpop.permute.xlu0 %3878
    %3880 = vrot.lane.b32.xlu0 %v1184, 112
    %v3881 = vpop.permute.xlu0 %3880
    %v3885 = vsel %vm1751, %v3876, 0
    %v3888 = vsel %vm1751, %v3877, 0
    %3890 = vmatprep.subr.mxu0 0.0
    %3891 = vmatpush1.msra.mxu0 0.0
    %3892 = vmatprep.subr.mxu0 0.0
    %3893 = vmatpush1.msra.mxu0 0.0
    %3894 = vmatprep.subr.mxu0 0.0
    %3895 = vmatpush1.msra.mxu0 0.0
    %3896 = vmatprep.subr.mxu0 0.0
    %3897 = vmatpush1.msra.mxu0 0.0
    %3898 = vmatprep.subr.mxu0 0.0
    %3899 = vmatpush1.msra.mxu0 0.0
    %3900 = vmatprep.subr.mxu0 0.0
    %3901 = vmatpush1.msra.mxu0 0.0
    %3902 = vmatprep.subr.mxu0 0.0
    %3903 = vmatpush1.msra.mxu0 0.0
    %3904 = vmatprep.subr.mxu0 0.0
    %3905 = vmatpush1.msra.mxu0 0.0
    %3906 = vmatprep.subr.mxu0 0.0
    %3907 = vmatpush1.msra.mxu0 0.0
    %3908 = vmatprep.subr.mxu0 0.0
    %3909 = vmatpush1.msra.mxu0 0.0
    %3910 = vmatprep.subr.mxu0 0.0
    %3911 = vmatpush1.msra.mxu0 0.0
    %3912 = vmatprep.subr.mxu0 0.0
    %3913 = vmatpush1.msra.mxu0 0.0
    %3914 = vmatprep.subr.mxu0 0.0
    %3915 = vmatpush1.msra.mxu0 0.0
    %3916 = vmatprep.subr.mxu0 0.0
    %3917 = vmatpush1.msra.mxu0 0.0
    %3918 = vmatprep.subr.mxu0 0.0
    %v3919 = vand.u32 %v3881, 4294901760
    %3920 = vmatpush1.msra.mxu0 %v3919
    %3921 = vmatprep.subr.mxu0 0.0
    %v3922 = vand.u32 %v3879, 4294901760
    %3923 = vmatpush1.msra.mxu0 %v3922
    %3924 = vmatprep.subr.mxu0 0.0
    %3925 = vmatpush2.msra.mxu0 0.0
    %3926 = vmatprep.subr.mxu0 0.0
    %3927 = vmatpush2.msra.mxu0 0.0
    %3928 = vmatprep.subr.mxu0 0.0
    %3929 = vmatpush2.msra.mxu0 0.0
    %3930 = vmatprep.subr.mxu0 0.0
    %3931 = vmatpush2.msra.mxu0 0.0
    %3932 = vmatprep.subr.mxu0 0.0
    %3933 = vmatpush2.msra.mxu0 0.0
    %3934 = vmatprep.subr.mxu0 0.0
    %3935 = vmatpush2.msra.mxu0 0.0
    %3936 = vmatprep.subr.mxu0 0.0
    %3937 = vmatpush2.msra.mxu0 0.0
    %3938 = vmatprep.subr.mxu0 0.0
    %3939 = vmatpush2.msra.mxu0 0.0
    %3940 = vmatprep.subr.mxu0 0.0
    %3941 = vmatpush2.msra.mxu0 0.0
    %3942 = vmatprep.subr.mxu0 0.0
    %3943 = vmatpush2.msra.mxu0 0.0
    %3944 = vmatprep.subr.mxu0 0.0
    %3945 = vmatpush2.msra.mxu0 0.0
    %3946 = vmatprep.subr.mxu0 0.0
    %3947 = vmatpush2.msra.mxu0 0.0
    %3948 = vmatprep.subr.mxu0 0.0
    %3949 = vmatpush2.msra.mxu0 0.0
    %3950 = vmatprep.subr.mxu0 0.0
    %3951 = vmatpush2.msra.mxu0 0.0
    %3952 = vmatprep.subr.mxu0 0.0
    %3953 = vmatpush2.msra.mxu0 0.0
    %3954 = vmatprep.subr.mxu0 0.0
    %3955 = vmatpush2.msra.mxu0 0.0
    %3956 = vmatprep.mubr.f32.mxu0 0.0
    %v3957 = vand.u32 %v3885, 4294901760
    %v3958 = vsub.f32 %v3885, %v3957
    %v3959 = vand.u32 %v3958, 4294901760
    %v3960 = vsub.f32 %v3958, %v3959
    %v3961 = vand.u32 %v3960, 4294901760
    %3962 = vmatmul.mubr.f32.gmra.mxu0 %v3961
    %v3963 = vpop.f32.mrf.mxu0
    %v3964 = vadd.f32 0.0, %v3963
    %v3965 = vpop.f32.mrf.mxu0
    %3966 = vmatprep.mubr.f32.mxu0 0.0
    %v3967 = vand.u32 %v3888, 4294901760
    %v3968 = vsub.f32 %v3888, %v3967
    %v3969 = vand.u32 %v3968, 4294901760
    %v3970 = vsub.f32 %v3968, %v3969
    %v3971 = vand.u32 %v3970, 4294901760
    %3972 = vmatmul.mubr.f32.gmra.mxu0 %v3971
    %v3973 = vpop.f32.mrf.mxu0
    %v3974 = vadd.f32 0.0, %v3973
    %v3975 = vpop.f32.mrf.mxu0
    %3976 = vdwg.mxu0
    %3977 = vmatprep.subr.mxu0 0.0
    %3978 = vmatpush1.msra.mxu0 0.0
    %3979 = vmatprep.subr.mxu0 0.0
    %3980 = vmatpush1.msra.mxu0 0.0
    %3981 = vmatprep.subr.mxu0 0.0
    %3982 = vmatpush1.msra.mxu0 0.0
    %3983 = vmatprep.subr.mxu0 0.0
    %3984 = vmatpush1.msra.mxu0 0.0
    %3985 = vmatprep.subr.mxu0 0.0
    %3986 = vmatpush1.msra.mxu0 0.0
    %3987 = vmatprep.subr.mxu0 0.0
    %3988 = vmatpush1.msra.mxu0 0.0
    %3989 = vmatprep.subr.mxu0 0.0
    %3990 = vmatpush1.msra.mxu0 0.0
    %3991 = vmatprep.subr.mxu0 0.0
    %3992 = vmatpush1.msra.mxu0 0.0
    %3993 = vmatprep.subr.mxu0 0.0
    %3994 = vmatpush1.msra.mxu0 0.0
    %3995 = vmatprep.subr.mxu0 0.0
    %3996 = vmatpush1.msra.mxu0 0.0
    %3997 = vmatprep.subr.mxu0 0.0
    %3998 = vmatpush1.msra.mxu0 0.0
    %3999 = vmatprep.subr.mxu0 0.0
    %4000 = vmatpush1.msra.mxu0 0.0
    %4001 = vmatprep.subr.mxu0 0.0
    %4002 = vmatpush1.msra.mxu0 0.0
    %4003 = vmatprep.subr.mxu0 0.0
    %4004 = vmatpush1.msra.mxu0 0.0
    %4005 = vmatprep.subr.mxu0 0.0
    %v4006 = vand.u32 %v3881, 4294901760
    %v4007 = vsub.f32 %v3881, %v4006
    %v4008 = vand.u32 %v4007, 4294901760
    %v4009 = vsub.f32 %v4007, %v4008
    %v4010 = vand.u32 %v4009, 4294901760
    %4011 = vmatpush1.msra.mxu0 %v4010
    %4012 = vmatprep.subr.mxu0 0.0
    %v4013 = vand.u32 %v3879, 4294901760
    %v4014 = vsub.f32 %v3879, %v4013
    %v4015 = vand.u32 %v4014, 4294901760
    %v4016 = vsub.f32 %v4014, %v4015
    %v4017 = vand.u32 %v4016, 4294901760
    %4018 = vmatpush1.msra.mxu0 %v4017
    %4019 = vmatprep.subr.mxu0 0.0
    %4020 = vmatpush2.msra.mxu0 0.0
    %4021 = vmatprep.subr.mxu0 0.0
    %4022 = vmatpush2.msra.mxu0 0.0
    %4023 = vmatprep.subr.mxu0 0.0
    %4024 = vmatpush2.msra.mxu0 0.0
    %4025 = vmatprep.subr.mxu0 0.0
    %4026 = vmatpush2.msra.mxu0 0.0
    %4027 = vmatprep.subr.mxu0 0.0
    %4028 = vmatpush2.msra.mxu0 0.0
    %4029 = vmatprep.subr.mxu0 0.0
    %4030 = vmatpush2.msra.mxu0 0.0
    %4031 = vmatprep.subr.mxu0 0.0
    %4032 = vmatpush2.msra.mxu0 0.0
    %4033 = vmatprep.subr.mxu0 0.0
    %4034 = vmatpush2.msra.mxu0 0.0
    %4035 = vmatprep.subr.mxu0 0.0
    %4036 = vmatpush2.msra.mxu0 0.0
    %4037 = vmatprep.subr.mxu0 0.0
    %4038 = vmatpush2.msra.mxu0 0.0
    %4039 = vmatprep.subr.mxu0 0.0
    %4040 = vmatpush2.msra.mxu0 0.0
    %4041 = vmatprep.subr.mxu0 0.0
    %4042 = vmatpush2.msra.mxu0 0.0
    %4043 = vmatprep.subr.mxu0 0.0
    %4044 = vmatpush2.msra.mxu0 0.0
    %4045 = vmatprep.subr.mxu0 0.0
    %4046 = vmatpush2.msra.mxu0 0.0
    %4047 = vmatprep.subr.mxu0 0.0
    %4048 = vmatpush2.msra.mxu0 0.0
    %4049 = vmatprep.subr.mxu0 0.0
    %4050 = vmatpush2.msra.mxu0 0.0
    %4051 = vmatprep.mubr.f32.mxu0 0.0
    %v4052 = vand.u32 %v3885, 4294901760
    %4053 = vmatmul.mubr.f32.gmra.mxu0 %v4052
    %v4054 = vpop.f32.mrf.mxu0
    %v4055 = vadd.f32 %v3964, %v4054
    %v4056 = vpop.f32.mrf.mxu0
    %4057 = vmatprep.mubr.f32.mxu0 0.0
    %v4058 = vand.u32 %v3888, 4294901760
    %4059 = vmatmul.mubr.f32.gmra.mxu0 %v4058
    %v4060 = vpop.f32.mrf.mxu0
    %v4061 = vadd.f32 %v3974, %v4060
    %v4062 = vpop.f32.mrf.mxu0
    %4063 = vdwg.mxu0
    %4064 = vmatprep.subr.mxu0 0.0
    %4065 = vmatpush1.msra.mxu0 0.0
    %4066 = vmatprep.subr.mxu0 0.0
    %4067 = vmatpush1.msra.mxu0 0.0
    %4068 = vmatprep.subr.mxu0 0.0
    %4069 = vmatpush1.msra.mxu0 0.0
    %4070 = vmatprep.subr.mxu0 0.0
    %4071 = vmatpush1.msra.mxu0 0.0
    %4072 = vmatprep.subr.mxu0 0.0
    %4073 = vmatpush1.msra.mxu0 0.0
    %4074 = vmatprep.subr.mxu0 0.0
    %4075 = vmatpush1.msra.mxu0 0.0
    %4076 = vmatprep.subr.mxu0 0.0
    %4077 = vmatpush1.msra.mxu0 0.0
    %4078 = vmatprep.subr.mxu0 0.0
    %4079 = vmatpush1.msra.mxu0 0.0
    %4080 = vmatprep.subr.mxu0 0.0
    %4081 = vmatpush1.msra.mxu0 0.0
    %4082 = vmatprep.subr.mxu0 0.0
    %4083 = vmatpush1.msra.mxu0 0.0
    %4084 = vmatprep.subr.mxu0 0.0
    %4085 = vmatpush1.msra.mxu0 0.0
    %4086 = vmatprep.subr.mxu0 0.0
    %4087 = vmatpush1.msra.mxu0 0.0
    %4088 = vmatprep.subr.mxu0 0.0
    %4089 = vmatpush1.msra.mxu0 0.0
    %4090 = vmatprep.subr.mxu0 0.0
    %4091 = vmatpush1.msra.mxu0 0.0
    %4092 = vmatprep.subr.mxu0 0.0
    %v4093 = vand.u32 %v3881, 4294901760
    %v4094 = vsub.f32 %v3881, %v4093
    %4095 = vmatpush1.msra.mxu0 %v4094
    %4096 = vmatprep.subr.mxu0 0.0
    %v4097 = vand.u32 %v3879, 4294901760
    %v4098 = vsub.f32 %v3879, %v4097
    %4099 = vmatpush1.msra.mxu0 %v4098
    %4100 = vmatprep.subr.mxu0 0.0
    %4101 = vmatpush2.msra.mxu0 0.0
    %4102 = vmatprep.subr.mxu0 0.0
    %4103 = vmatpush2.msra.mxu0 0.0
    %4104 = vmatprep.subr.mxu0 0.0
    %4105 = vmatpush2.msra.mxu0 0.0
    %4106 = vmatprep.subr.mxu0 0.0
    %4107 = vmatpush2.msra.mxu0 0.0
    %4108 = vmatprep.subr.mxu0 0.0
    %4109 = vmatpush2.msra.mxu0 0.0
    %4110 = vmatprep.subr.mxu0 0.0
    %4111 = vmatpush2.msra.mxu0 0.0
    %4112 = vmatprep.subr.mxu0 0.0
    %4113 = vmatpush2.msra.mxu0 0.0
    %4114 = vmatprep.subr.mxu0 0.0
    %4115 = vmatpush2.msra.mxu0 0.0
    %4116 = vmatprep.subr.mxu0 0.0
    %4117 = vmatpush2.msra.mxu0 0.0
    %4118 = vmatprep.subr.mxu0 0.0
    %4119 = vmatpush2.msra.mxu0 0.0
    %4120 = vmatprep.subr.mxu0 0.0
    %4121 = vmatpush2.msra.mxu0 0.0
    %4122 = vmatprep.subr.mxu0 0.0
    %4123 = vmatpush2.msra.mxu0 0.0
    %4124 = vmatprep.subr.mxu0 0.0
    %4125 = vmatpush2.msra.mxu0 0.0
    %4126 = vmatprep.subr.mxu0 0.0
    %4127 = vmatpush2.msra.mxu0 0.0
    %4128 = vmatprep.subr.mxu0 0.0
    %4129 = vmatpush2.msra.mxu0 0.0
    %4130 = vmatprep.subr.mxu0 0.0
    %4131 = vmatpush2.msra.mxu0 0.0
    %4132 = vmatprep.mubr.f32.mxu0 0.0
    %v4133 = vand.u32 %v3885, 4294901760
    %v4134 = vsub.f32 %v3885, %v4133
    %4135 = vmatmul.mubr.f32.gmra.mxu0 %v4134
    %v4136 = vpop.f32.mrf.mxu0
    %v4137 = vadd.f32 %v4055, %v4136
    %v4138 = vpop.f32.mrf.mxu0
    %4139 = vmatprep.mubr.f32.mxu0 0.0
    %v4140 = vand.u32 %v3888, 4294901760
    %v4141 = vsub.f32 %v3888, %v4140
    %4142 = vmatmul.mubr.f32.gmra.mxu0 %v4141
    %v4143 = vpop.f32.mrf.mxu0
    %v4144 = vadd.f32 %v4061, %v4143
    %v4145 = vpop.f32.mrf.mxu0
    %4146 = vdwg.mxu0
    %4147 = vmatprep.subr.mxu0 0.0
    %4148 = vmatpush1.msra.mxu0 0.0
    %4149 = vmatprep.subr.mxu0 0.0
    %4150 = vmatpush1.msra.mxu0 0.0
    %4151 = vmatprep.subr.mxu0 0.0
    %4152 = vmatpush1.msra.mxu0 0.0
    %4153 = vmatprep.subr.mxu0 0.0
    %4154 = vmatpush1.msra.mxu0 0.0
    %4155 = vmatprep.subr.mxu0 0.0
    %4156 = vmatpush1.msra.mxu0 0.0
    %4157 = vmatprep.subr.mxu0 0.0
    %4158 = vmatpush1.msra.mxu0 0.0
    %4159 = vmatprep.subr.mxu0 0.0
    %4160 = vmatpush1.msra.mxu0 0.0
    %4161 = vmatprep.subr.mxu0 0.0
    %4162 = vmatpush1.msra.mxu0 0.0
    %4163 = vmatprep.subr.mxu0 0.0
    %4164 = vmatpush1.msra.mxu0 0.0
    %4165 = vmatprep.subr.mxu0 0.0
    %4166 = vmatpush1.msra.mxu0 0.0
    %4167 = vmatprep.subr.mxu0 0.0
    %4168 = vmatpush1.msra.mxu0 0.0
    %4169 = vmatprep.subr.mxu0 0.0
    %4170 = vmatpush1.msra.mxu0 0.0
    %4171 = vmatprep.subr.mxu0 0.0
    %4172 = vmatpush1.msra.mxu0 0.0
    %4173 = vmatprep.subr.mxu0 0.0
    %4174 = vmatpush1.msra.mxu0 0.0
    %4175 = vmatprep.subr.mxu0 0.0
    %v4176 = vand.u32 %v3881, 4294901760
    %4177 = vmatpush1.msra.mxu0 %v4176
    %4178 = vmatprep.subr.mxu0 0.0
    %v4179 = vand.u32 %v3879, 4294901760
    %4180 = vmatpush1.msra.mxu0 %v4179
    %4181 = vmatprep.subr.mxu0 0.0
    %4182 = vmatpush2.msra.mxu0 0.0
    %4183 = vmatprep.subr.mxu0 0.0
    %4184 = vmatpush2.msra.mxu0 0.0
    %4185 = vmatprep.subr.mxu0 0.0
    %4186 = vmatpush2.msra.mxu0 0.0
    %4187 = vmatprep.subr.mxu0 0.0
    %4188 = vmatpush2.msra.mxu0 0.0
    %4189 = vmatprep.subr.mxu0 0.0
    %4190 = vmatpush2.msra.mxu0 0.0
    %4191 = vmatprep.subr.mxu0 0.0
    %4192 = vmatpush2.msra.mxu0 0.0
    %4193 = vmatprep.subr.mxu0 0.0
    %4194 = vmatpush2.msra.mxu0 0.0
    %4195 = vmatprep.subr.mxu0 0.0
    %4196 = vmatpush2.msra.mxu0 0.0
    %4197 = vmatprep.subr.mxu0 0.0
    %4198 = vmatpush2.msra.mxu0 0.0
    %4199 = vmatprep.subr.mxu0 0.0
    %4200 = vmatpush2.msra.mxu0 0.0
    %4201 = vmatprep.subr.mxu0 0.0
    %4202 = vmatpush2.msra.mxu0 0.0
    %4203 = vmatprep.subr.mxu0 0.0
    %4204 = vmatpush2.msra.mxu0 0.0
    %4205 = vmatprep.subr.mxu0 0.0
    %4206 = vmatpush2.msra.mxu0 0.0
    %4207 = vmatprep.subr.mxu0 0.0
    %4208 = vmatpush2.msra.mxu0 0.0
    %4209 = vmatprep.subr.mxu0 0.0
    %4210 = vmatpush2.msra.mxu0 0.0
    %4211 = vmatprep.subr.mxu0 0.0
    %4212 = vmatpush2.msra.mxu0 0.0
    %4213 = vmatprep.mubr.f32.mxu0 0.0
    %v4214 = vand.u32 %v3885, 4294901760
    %v4215 = vsub.f32 %v3885, %v4214
    %v4216 = vand.u32 %v4215, 4294901760
    %4217 = vmatmul.mubr.f32.gmra.mxu0 %v4216
    %v4218 = vpop.f32.mrf.mxu0
    %v4219 = vadd.f32 %v4137, %v4218
    %v4220 = vpop.f32.mrf.mxu0
    %4221 = vmatprep.mubr.f32.mxu0 0.0
    %v4222 = vand.u32 %v3888, 4294901760
    %v4223 = vsub.f32 %v3888, %v4222
    %v4224 = vand.u32 %v4223, 4294901760
    %4225 = vmatmul.mubr.f32.gmra.mxu0 %v4224
    %v4226 = vpop.f32.mrf.mxu0
    %v4227 = vadd.f32 %v4144, %v4226
    %v4228 = vpop.f32.mrf.mxu0
    %4229 = vdwg.mxu0
    %4230 = vmatprep.subr.mxu0 0.0
    %4231 = vmatpush1.msra.mxu0 0.0
    %4232 = vmatprep.subr.mxu0 0.0
    %4233 = vmatpush1.msra.mxu0 0.0
    %4234 = vmatprep.subr.mxu0 0.0
    %4235 = vmatpush1.msra.mxu0 0.0
    %4236 = vmatprep.subr.mxu0 0.0
    %4237 = vmatpush1.msra.mxu0 0.0
    %4238 = vmatprep.subr.mxu0 0.0
    %4239 = vmatpush1.msra.mxu0 0.0
    %4240 = vmatprep.subr.mxu0 0.0
    %4241 = vmatpush1.msra.mxu0 0.0
    %4242 = vmatprep.subr.mxu0 0.0
    %4243 = vmatpush1.msra.mxu0 0.0
    %4244 = vmatprep.subr.mxu0 0.0
    %4245 = vmatpush1.msra.mxu0 0.0
    %4246 = vmatprep.subr.mxu0 0.0
    %4247 = vmatpush1.msra.mxu0 0.0
    %4248 = vmatprep.subr.mxu0 0.0
    %4249 = vmatpush1.msra.mxu0 0.0
    %4250 = vmatprep.subr.mxu0 0.0
    %4251 = vmatpush1.msra.mxu0 0.0
    %4252 = vmatprep.subr.mxu0 0.0
    %4253 = vmatpush1.msra.mxu0 0.0
    %4254 = vmatprep.subr.mxu0 0.0
    %4255 = vmatpush1.msra.mxu0 0.0
    %4256 = vmatprep.subr.mxu0 0.0
    %4257 = vmatpush1.msra.mxu0 0.0
    %4258 = vmatprep.subr.mxu0 0.0
    %v4259 = vand.u32 %v3881, 4294901760
    %v4260 = vsub.f32 %v3881, %v4259
    %v4261 = vand.u32 %v4260, 4294901760
    %4262 = vmatpush1.msra.mxu0 %v4261
    %4263 = vmatprep.subr.mxu0 0.0
    %v4264 = vand.u32 %v3879, 4294901760
    %v4265 = vsub.f32 %v3879, %v4264
    %v4266 = vand.u32 %v4265, 4294901760
    %4267 = vmatpush1.msra.mxu0 %v4266
    %4268 = vmatprep.subr.mxu0 0.0
    %4269 = vmatpush2.msra.mxu0 0.0
    %4270 = vmatprep.subr.mxu0 0.0
    %4271 = vmatpush2.msra.mxu0 0.0
    %4272 = vmatprep.subr.mxu0 0.0
    %4273 = vmatpush2.msra.mxu0 0.0
    %4274 = vmatprep.subr.mxu0 0.0
    %4275 = vmatpush2.msra.mxu0 0.0
    %4276 = vmatprep.subr.mxu0 0.0
    %4277 = vmatpush2.msra.mxu0 0.0
    %4278 = vmatprep.subr.mxu0 0.0
    %4279 = vmatpush2.msra.mxu0 0.0
    %4280 = vmatprep.subr.mxu0 0.0
    %4281 = vmatpush2.msra.mxu0 0.0
    %4282 = vmatprep.subr.mxu0 0.0
    %4283 = vmatpush2.msra.mxu0 0.0
    %4284 = vmatprep.subr.mxu0 0.0
    %4285 = vmatpush2.msra.mxu0 0.0
    %4286 = vmatprep.subr.mxu0 0.0
    %4287 = vmatpush2.msra.mxu0 0.0
    %4288 = vmatprep.subr.mxu0 0.0
    %4289 = vmatpush2.msra.mxu0 0.0
    %4290 = vmatprep.subr.mxu0 0.0
    %4291 = vmatpush2.msra.mxu0 0.0
    %4292 = vmatprep.subr.mxu0 0.0
    %4293 = vmatpush2.msra.mxu0 0.0
    %4294 = vmatprep.subr.mxu0 0.0
    %4295 = vmatpush2.msra.mxu0 0.0
    %4296 = vmatprep.subr.mxu0 0.0
    %4297 = vmatpush2.msra.mxu0 0.0
    %4298 = vmatprep.subr.mxu0 0.0
    %4299 = vmatpush2.msra.mxu0 0.0
    %4300 = vmatprep.mubr.f32.mxu0 0.0
    %v4301 = vand.u32 %v3885, 4294901760
    %4302 = vmatmul.mubr.f32.gmra.mxu0 %v4301
    %v4303 = vpop.f32.mrf.mxu0
    %v4304 = vadd.f32 %v4219, %v4303
    %v4305 = vpop.f32.mrf.mxu0
    %4306 = vmatprep.mubr.f32.mxu0 0.0
    %v4307 = vand.u32 %v3888, 4294901760
    %4308 = vmatmul.mubr.f32.gmra.mxu0 %v4307
    %v4309 = vpop.f32.mrf.mxu0
    %v4310 = vadd.f32 %v4227, %v4309
    %v4311 = vpop.f32.mrf.mxu0
    %4312 = vdwg.mxu0
    %4313 = vmatprep.subr.mxu0 0.0
    %4314 = vmatpush1.msra.mxu0 0.0
    %4315 = vmatprep.subr.mxu0 0.0
    %4316 = vmatpush1.msra.mxu0 0.0
    %4317 = vmatprep.subr.mxu0 0.0
    %4318 = vmatpush1.msra.mxu0 0.0
    %4319 = vmatprep.subr.mxu0 0.0
    %4320 = vmatpush1.msra.mxu0 0.0
    %4321 = vmatprep.subr.mxu0 0.0
    %4322 = vmatpush1.msra.mxu0 0.0
    %4323 = vmatprep.subr.mxu0 0.0
    %4324 = vmatpush1.msra.mxu0 0.0
    %4325 = vmatprep.subr.mxu0 0.0
    %4326 = vmatpush1.msra.mxu0 0.0
    %4327 = vmatprep.subr.mxu0 0.0
    %4328 = vmatpush1.msra.mxu0 0.0
    %4329 = vmatprep.subr.mxu0 0.0
    %4330 = vmatpush1.msra.mxu0 0.0
    %4331 = vmatprep.subr.mxu0 0.0
    %4332 = vmatpush1.msra.mxu0 0.0
    %4333 = vmatprep.subr.mxu0 0.0
    %4334 = vmatpush1.msra.mxu0 0.0
    %4335 = vmatprep.subr.mxu0 0.0
    %4336 = vmatpush1.msra.mxu0 0.0
    %4337 = vmatprep.subr.mxu0 0.0
    %4338 = vmatpush1.msra.mxu0 0.0
    %4339 = vmatprep.subr.mxu0 0.0
    %4340 = vmatpush1.msra.mxu0 0.0
    %4341 = vmatprep.subr.mxu0 0.0
    %v4342 = vand.u32 %v3881, 4294901760
    %4343 = vmatpush1.msra.mxu0 %v4342
    %4344 = vmatprep.subr.mxu0 0.0
    %v4345 = vand.u32 %v3879, 4294901760
    %4346 = vmatpush1.msra.mxu0 %v4345
    %4347 = vmatprep.subr.mxu0 0.0
    %4348 = vmatpush2.msra.mxu0 0.0
    %4349 = vmatprep.subr.mxu0 0.0
    %4350 = vmatpush2.msra.mxu0 0.0
    %4351 = vmatprep.subr.mxu0 0.0
    %4352 = vmatpush2.msra.mxu0 0.0
    %4353 = vmatprep.subr.mxu0 0.0
    %4354 = vmatpush2.msra.mxu0 0.0
    %4355 = vmatprep.subr.mxu0 0.0
    %4356 = vmatpush2.msra.mxu0 0.0
    %4357 = vmatprep.subr.mxu0 0.0
    %4358 = vmatpush2.msra.mxu0 0.0
    %4359 = vmatprep.subr.mxu0 0.0
    %4360 = vmatpush2.msra.mxu0 0.0
    %4361 = vmatprep.subr.mxu0 0.0
    %4362 = vmatpush2.msra.mxu0 0.0
    %4363 = vmatprep.subr.mxu0 0.0
    %4364 = vmatpush2.msra.mxu0 0.0
    %4365 = vmatprep.subr.mxu0 0.0
    %4366 = vmatpush2.msra.mxu0 0.0
    %4367 = vmatprep.subr.mxu0 0.0
    %4368 = vmatpush2.msra.mxu0 0.0
    %4369 = vmatprep.subr.mxu0 0.0
    %4370 = vmatpush2.msra.mxu0 0.0
    %4371 = vmatprep.subr.mxu0 0.0
    %4372 = vmatpush2.msra.mxu0 0.0
    %4373 = vmatprep.subr.mxu0 0.0
    %4374 = vmatpush2.msra.mxu0 0.0
    %4375 = vmatprep.subr.mxu0 0.0
    %4376 = vmatpush2.msra.mxu0 0.0
    %4377 = vmatprep.subr.mxu0 0.0
    %4378 = vmatpush2.msra.mxu0 0.0
    %4379 = vmatprep.mubr.f32.mxu0 0.0
    %v4380 = vand.u32 %v3885, 4294901760
    %4381 = vmatmul.mubr.f32.gmra.mxu0 %v4380
    %v4382 = vpop.f32.mrf.mxu0
    %v4383 = vadd.f32 %v4304, %v4382
    %v4384 = vpop.f32.mrf.mxu0
    %4385 = vmatprep.mubr.f32.mxu0 0.0
    %v4386 = vand.u32 %v3888, 4294901760
    %4387 = vmatmul.mubr.f32.gmra.mxu0 %v4386
    %v4388 = vpop.f32.mrf.mxu0
    %v4389 = vadd.f32 %v4310, %v4388
    %v4390 = vpop.f32.mrf.mxu0
    %4391 = vdwg.mxu0
    %4392 = vrot.lane.b32.xlu0 %v621, 104
    %v4393 = vpop.permute.xlu0 %4392
    %4394 = vrot.lane.b32.xlu0 %v622, 104
    %v4395 = vpop.permute.xlu0 %4394
    %4396 = vrot.lane.b32.xlu0 %v631, 72
    %v4397 = vpop.permute.xlu0 %4396
    %4398 = vrot.lane.b32.xlu0 %v632, 72
    %v4399 = vpop.permute.xlu0 %4398
    %v4400 = vsel %vm1238, %v4393, 0
    %v4402 = vsel %vm1238, %v4395, 0
    %v4404 = vsel %vm1238, %v4397, 0
    %v4406 = vsel %vm1238, %v4399, 0
    %4408 = vmatprep.subr.mxu0 0.0
    %4409 = vmatpush1.xpose.msra.mxu0 0.0
    %4410 = vmatprep.subr.mxu0 0.0
    %4411 = vmatpush1.xpose.msra.mxu0 0.0
    %4412 = vmatprep.subr.mxu0 0.0
    %4413 = vmatpush1.xpose.msra.mxu0 0.0
    %4414 = vmatprep.subr.mxu0 0.0
    %4415 = vmatpush1.xpose.msra.mxu0 0.0
    %4416 = vmatprep.subr.mxu0 0.0
    %4417 = vmatpush1.xpose.msra.mxu0 0.0
    %4418 = vmatprep.subr.mxu0 0.0
    %4419 = vmatpush1.xpose.msra.mxu0 0.0
    %4420 = vmatprep.subr.mxu0 0.0
    %4421 = vmatpush1.xpose.msra.mxu0 0.0
    %4422 = vmatprep.subr.mxu0 0.0
    %4423 = vmatpush1.xpose.msra.mxu0 0.0
    %4424 = vmatprep.subr.mxu0 0.0
    %4425 = vmatpush1.xpose.msra.mxu0 0.0
    %4426 = vmatprep.subr.mxu0 0.0
    %4427 = vmatpush1.xpose.msra.mxu0 0.0
    %4428 = vmatprep.subr.mxu0 0.0
    %4429 = vmatpush1.xpose.msra.mxu0 0.0
    %4430 = vmatprep.subr.mxu0 0.0
    %4431 = vmatpush1.xpose.msra.mxu0 0.0
    %4432 = vmatprep.subr.mxu0 0.0
    %4433 = vmatpush1.xpose.msra.mxu0 0.0
    %4434 = vmatprep.subr.mxu0 0.0
    %4435 = vmatpush1.xpose.msra.mxu0 0.0
    %4436 = vmatprep.subr.mxu0 0.0
    %v4437 = vand.u32 %v4406, 4294901760
    %4438 = vmatpush1.xpose.msra.mxu0 %v4437
    %4439 = vmatprep.subr.mxu0 0.0
    %v4440 = vand.u32 %v4404, 4294901760
    %4441 = vmatpush1.xpose.msra.mxu0 %v4440
    %4442 = vmatprep.subr.mxu0 0.0
    %4443 = vmatpush2.xpose.msra.mxu0 0.0
    %4444 = vmatprep.subr.mxu0 0.0
    %4445 = vmatpush2.xpose.msra.mxu0 0.0
    %4446 = vmatprep.subr.mxu0 0.0
    %4447 = vmatpush2.xpose.msra.mxu0 0.0
    %4448 = vmatprep.subr.mxu0 0.0
    %4449 = vmatpush2.xpose.msra.mxu0 0.0
    %4450 = vmatprep.subr.mxu0 0.0
    %4451 = vmatpush2.xpose.msra.mxu0 0.0
    %4452 = vmatprep.subr.mxu0 0.0
    %4453 = vmatpush2.xpose.msra.mxu0 0.0
    %4454 = vmatprep.subr.mxu0 0.0
    %4455 = vmatpush2.xpose.msra.mxu0 0.0
    %4456 = vmatprep.subr.mxu0 0.0
    %4457 = vmatpush2.xpose.msra.mxu0 0.0
    %4458 = vmatprep.subr.mxu0 0.0
    %4459 = vmatpush2.xpose.msra.mxu0 0.0
    %4460 = vmatprep.subr.mxu0 0.0
    %4461 = vmatpush2.xpose.msra.mxu0 0.0
    %4462 = vmatprep.subr.mxu0 0.0
    %4463 = vmatpush2.xpose.msra.mxu0 0.0
    %4464 = vmatprep.subr.mxu0 0.0
    %4465 = vmatpush2.xpose.msra.mxu0 0.0
    %4466 = vmatprep.subr.mxu0 0.0
    %4467 = vmatpush2.xpose.msra.mxu0 0.0
    %4468 = vmatprep.subr.mxu0 0.0
    %4469 = vmatpush2.xpose.msra.mxu0 0.0
    %4470 = vmatprep.subr.mxu0 0.0
    %4471 = vmatpush2.xpose.msra.mxu0 0.0
    %4472 = vmatprep.subr.mxu0 0.0
    %4473 = vmatpush2.xpose.msra.mxu0 0.0
    %4474 = vmatprep.mubr.f32.mxu0 0.0
    %v4475 = vand.u32 %v4400, 4294901760
    %v4476 = vsub.f32 %v4400, %v4475
    %v4477 = vand.u32 %v4476, 4294901760
    %v4478 = vsub.f32 %v4476, %v4477
    %v4479 = vand.u32 %v4478, 4294901760
    %4480 = vmatmul.mubr.f32.gmra.mxu0 %v4479
    %v4481 = vpop.f32.mrf.mxu0
    %v4482 = vadd.f32 %v1230, %v4481
    %v4483 = vpop.f32.mrf.mxu0
    %4484 = vmatprep.mubr.f32.mxu0 0.0
    %v4485 = vand.u32 %v4402, 4294901760
    %v4486 = vsub.f32 %v4402, %v4485
    %v4487 = vand.u32 %v4486, 4294901760
    %v4488 = vsub.f32 %v4486, %v4487
    %v4489 = vand.u32 %v4488, 4294901760
    %4490 = vmatmul.mubr.f32.gmra.mxu0 %v4489
    %v4491 = vpop.f32.mrf.mxu0
    %v4492 = vadd.f32 %v1231, %v4491
    %v4493 = vpop.f32.mrf.mxu0
    %4494 = vdwg.mxu0
    %4495 = vmatprep.subr.mxu0 0.0
    %4496 = vmatpush1.xpose.msra.mxu0 0.0
    %4497 = vmatprep.subr.mxu0 0.0
    %4498 = vmatpush1.xpose.msra.mxu0 0.0
    %4499 = vmatprep.subr.mxu0 0.0
    %4500 = vmatpush1.xpose.msra.mxu0 0.0
    %4501 = vmatprep.subr.mxu0 0.0
    %4502 = vmatpush1.xpose.msra.mxu0 0.0
    %4503 = vmatprep.subr.mxu0 0.0
    %4504 = vmatpush1.xpose.msra.mxu0 0.0
    %4505 = vmatprep.subr.mxu0 0.0
    %4506 = vmatpush1.xpose.msra.mxu0 0.0
    %4507 = vmatprep.subr.mxu0 0.0
    %4508 = vmatpush1.xpose.msra.mxu0 0.0
    %4509 = vmatprep.subr.mxu0 0.0
    %4510 = vmatpush1.xpose.msra.mxu0 0.0
    %4511 = vmatprep.subr.mxu0 0.0
    %4512 = vmatpush1.xpose.msra.mxu0 0.0
    %4513 = vmatprep.subr.mxu0 0.0
    %4514 = vmatpush1.xpose.msra.mxu0 0.0
    %4515 = vmatprep.subr.mxu0 0.0
    %4516 = vmatpush1.xpose.msra.mxu0 0.0
    %4517 = vmatprep.subr.mxu0 0.0
    %4518 = vmatpush1.xpose.msra.mxu0 0.0
    %4519 = vmatprep.subr.mxu0 0.0
    %4520 = vmatpush1.xpose.msra.mxu0 0.0
    %4521 = vmatprep.subr.mxu0 0.0
    %4522 = vmatpush1.xpose.msra.mxu0 0.0
    %4523 = vmatprep.subr.mxu0 0.0
    %v4524 = vand.u32 %v4406, 4294901760
    %v4525 = vsub.f32 %v4406, %v4524
    %v4526 = vand.u32 %v4525, 4294901760
    %v4527 = vsub.f32 %v4525, %v4526
    %v4528 = vand.u32 %v4527, 4294901760
    %4529 = vmatpush1.xpose.msra.mxu0 %v4528
    %4530 = vmatprep.subr.mxu0 0.0
    %v4531 = vand.u32 %v4404, 4294901760
    %v4532 = vsub.f32 %v4404, %v4531
    %v4533 = vand.u32 %v4532, 4294901760
    %v4534 = vsub.f32 %v4532, %v4533
    %v4535 = vand.u32 %v4534, 4294901760
    %4536 = vmatpush1.xpose.msra.mxu0 %v4535
    %4537 = vmatprep.subr.mxu0 0.0
    %4538 = vmatpush2.xpose.msra.mxu0 0.0
    %4539 = vmatprep.subr.mxu0 0.0
    %4540 = vmatpush2.xpose.msra.mxu0 0.0
    %4541 = vmatprep.subr.mxu0 0.0
    %4542 = vmatpush2.xpose.msra.mxu0 0.0
    %4543 = vmatprep.subr.mxu0 0.0
    %4544 = vmatpush2.xpose.msra.mxu0 0.0
    %4545 = vmatprep.subr.mxu0 0.0
    %4546 = vmatpush2.xpose.msra.mxu0 0.0
    %4547 = vmatprep.subr.mxu0 0.0
    %4548 = vmatpush2.xpose.msra.mxu0 0.0
    %4549 = vmatprep.subr.mxu0 0.0
    %4550 = vmatpush2.xpose.msra.mxu0 0.0
    %4551 = vmatprep.subr.mxu0 0.0
    %4552 = vmatpush2.xpose.msra.mxu0 0.0
    %4553 = vmatprep.subr.mxu0 0.0
    %4554 = vmatpush2.xpose.msra.mxu0 0.0
    %4555 = vmatprep.subr.mxu0 0.0
    %4556 = vmatpush2.xpose.msra.mxu0 0.0
    %4557 = vmatprep.subr.mxu0 0.0
    %4558 = vmatpush2.xpose.msra.mxu0 0.0
    %4559 = vmatprep.subr.mxu0 0.0
    %4560 = vmatpush2.xpose.msra.mxu0 0.0
    %4561 = vmatprep.subr.mxu0 0.0
    %4562 = vmatpush2.xpose.msra.mxu0 0.0
    %4563 = vmatprep.subr.mxu0 0.0
    %4564 = vmatpush2.xpose.msra.mxu0 0.0
    %4565 = vmatprep.subr.mxu0 0.0
    %4566 = vmatpush2.xpose.msra.mxu0 0.0
    %4567 = vmatprep.subr.mxu0 0.0
    %4568 = vmatpush2.xpose.msra.mxu0 0.0
    %4569 = vmatprep.mubr.f32.mxu0 0.0
    %v4570 = vand.u32 %v4400, 4294901760
    %4571 = vmatmul.mubr.f32.gmra.mxu0 %v4570
    %v4572 = vpop.f32.mrf.mxu0
    %v4573 = vadd.f32 %v4482, %v4572
    %v4574 = vpop.f32.mrf.mxu0
    %4575 = vmatprep.mubr.f32.mxu0 0.0
    %v4576 = vand.u32 %v4402, 4294901760
    %4577 = vmatmul.mubr.f32.gmra.mxu0 %v4576
    %v4578 = vpop.f32.mrf.mxu0
    %v4579 = vadd.f32 %v4492, %v4578
    %v4580 = vpop.f32.mrf.mxu0
    %4581 = vdwg.mxu0
    %4582 = vmatprep.subr.mxu0 0.0
    %4583 = vmatpush1.xpose.msra.mxu0 0.0
    %4584 = vmatprep.subr.mxu0 0.0
    %4585 = vmatpush1.xpose.msra.mxu0 0.0
    %4586 = vmatprep.subr.mxu0 0.0
    %4587 = vmatpush1.xpose.msra.mxu0 0.0
    %4588 = vmatprep.subr.mxu0 0.0
    %4589 = vmatpush1.xpose.msra.mxu0 0.0
    %4590 = vmatprep.subr.mxu0 0.0
    %4591 = vmatpush1.xpose.msra.mxu0 0.0
    %4592 = vmatprep.subr.mxu0 0.0
    %4593 = vmatpush1.xpose.msra.mxu0 0.0
    %4594 = vmatprep.subr.mxu0 0.0
    %4595 = vmatpush1.xpose.msra.mxu0 0.0
    %4596 = vmatprep.subr.mxu0 0.0
    %4597 = vmatpush1.xpose.msra.mxu0 0.0
    %4598 = vmatprep.subr.mxu0 0.0
    %4599 = vmatpush1.xpose.msra.mxu0 0.0
    %4600 = vmatprep.subr.mxu0 0.0
    %4601 = vmatpush1.xpose.msra.mxu0 0.0
    %4602 = vmatprep.subr.mxu0 0.0
    %4603 = vmatpush1.xpose.msra.mxu0 0.0
    %4604 = vmatprep.subr.mxu0 0.0
    %4605 = vmatpush1.xpose.msra.mxu0 0.0
    %4606 = vmatprep.subr.mxu0 0.0
    %4607 = vmatpush1.xpose.msra.mxu0 0.0
    %4608 = vmatprep.subr.mxu0 0.0
    %4609 = vmatpush1.xpose.msra.mxu0 0.0
    %4610 = vmatprep.subr.mxu0 0.0
    %v4611 = vand.u32 %v4406, 4294901760
    %v4612 = vsub.f32 %v4406, %v4611
    %4613 = vmatpush1.xpose.msra.mxu0 %v4612
    %4614 = vmatprep.subr.mxu0 0.0
    %v4615 = vand.u32 %v4404, 4294901760
    %v4616 = vsub.f32 %v4404, %v4615
    %4617 = vmatpush1.xpose.msra.mxu0 %v4616
    %4618 = vmatprep.subr.mxu0 0.0
    %4619 = vmatpush2.xpose.msra.mxu0 0.0
    %4620 = vmatprep.subr.mxu0 0.0
    %4621 = vmatpush2.xpose.msra.mxu0 0.0
    %4622 = vmatprep.subr.mxu0 0.0
    %4623 = vmatpush2.xpose.msra.mxu0 0.0
    %4624 = vmatprep.subr.mxu0 0.0
    %4625 = vmatpush2.xpose.msra.mxu0 0.0
    %4626 = vmatprep.subr.mxu0 0.0
    %4627 = vmatpush2.xpose.msra.mxu0 0.0
    %4628 = vmatprep.subr.mxu0 0.0
    %4629 = vmatpush2.xpose.msra.mxu0 0.0
    %4630 = vmatprep.subr.mxu0 0.0
    %4631 = vmatpush2.xpose.msra.mxu0 0.0
    %4632 = vmatprep.subr.mxu0 0.0
    %4633 = vmatpush2.xpose.msra.mxu0 0.0
    %4634 = vmatprep.subr.mxu0 0.0
    %4635 = vmatpush2.xpose.msra.mxu0 0.0
    %4636 = vmatprep.subr.mxu0 0.0
    %4637 = vmatpush2.xpose.msra.mxu0 0.0
    %4638 = vmatprep.subr.mxu0 0.0
    %4639 = vmatpush2.xpose.msra.mxu0 0.0
    %4640 = vmatprep.subr.mxu0 0.0
    %4641 = vmatpush2.xpose.msra.mxu0 0.0
    %4642 = vmatprep.subr.mxu0 0.0
    %4643 = vmatpush2.xpose.msra.mxu0 0.0
    %4644 = vmatprep.subr.mxu0 0.0
    %4645 = vmatpush2.xpose.msra.mxu0 0.0
    %4646 = vmatprep.subr.mxu0 0.0
    %4647 = vmatpush2.xpose.msra.mxu0 0.0
    %4648 = vmatprep.subr.mxu0 0.0
    %4649 = vmatpush2.xpose.msra.mxu0 0.0
    %4650 = vmatprep.mubr.f32.mxu0 0.0
    %v4651 = vand.u32 %v4400, 4294901760
    %v4652 = vsub.f32 %v4400, %v4651
    %4653 = vmatmul.mubr.f32.gmra.mxu0 %v4652
    %v4654 = vpop.f32.mrf.mxu0
    %v4655 = vadd.f32 %v4573, %v4654
    %v4656 = vpop.f32.mrf.mxu0
    %4657 = vmatprep.mubr.f32.mxu0 0.0
    %v4658 = vand.u32 %v4402, 4294901760
    %v4659 = vsub.f32 %v4402, %v4658
    %4660 = vmatmul.mubr.f32.gmra.mxu0 %v4659
    %v4661 = vpop.f32.mrf.mxu0
    %v4662 = vadd.f32 %v4579, %v4661
    %v4663 = vpop.f32.mrf.mxu0
    %4664 = vdwg.mxu0
    %4665 = vmatprep.subr.mxu0 0.0
    %4666 = vmatpush1.xpose.msra.mxu0 0.0
    %4667 = vmatprep.subr.mxu0 0.0
    %4668 = vmatpush1.xpose.msra.mxu0 0.0
    %4669 = vmatprep.subr.mxu0 0.0
    %4670 = vmatpush1.xpose.msra.mxu0 0.0
    %4671 = vmatprep.subr.mxu0 0.0
    %4672 = vmatpush1.xpose.msra.mxu0 0.0
    %4673 = vmatprep.subr.mxu0 0.0
    %4674 = vmatpush1.xpose.msra.mxu0 0.0
    %4675 = vmatprep.subr.mxu0 0.0
    %4676 = vmatpush1.xpose.msra.mxu0 0.0
    %4677 = vmatprep.subr.mxu0 0.0
    %4678 = vmatpush1.xpose.msra.mxu0 0.0
    %4679 = vmatprep.subr.mxu0 0.0
    %4680 = vmatpush1.xpose.msra.mxu0 0.0
    %4681 = vmatprep.subr.mxu0 0.0
    %4682 = vmatpush1.xpose.msra.mxu0 0.0
    %4683 = vmatprep.subr.mxu0 0.0
    %4684 = vmatpush1.xpose.msra.mxu0 0.0
    %4685 = vmatprep.subr.mxu0 0.0
    %4686 = vmatpush1.xpose.msra.mxu0 0.0
    %4687 = vmatprep.subr.mxu0 0.0
    %4688 = vmatpush1.xpose.msra.mxu0 0.0
    %4689 = vmatprep.subr.mxu0 0.0
    %4690 = vmatpush1.xpose.msra.mxu0 0.0
    %4691 = vmatprep.subr.mxu0 0.0
    %4692 = vmatpush1.xpose.msra.mxu0 0.0
    %4693 = vmatprep.subr.mxu0 0.0
    %v4694 = vand.u32 %v4406, 4294901760
    %4695 = vmatpush1.xpose.msra.mxu0 %v4694
    %4696 = vmatprep.subr.mxu0 0.0
    %v4697 = vand.u32 %v4404, 4294901760
    %4698 = vmatpush1.xpose.msra.mxu0 %v4697
    %4699 = vmatprep.subr.mxu0 0.0
    %4700 = vmatpush2.xpose.msra.mxu0 0.0
    %4701 = vmatprep.subr.mxu0 0.0
    %4702 = vmatpush2.xpose.msra.mxu0 0.0
    %4703 = vmatprep.subr.mxu0 0.0
    %4704 = vmatpush2.xpose.msra.mxu0 0.0
    %4705 = vmatprep.subr.mxu0 0.0
    %4706 = vmatpush2.xpose.msra.mxu0 0.0
    %4707 = vmatprep.subr.mxu0 0.0
    %4708 = vmatpush2.xpose.msra.mxu0 0.0
    %4709 = vmatprep.subr.mxu0 0.0
    %4710 = vmatpush2.xpose.msra.mxu0 0.0
    %4711 = vmatprep.subr.mxu0 0.0
    %4712 = vmatpush2.xpose.msra.mxu0 0.0
    %4713 = vmatprep.subr.mxu0 0.0
    %4714 = vmatpush2.xpose.msra.mxu0 0.0
    %4715 = vmatprep.subr.mxu0 0.0
    %4716 = vmatpush2.xpose.msra.mxu0 0.0
    %4717 = vmatprep.subr.mxu0 0.0
    %4718 = vmatpush2.xpose.msra.mxu0 0.0
    %4719 = vmatprep.subr.mxu0 0.0
    %4720 = vmatpush2.xpose.msra.mxu0 0.0
    %4721 = vmatprep.subr.mxu0 0.0
    %4722 = vmatpush2.xpose.msra.mxu0 0.0
    %4723 = vmatprep.subr.mxu0 0.0
    %4724 = vmatpush2.xpose.msra.mxu0 0.0
    %4725 = vmatprep.subr.mxu0 0.0
    %4726 = vmatpush2.xpose.msra.mxu0 0.0
    %4727 = vmatprep.subr.mxu0 0.0
    %4728 = vmatpush2.xpose.msra.mxu0 0.0
    %4729 = vmatprep.subr.mxu0 0.0
    %4730 = vmatpush2.xpose.msra.mxu0 0.0
    %4731 = vmatprep.mubr.f32.mxu0 0.0
    %v4732 = vand.u32 %v4400, 4294901760
    %v4733 = vsub.f32 %v4400, %v4732
    %v4734 = vand.u32 %v4733, 4294901760
    %4735 = vmatmul.mubr.f32.gmra.mxu0 %v4734
    %v4736 = vpop.f32.mrf.mxu0
    %v4737 = vadd.f32 %v4655, %v4736
    %v4738 = vpop.f32.mrf.mxu0
    %4739 = vmatprep.mubr.f32.mxu0 0.0
    %v4740 = vand.u32 %v4402, 4294901760
    %v4741 = vsub.f32 %v4402, %v4740
    %v4742 = vand.u32 %v4741, 4294901760
    %4743 = vmatmul.mubr.f32.gmra.mxu0 %v4742
    %v4744 = vpop.f32.mrf.mxu0
    %v4745 = vadd.f32 %v4662, %v4744
    %v4746 = vpop.f32.mrf.mxu0
    %4747 = vdwg.mxu0
    %4748 = vmatprep.subr.mxu0 0.0
    %4749 = vmatpush1.xpose.msra.mxu0 0.0
    %4750 = vmatprep.subr.mxu0 0.0
    %4751 = vmatpush1.xpose.msra.mxu0 0.0
    %4752 = vmatprep.subr.mxu0 0.0
    %4753 = vmatpush1.xpose.msra.mxu0 0.0
    %4754 = vmatprep.subr.mxu0 0.0
    %4755 = vmatpush1.xpose.msra.mxu0 0.0
    %4756 = vmatprep.subr.mxu0 0.0
    %4757 = vmatpush1.xpose.msra.mxu0 0.0
    %4758 = vmatprep.subr.mxu0 0.0
    %4759 = vmatpush1.xpose.msra.mxu0 0.0
    %4760 = vmatprep.subr.mxu0 0.0
    %4761 = vmatpush1.xpose.msra.mxu0 0.0
    %4762 = vmatprep.subr.mxu0 0.0
    %4763 = vmatpush1.xpose.msra.mxu0 0.0
    %4764 = vmatprep.subr.mxu0 0.0
    %4765 = vmatpush1.xpose.msra.mxu0 0.0
    %4766 = vmatprep.subr.mxu0 0.0
    %4767 = vmatpush1.xpose.msra.mxu0 0.0
    %4768 = vmatprep.subr.mxu0 0.0
    %4769 = vmatpush1.xpose.msra.mxu0 0.0
    %4770 = vmatprep.subr.mxu0 0.0
    %4771 = vmatpush1.xpose.msra.mxu0 0.0
    %4772 = vmatprep.subr.mxu0 0.0
    %4773 = vmatpush1.xpose.msra.mxu0 0.0
    %4774 = vmatprep.subr.mxu0 0.0
    %4775 = vmatpush1.xpose.msra.mxu0 0.0
    %4776 = vmatprep.subr.mxu0 0.0
    %v4777 = vand.u32 %v4406, 4294901760
    %v4778 = vsub.f32 %v4406, %v4777
    %v4779 = vand.u32 %v4778, 4294901760
    %4780 = vmatpush1.xpose.msra.mxu0 %v4779
    %4781 = vmatprep.subr.mxu0 0.0
    %v4782 = vand.u32 %v4404, 4294901760
    %v4783 = vsub.f32 %v4404, %v4782
    %v4784 = vand.u32 %v4783, 4294901760
    %4785 = vmatpush1.xpose.msra.mxu0 %v4784
    %4786 = vmatprep.subr.mxu0 0.0
    %4787 = vmatpush2.xpose.msra.mxu0 0.0
    %4788 = vmatprep.subr.mxu0 0.0
    %4789 = vmatpush2.xpose.msra.mxu0 0.0
    %4790 = vmatprep.subr.mxu0 0.0
    %4791 = vmatpush2.xpose.msra.mxu0 0.0
    %4792 = vmatprep.subr.mxu0 0.0
    %4793 = vmatpush2.xpose.msra.mxu0 0.0
    %4794 = vmatprep.subr.mxu0 0.0
    %4795 = vmatpush2.xpose.msra.mxu0 0.0
    %4796 = vmatprep.subr.mxu0 0.0
    %4797 = vmatpush2.xpose.msra.mxu0 0.0
    %4798 = vmatprep.subr.mxu0 0.0
    %4799 = vmatpush2.xpose.msra.mxu0 0.0
    %4800 = vmatprep.subr.mxu0 0.0
    %4801 = vmatpush2.xpose.msra.mxu0 0.0
    %4802 = vmatprep.subr.mxu0 0.0
    %4803 = vmatpush2.xpose.msra.mxu0 0.0
    %4804 = vmatprep.subr.mxu0 0.0
    %4805 = vmatpush2.xpose.msra.mxu0 0.0
    %4806 = vmatprep.subr.mxu0 0.0
    %4807 = vmatpush2.xpose.msra.mxu0 0.0
    %4808 = vmatprep.subr.mxu0 0.0
    %4809 = vmatpush2.xpose.msra.mxu0 0.0
    %4810 = vmatprep.subr.mxu0 0.0
    %4811 = vmatpush2.xpose.msra.mxu0 0.0
    %4812 = vmatprep.subr.mxu0 0.0
    %4813 = vmatpush2.xpose.msra.mxu0 0.0
    %4814 = vmatprep.subr.mxu0 0.0
    %4815 = vmatpush2.xpose.msra.mxu0 0.0
    %4816 = vmatprep.subr.mxu0 0.0
    %4817 = vmatpush2.xpose.msra.mxu0 0.0
    %4818 = vmatprep.mubr.f32.mxu0 0.0
    %v4819 = vand.u32 %v4400, 4294901760
    %4820 = vmatmul.mubr.f32.gmra.mxu0 %v4819
    %v4821 = vpop.f32.mrf.mxu0
    %v4822 = vadd.f32 %v4737, %v4821
    %v4823 = vpop.f32.mrf.mxu0
    %4824 = vmatprep.mubr.f32.mxu0 0.0
    %v4825 = vand.u32 %v4402, 4294901760
    %4826 = vmatmul.mubr.f32.gmra.mxu0 %v4825
    %v4827 = vpop.f32.mrf.mxu0
    %v4828 = vadd.f32 %v4745, %v4827
    %v4829 = vpop.f32.mrf.mxu0
    %4830 = vdwg.mxu0
    %4831 = vmatprep.subr.mxu0 0.0
    %4832 = vmatpush1.xpose.msra.mxu0 0.0
    %4833 = vmatprep.subr.mxu0 0.0
    %4834 = vmatpush1.xpose.msra.mxu0 0.0
    %4835 = vmatprep.subr.mxu0 0.0
    %4836 = vmatpush1.xpose.msra.mxu0 0.0
    %4837 = vmatprep.subr.mxu0 0.0
    %4838 = vmatpush1.xpose.msra.mxu0 0.0
    %4839 = vmatprep.subr.mxu0 0.0
    %4840 = vmatpush1.xpose.msra.mxu0 0.0
    %4841 = vmatprep.subr.mxu0 0.0
    %4842 = vmatpush1.xpose.msra.mxu0 0.0
    %4843 = vmatprep.subr.mxu0 0.0
    %4844 = vmatpush1.xpose.msra.mxu0 0.0
    %4845 = vmatprep.subr.mxu0 0.0
    %4846 = vmatpush1.xpose.msra.mxu0 0.0
    %4847 = vmatprep.subr.mxu0 0.0
    %4848 = vmatpush1.xpose.msra.mxu0 0.0
    %4849 = vmatprep.subr.mxu0 0.0
    %4850 = vmatpush1.xpose.msra.mxu0 0.0
    %4851 = vmatprep.subr.mxu0 0.0
    %4852 = vmatpush1.xpose.msra.mxu0 0.0
    %4853 = vmatprep.subr.mxu0 0.0
    %4854 = vmatpush1.xpose.msra.mxu0 0.0
    %4855 = vmatprep.subr.mxu0 0.0
    %4856 = vmatpush1.xpose.msra.mxu0 0.0
    %4857 = vmatprep.subr.mxu0 0.0
    %4858 = vmatpush1.xpose.msra.mxu0 0.0
    %4859 = vmatprep.subr.mxu0 0.0
    %v4860 = vand.u32 %v4406, 4294901760
    %4861 = vmatpush1.xpose.msra.mxu0 %v4860
    %4862 = vmatprep.subr.mxu0 0.0
    %v4863 = vand.u32 %v4404, 4294901760
    %4864 = vmatpush1.xpose.msra.mxu0 %v4863
    %4865 = vmatprep.subr.mxu0 0.0
    %4866 = vmatpush2.xpose.msra.mxu0 0.0
    %4867 = vmatprep.subr.mxu0 0.0
    %4868 = vmatpush2.xpose.msra.mxu0 0.0
    %4869 = vmatprep.subr.mxu0 0.0
    %4870 = vmatpush2.xpose.msra.mxu0 0.0
    %4871 = vmatprep.subr.mxu0 0.0
    %4872 = vmatpush2.xpose.msra.mxu0 0.0
    %4873 = vmatprep.subr.mxu0 0.0
    %4874 = vmatpush2.xpose.msra.mxu0 0.0
    %4875 = vmatprep.subr.mxu0 0.0
    %4876 = vmatpush2.xpose.msra.mxu0 0.0
    %4877 = vmatprep.subr.mxu0 0.0
    %4878 = vmatpush2.xpose.msra.mxu0 0.0
    %4879 = vmatprep.subr.mxu0 0.0
    %4880 = vmatpush2.xpose.msra.mxu0 0.0
    %4881 = vmatprep.subr.mxu0 0.0
    %4882 = vmatpush2.xpose.msra.mxu0 0.0
    %4883 = vmatprep.subr.mxu0 0.0
    %4884 = vmatpush2.xpose.msra.mxu0 0.0
    %4885 = vmatprep.subr.mxu0 0.0
    %4886 = vmatpush2.xpose.msra.mxu0 0.0
    %4887 = vmatprep.subr.mxu0 0.0
    %4888 = vmatpush2.xpose.msra.mxu0 0.0
    %4889 = vmatprep.subr.mxu0 0.0
    %4890 = vmatpush2.xpose.msra.mxu0 0.0
    %4891 = vmatprep.subr.mxu0 0.0
    %4892 = vmatpush2.xpose.msra.mxu0 0.0
    %4893 = vmatprep.subr.mxu0 0.0
    %4894 = vmatpush2.xpose.msra.mxu0 0.0
    %4895 = vmatprep.subr.mxu0 0.0
    %4896 = vmatpush2.xpose.msra.mxu0 0.0
    %4897 = vmatprep.mubr.f32.mxu0 0.0
    %v4898 = vand.u32 %v4400, 4294901760
    %4899 = vmatmul.mubr.f32.gmra.mxu0 %v4898
    %v4900 = vpop.f32.mrf.mxu0
    %v4901 = vadd.f32 %v4822, %v4900
    %v4902 = vpop.f32.mrf.mxu0
    %4903 = vmatprep.mubr.f32.mxu0 0.0
    %v4904 = vand.u32 %v4402, 4294901760
    %4905 = vmatmul.mubr.f32.gmra.mxu0 %v4904
    %v4906 = vpop.f32.mrf.mxu0
    %v4907 = vadd.f32 %v4828, %v4906
    %v4908 = vpop.f32.mrf.mxu0
    %4909 = vdwg.mxu0
    %v4910 = vsel %vm1751, %v4901, -inf
    %4911 = vmax.xlane.f32.xlu0 %v4910
    %v4912 = vpop.xlane.xlu0 %4911
    %v4913 = vsel %vm1751, %v4907, -inf
    %4914 = vmax.xlane.f32.xlu0 %v4913
    %v4915 = vpop.xlane.xlu0 %4914
    %v4916 = vsub.f32 %v4901, %v4912
    %v4917 = vsub.f32 %v4907, %v4915
    %v4918 = vmul.f32 %v4916, 1.442695
    %v4919 = vpow.pop %v4918
    %v4920 = vmul.f32 %v4917, 1.442695
    %v4921 = vpow.pop %v4920
    %v4922 = vsel %vm1751, %v4919, 0.0
    %4923 = vadd.xlane.f32.xlu0 %v4922
    %v4924 = vpop.xlane.xlu0 %4923
    %v4925 = vsel %vm1751, %v4921, 0.0
    %4926 = vadd.xlane.f32.xlu0 %v4925
    %v4927 = vpop.xlane.xlu0 %4926
    %v4928 = vrcp.pop %v4924
    %v4929 = vrcp.pop %v4927
    %v4930 = vmul.f32 %v4919, %v4928
    %v4931 = vmul.f32 %v4921, %v4929
    %4932 = vrot.lane.b32.xlu0 %v1178, 104
    %v4933 = vpop.permute.xlu0 %4932
    %4934 = vrot.lane.b32.xlu0 %v1184, 104
    %v4935 = vpop.permute.xlu0 %4934
    %v4939 = vsel %vm1751, %v4930, 0
    %v4942 = vsel %vm1751, %v4931, 0
    %4944 = vmatprep.subr.mxu0 0.0
    %4945 = vmatpush1.msra.mxu0 0.0
    %4946 = vmatprep.subr.mxu0 0.0
    %4947 = vmatpush1.msra.mxu0 0.0
    %4948 = vmatprep.subr.mxu0 0.0
    %4949 = vmatpush1.msra.mxu0 0.0
    %4950 = vmatprep.subr.mxu0 0.0
    %4951 = vmatpush1.msra.mxu0 0.0
    %4952 = vmatprep.subr.mxu0 0.0
    %4953 = vmatpush1.msra.mxu0 0.0
    %4954 = vmatprep.subr.mxu0 0.0
    %4955 = vmatpush1.msra.mxu0 0.0
    %4956 = vmatprep.subr.mxu0 0.0
    %4957 = vmatpush1.msra.mxu0 0.0
    %4958 = vmatprep.subr.mxu0 0.0
    %4959 = vmatpush1.msra.mxu0 0.0
    %4960 = vmatprep.subr.mxu0 0.0
    %4961 = vmatpush1.msra.mxu0 0.0
    %4962 = vmatprep.subr.mxu0 0.0
    %4963 = vmatpush1.msra.mxu0 0.0
    %4964 = vmatprep.subr.mxu0 0.0
    %4965 = vmatpush1.msra.mxu0 0.0
    %4966 = vmatprep.subr.mxu0 0.0
    %4967 = vmatpush1.msra.mxu0 0.0
    %4968 = vmatprep.subr.mxu0 0.0
    %4969 = vmatpush1.msra.mxu0 0.0
    %4970 = vmatprep.subr.mxu0 0.0
    %4971 = vmatpush1.msra.mxu0 0.0
    %4972 = vmatprep.subr.mxu0 0.0
    %v4973 = vand.u32 %v4935, 4294901760
    %4974 = vmatpush1.msra.mxu0 %v4973
    %4975 = vmatprep.subr.mxu0 0.0
    %v4976 = vand.u32 %v4933, 4294901760
    %4977 = vmatpush1.msra.mxu0 %v4976
    %4978 = vmatprep.subr.mxu0 0.0
    %4979 = vmatpush2.msra.mxu0 0.0
    %4980 = vmatprep.subr.mxu0 0.0
    %4981 = vmatpush2.msra.mxu0 0.0
    %4982 = vmatprep.subr.mxu0 0.0
    %4983 = vmatpush2.msra.mxu0 0.0
    %4984 = vmatprep.subr.mxu0 0.0
    %4985 = vmatpush2.msra.mxu0 0.0
    %4986 = vmatprep.subr.mxu0 0.0
    %4987 = vmatpush2.msra.mxu0 0.0
    %4988 = vmatprep.subr.mxu0 0.0
    %4989 = vmatpush2.msra.mxu0 0.0
    %4990 = vmatprep.subr.mxu0 0.0
    %4991 = vmatpush2.msra.mxu0 0.0
    %4992 = vmatprep.subr.mxu0 0.0
    %4993 = vmatpush2.msra.mxu0 0.0
    %4994 = vmatprep.subr.mxu0 0.0
    %4995 = vmatpush2.msra.mxu0 0.0
    %4996 = vmatprep.subr.mxu0 0.0
    %4997 = vmatpush2.msra.mxu0 0.0
    %4998 = vmatprep.subr.mxu0 0.0
    %4999 = vmatpush2.msra.mxu0 0.0
    %5000 = vmatprep.subr.mxu0 0.0
    %5001 = vmatpush2.msra.mxu0 0.0
    %5002 = vmatprep.subr.mxu0 0.0
    %5003 = vmatpush2.msra.mxu0 0.0
    %5004 = vmatprep.subr.mxu0 0.0
    %5005 = vmatpush2.msra.mxu0 0.0
    %5006 = vmatprep.subr.mxu0 0.0
    %5007 = vmatpush2.msra.mxu0 0.0
    %5008 = vmatprep.subr.mxu0 0.0
    %5009 = vmatpush2.msra.mxu0 0.0
    %5010 = vmatprep.mubr.f32.mxu0 0.0
    %v5011 = vand.u32 %v4939, 4294901760
    %v5012 = vsub.f32 %v4939, %v5011
    %v5013 = vand.u32 %v5012, 4294901760
    %v5014 = vsub.f32 %v5012, %v5013
    %v5015 = vand.u32 %v5014, 4294901760
    %5016 = vmatmul.mubr.f32.gmra.mxu0 %v5015
    %v5017 = vpop.f32.mrf.mxu0
    %v5018 = vadd.f32 0.0, %v5017
    %v5019 = vpop.f32.mrf.mxu0
    %5020 = vmatprep.mubr.f32.mxu0 0.0
    %v5021 = vand.u32 %v4942, 4294901760
    %v5022 = vsub.f32 %v4942, %v5021
    %v5023 = vand.u32 %v5022, 4294901760
    %v5024 = vsub.f32 %v5022, %v5023
    %v5025 = vand.u32 %v5024, 4294901760
    %5026 = vmatmul.mubr.f32.gmra.mxu0 %v5025
    %v5027 = vpop.f32.mrf.mxu0
    %v5028 = vadd.f32 0.0, %v5027
    %v5029 = vpop.f32.mrf.mxu0
    %5030 = vdwg.mxu0
    %5031 = vmatprep.subr.mxu0 0.0
    %5032 = vmatpush1.msra.mxu0 0.0
    %5033 = vmatprep.subr.mxu0 0.0
    %5034 = vmatpush1.msra.mxu0 0.0
    %5035 = vmatprep.subr.mxu0 0.0
    %5036 = vmatpush1.msra.mxu0 0.0
    %5037 = vmatprep.subr.mxu0 0.0
    %5038 = vmatpush1.msra.mxu0 0.0
    %5039 = vmatprep.subr.mxu0 0.0
    %5040 = vmatpush1.msra.mxu0 0.0
    %5041 = vmatprep.subr.mxu0 0.0
    %5042 = vmatpush1.msra.mxu0 0.0
    %5043 = vmatprep.subr.mxu0 0.0
    %5044 = vmatpush1.msra.mxu0 0.0
    %5045 = vmatprep.subr.mxu0 0.0
    %5046 = vmatpush1.msra.mxu0 0.0
    %5047 = vmatprep.subr.mxu0 0.0
    %5048 = vmatpush1.msra.mxu0 0.0
    %5049 = vmatprep.subr.mxu0 0.0
    %5050 = vmatpush1.msra.mxu0 0.0
    %5051 = vmatprep.subr.mxu0 0.0
    %5052 = vmatpush1.msra.mxu0 0.0
    %5053 = vmatprep.subr.mxu0 0.0
    %5054 = vmatpush1.msra.mxu0 0.0
    %5055 = vmatprep.subr.mxu0 0.0
    %5056 = vmatpush1.msra.mxu0 0.0
    %5057 = vmatprep.subr.mxu0 0.0
    %5058 = vmatpush1.msra.mxu0 0.0
    %5059 = vmatprep.subr.mxu0 0.0
    %v5060 = vand.u32 %v4935, 4294901760
    %v5061 = vsub.f32 %v4935, %v5060
    %v5062 = vand.u32 %v5061, 4294901760
    %v5063 = vsub.f32 %v5061, %v5062
    %v5064 = vand.u32 %v5063, 4294901760
    %5065 = vmatpush1.msra.mxu0 %v5064
    %5066 = vmatprep.subr.mxu0 0.0
    %v5067 = vand.u32 %v4933, 4294901760
    %v5068 = vsub.f32 %v4933, %v5067
    %v5069 = vand.u32 %v5068, 4294901760
    %v5070 = vsub.f32 %v5068, %v5069
    %v5071 = vand.u32 %v5070, 4294901760
    %5072 = vmatpush1.msra.mxu0 %v5071
    %5073 = vmatprep.subr.mxu0 0.0
    %5074 = vmatpush2.msra.mxu0 0.0
    %5075 = vmatprep.subr.mxu0 0.0
    %5076 = vmatpush2.msra.mxu0 0.0
    %5077 = vmatprep.subr.mxu0 0.0
    %5078 = vmatpush2.msra.mxu0 0.0
    %5079 = vmatprep.subr.mxu0 0.0
    %5080 = vmatpush2.msra.mxu0 0.0
    %5081 = vmatprep.subr.mxu0 0.0
    %5082 = vmatpush2.msra.mxu0 0.0
    %5083 = vmatprep.subr.mxu0 0.0
    %5084 = vmatpush2.msra.mxu0 0.0
    %5085 = vmatprep.subr.mxu0 0.0
    %5086 = vmatpush2.msra.mxu0 0.0
    %5087 = vmatprep.subr.mxu0 0.0
    %5088 = vmatpush2.msra.mxu0 0.0
    %5089 = vmatprep.subr.mxu0 0.0
    %5090 = vmatpush2.msra.mxu0 0.0
    %5091 = vmatprep.subr.mxu0 0.0
    %5092 = vmatpush2.msra.mxu0 0.0
    %5093 = vmatprep.subr.mxu0 0.0
    %5094 = vmatpush2.msra.mxu0 0.0
    %5095 = vmatprep.subr.mxu0 0.0
    %5096 = vmatpush2.msra.mxu0 0.0
    %5097 = vmatprep.subr.mxu0 0.0
    %5098 = vmatpush2.msra.mxu0 0.0
    %5099 = vmatprep.subr.mxu0 0.0
    %5100 = vmatpush2.msra.mxu0 0.0
    %5101 = vmatprep.subr.mxu0 0.0
    %5102 = vmatpush2.msra.mxu0 0.0
    %5103 = vmatprep.subr.mxu0 0.0
    %5104 = vmatpush2.msra.mxu0 0.0
    %5105 = vmatprep.mubr.f32.mxu0 0.0
    %v5106 = vand.u32 %v4939, 4294901760
    %5107 = vmatmul.mubr.f32.gmra.mxu0 %v5106
    %v5108 = vpop.f32.mrf.mxu0
    %v5109 = vadd.f32 %v5018, %v5108
    %v5110 = vpop.f32.mrf.mxu0
    %5111 = vmatprep.mubr.f32.mxu0 0.0
    %v5112 = vand.u32 %v4942, 4294901760
    %5113 = vmatmul.mubr.f32.gmra.mxu0 %v5112
    %v5114 = vpop.f32.mrf.mxu0
    %v5115 = vadd.f32 %v5028, %v5114
    %v5116 = vpop.f32.mrf.mxu0
    %5117 = vdwg.mxu0
    %5118 = vmatprep.subr.mxu0 0.0
    %5119 = vmatpush1.msra.mxu0 0.0
    %5120 = vmatprep.subr.mxu0 0.0
    %5121 = vmatpush1.msra.mxu0 0.0
    %5122 = vmatprep.subr.mxu0 0.0
    %5123 = vmatpush1.msra.mxu0 0.0
    %5124 = vmatprep.subr.mxu0 0.0
    %5125 = vmatpush1.msra.mxu0 0.0
    %5126 = vmatprep.subr.mxu0 0.0
    %5127 = vmatpush1.msra.mxu0 0.0
    %5128 = vmatprep.subr.mxu0 0.0
    %5129 = vmatpush1.msra.mxu0 0.0
    %5130 = vmatprep.subr.mxu0 0.0
    %5131 = vmatpush1.msra.mxu0 0.0
    %5132 = vmatprep.subr.mxu0 0.0
    %5133 = vmatpush1.msra.mxu0 0.0
    %5134 = vmatprep.subr.mxu0 0.0
    %5135 = vmatpush1.msra.mxu0 0.0
    %5136 = vmatprep.subr.mxu0 0.0
    %5137 = vmatpush1.msra.mxu0 0.0
    %5138 = vmatprep.subr.mxu0 0.0
    %5139 = vmatpush1.msra.mxu0 0.0
    %5140 = vmatprep.subr.mxu0 0.0
    %5141 = vmatpush1.msra.mxu0 0.0
    %5142 = vmatprep.subr.mxu0 0.0
    %5143 = vmatpush1.msra.mxu0 0.0
    %5144 = vmatprep.subr.mxu0 0.0
    %5145 = vmatpush1.msra.mxu0 0.0
    %5146 = vmatprep.subr.mxu0 0.0
    %v5147 = vand.u32 %v4935, 4294901760
    %v5148 = vsub.f32 %v4935, %v5147
    %5149 = vmatpush1.msra.mxu0 %v5148
    %5150 = vmatprep.subr.mxu0 0.0
    %v5151 = vand.u32 %v4933, 4294901760
    %v5152 = vsub.f32 %v4933, %v5151
    %5153 = vmatpush1.msra.mxu0 %v5152
    %5154 = vmatprep.subr.mxu0 0.0
    %5155 = vmatpush2.msra.mxu0 0.0
    %5156 = vmatprep.subr.mxu0 0.0
    %5157 = vmatpush2.msra.mxu0 0.0
    %5158 = vmatprep.subr.mxu0 0.0
    %5159 = vmatpush2.msra.mxu0 0.0
    %5160 = vmatprep.subr.mxu0 0.0
    %5161 = vmatpush2.msra.mxu0 0.0
    %5162 = vmatprep.subr.mxu0 0.0
    %5163 = vmatpush2.msra.mxu0 0.0
    %5164 = vmatprep.subr.mxu0 0.0
    %5165 = vmatpush2.msra.mxu0 0.0
    %5166 = vmatprep.subr.mxu0 0.0
    %5167 = vmatpush2.msra.mxu0 0.0
    %5168 = vmatprep.subr.mxu0 0.0
    %5169 = vmatpush2.msra.mxu0 0.0
    %5170 = vmatprep.subr.mxu0 0.0
    %5171 = vmatpush2.msra.mxu0 0.0
    %5172 = vmatprep.subr.mxu0 0.0
    %5173 = vmatpush2.msra.mxu0 0.0
    %5174 = vmatprep.subr.mxu0 0.0
    %5175 = vmatpush2.msra.mxu0 0.0
    %5176 = vmatprep.subr.mxu0 0.0
    %5177 = vmatpush2.msra.mxu0 0.0
    %5178 = vmatprep.subr.mxu0 0.0
    %5179 = vmatpush2.msra.mxu0 0.0
    %5180 = vmatprep.subr.mxu0 0.0
    %5181 = vmatpush2.msra.mxu0 0.0
    %5182 = vmatprep.subr.mxu0 0.0
    %5183 = vmatpush2.msra.mxu0 0.0
    %5184 = vmatprep.subr.mxu0 0.0
    %5185 = vmatpush2.msra.mxu0 0.0
    %5186 = vmatprep.mubr.f32.mxu0 0.0
    %v5187 = vand.u32 %v4939, 4294901760
    %v5188 = vsub.f32 %v4939, %v5187
    %5189 = vmatmul.mubr.f32.gmra.mxu0 %v5188
    %v5190 = vpop.f32.mrf.mxu0
    %v5191 = vadd.f32 %v5109, %v5190
    %v5192 = vpop.f32.mrf.mxu0
    %5193 = vmatprep.mubr.f32.mxu0 0.0
    %v5194 = vand.u32 %v4942, 4294901760
    %v5195 = vsub.f32 %v4942, %v5194
    %5196 = vmatmul.mubr.f32.gmra.mxu0 %v5195
    %v5197 = vpop.f32.mrf.mxu0
    %v5198 = vadd.f32 %v5115, %v5197
    %v5199 = vpop.f32.mrf.mxu0
    %5200 = vdwg.mxu0
    %5201 = vmatprep.subr.mxu0 0.0
    %5202 = vmatpush1.msra.mxu0 0.0
    %5203 = vmatprep.subr.mxu0 0.0
    %5204 = vmatpush1.msra.mxu0 0.0
    %5205 = vmatprep.subr.mxu0 0.0
    %5206 = vmatpush1.msra.mxu0 0.0
    %5207 = vmatprep.subr.mxu0 0.0
    %5208 = vmatpush1.msra.mxu0 0.0
    %5209 = vmatprep.subr.mxu0 0.0
    %5210 = vmatpush1.msra.mxu0 0.0
    %5211 = vmatprep.subr.mxu0 0.0
    %5212 = vmatpush1.msra.mxu0 0.0
    %5213 = vmatprep.subr.mxu0 0.0
    %5214 = vmatpush1.msra.mxu0 0.0
    %5215 = vmatprep.subr.mxu0 0.0
    %5216 = vmatpush1.msra.mxu0 0.0
    %5217 = vmatprep.subr.mxu0 0.0
    %5218 = vmatpush1.msra.mxu0 0.0
    %5219 = vmatprep.subr.mxu0 0.0
    %5220 = vmatpush1.msra.mxu0 0.0
    %5221 = vmatprep.subr.mxu0 0.0
    %5222 = vmatpush1.msra.mxu0 0.0
    %5223 = vmatprep.subr.mxu0 0.0
    %5224 = vmatpush1.msra.mxu0 0.0
    %5225 = vmatprep.subr.mxu0 0.0
    %5226 = vmatpush1.msra.mxu0 0.0
    %5227 = vmatprep.subr.mxu0 0.0
    %5228 = vmatpush1.msra.mxu0 0.0
    %5229 = vmatprep.subr.mxu0 0.0
    %v5230 = vand.u32 %v4935, 4294901760
    %5231 = vmatpush1.msra.mxu0 %v5230
    %5232 = vmatprep.subr.mxu0 0.0
    %v5233 = vand.u32 %v4933, 4294901760
    %5234 = vmatpush1.msra.mxu0 %v5233
    %5235 = vmatprep.subr.mxu0 0.0
    %5236 = vmatpush2.msra.mxu0 0.0
    %5237 = vmatprep.subr.mxu0 0.0
    %5238 = vmatpush2.msra.mxu0 0.0
    %5239 = vmatprep.subr.mxu0 0.0
    %5240 = vmatpush2.msra.mxu0 0.0
    %5241 = vmatprep.subr.mxu0 0.0
    %5242 = vmatpush2.msra.mxu0 0.0
    %5243 = vmatprep.subr.mxu0 0.0
    %5244 = vmatpush2.msra.mxu0 0.0
    %5245 = vmatprep.subr.mxu0 0.0
    %5246 = vmatpush2.msra.mxu0 0.0
    %5247 = vmatprep.subr.mxu0 0.0
    %5248 = vmatpush2.msra.mxu0 0.0
    %5249 = vmatprep.subr.mxu0 0.0
    %5250 = vmatpush2.msra.mxu0 0.0
    %5251 = vmatprep.subr.mxu0 0.0
    %5252 = vmatpush2.msra.mxu0 0.0
    %5253 = vmatprep.subr.mxu0 0.0
    %5254 = vmatpush2.msra.mxu0 0.0
    %5255 = vmatprep.subr.mxu0 0.0
    %5256 = vmatpush2.msra.mxu0 0.0
    %5257 = vmatprep.subr.mxu0 0.0
    %5258 = vmatpush2.msra.mxu0 0.0
    %5259 = vmatprep.subr.mxu0 0.0
    %5260 = vmatpush2.msra.mxu0 0.0
    %5261 = vmatprep.subr.mxu0 0.0
    %5262 = vmatpush2.msra.mxu0 0.0
    %5263 = vmatprep.subr.mxu0 0.0
    %5264 = vmatpush2.msra.mxu0 0.0
    %5265 = vmatprep.subr.mxu0 0.0
    %5266 = vmatpush2.msra.mxu0 0.0
    %5267 = vmatprep.mubr.f32.mxu0 0.0
    %v5268 = vand.u32 %v4939, 4294901760
    %v5269 = vsub.f32 %v4939, %v5268
    %v5270 = vand.u32 %v5269, 4294901760
    %5271 = vmatmul.mubr.f32.gmra.mxu0 %v5270
    %v5272 = vpop.f32.mrf.mxu0
    %v5273 = vadd.f32 %v5191, %v5272
    %v5274 = vpop.f32.mrf.mxu0
    %5275 = vmatprep.mubr.f32.mxu0 0.0
    %v5276 = vand.u32 %v4942, 4294901760
    %v5277 = vsub.f32 %v4942, %v5276
    %v5278 = vand.u32 %v5277, 4294901760
    %5279 = vmatmul.mubr.f32.gmra.mxu0 %v5278
    %v5280 = vpop.f32.mrf.mxu0
    %v5281 = vadd.f32 %v5198, %v5280
    %v5282 = vpop.f32.mrf.mxu0
    %5283 = vdwg.mxu0
    %5284 = vmatprep.subr.mxu0 0.0
    %5285 = vmatpush1.msra.mxu0 0.0
    %5286 = vmatprep.subr.mxu0 0.0
    %5287 = vmatpush1.msra.mxu0 0.0
    %5288 = vmatprep.subr.mxu0 0.0
    %5289 = vmatpush1.msra.mxu0 0.0
    %5290 = vmatprep.subr.mxu0 0.0
    %5291 = vmatpush1.msra.mxu0 0.0
    %5292 = vmatprep.subr.mxu0 0.0
    %5293 = vmatpush1.msra.mxu0 0.0
    %5294 = vmatprep.subr.mxu0 0.0
    %5295 = vmatpush1.msra.mxu0 0.0
    %5296 = vmatprep.subr.mxu0 0.0
    %5297 = vmatpush1.msra.mxu0 0.0
    %5298 = vmatprep.subr.mxu0 0.0
    %5299 = vmatpush1.msra.mxu0 0.0
    %5300 = vmatprep.subr.mxu0 0.0
    %5301 = vmatpush1.msra.mxu0 0.0
    %5302 = vmatprep.subr.mxu0 0.0
    %5303 = vmatpush1.msra.mxu0 0.0
    %5304 = vmatprep.subr.mxu0 0.0
    %5305 = vmatpush1.msra.mxu0 0.0
    %5306 = vmatprep.subr.mxu0 0.0
    %5307 = vmatpush1.msra.mxu0 0.0
    %5308 = vmatprep.subr.mxu0 0.0
    %5309 = vmatpush1.msra.mxu0 0.0
    %5310 = vmatprep.subr.mxu0 0.0
    %5311 = vmatpush1.msra.mxu0 0.0
    %5312 = vmatprep.subr.mxu0 0.0
    %v5313 = vand.u32 %v4935, 4294901760
    %v5314 = vsub.f32 %v4935, %v5313
    %v5315 = vand.u32 %v5314, 4294901760
    %5316 = vmatpush1.msra.mxu0 %v5315
    %5317 = vmatprep.subr.mxu0 0.0
    %v5318 = vand.u32 %v4933, 4294901760
    %v5319 = vsub.f32 %v4933, %v5318
    %v5320 = vand.u32 %v5319, 4294901760
    %5321 = vmatpush1.msra.mxu0 %v5320
    %5322 = vmatprep.subr.mxu0 0.0
    %5323 = vmatpush2.msra.mxu0 0.0
    %5324 = vmatprep.subr.mxu0 0.0
    %5325 = vmatpush2.msra.mxu0 0.0
    %5326 = vmatprep.subr.mxu0 0.0
    %5327 = vmatpush2.msra.mxu0 0.0
    %5328 = vmatprep.subr.mxu0 0.0
    %5329 = vmatpush2.msra.mxu0 0.0
    %5330 = vmatprep.subr.mxu0 0.0
    %5331 = vmatpush2.msra.mxu0 0.0
    %5332 = vmatprep.subr.mxu0 0.0
    %5333 = vmatpush2.msra.mxu0 0.0
    %5334 = vmatprep.subr.mxu0 0.0
    %5335 = vmatpush2.msra.mxu0 0.0
    %5336 = vmatprep.subr.mxu0 0.0
    %5337 = vmatpush2.msra.mxu0 0.0
    %5338 = vmatprep.subr.mxu0 0.0
    %5339 = vmatpush2.msra.mxu0 0.0
    %5340 = vmatprep.subr.mxu0 0.0
    %5341 = vmatpush2.msra.mxu0 0.0
    %5342 = vmatprep.subr.mxu0 0.0
    %5343 = vmatpush2.msra.mxu0 0.0
    %5344 = vmatprep.subr.mxu0 0.0
    %5345 = vmatpush2.msra.mxu0 0.0
    %5346 = vmatprep.subr.mxu0 0.0
    %5347 = vmatpush2.msra.mxu0 0.0
    %5348 = vmatprep.subr.mxu0 0.0
    %5349 = vmatpush2.msra.mxu0 0.0
    %5350 = vmatprep.subr.mxu0 0.0
    %5351 = vmatpush2.msra.mxu0 0.0
    %5352 = vmatprep.subr.mxu0 0.0
    %5353 = vmatpush2.msra.mxu0 0.0
    %5354 = vmatprep.mubr.f32.mxu0 0.0
    %v5355 = vand.u32 %v4939, 4294901760
    %5356 = vmatmul.mubr.f32.gmra.mxu0 %v5355
    %v5357 = vpop.f32.mrf.mxu0
    %v5358 = vadd.f32 %v5273, %v5357
    %v5359 = vpop.f32.mrf.mxu0
    %5360 = vmatprep.mubr.f32.mxu0 0.0
    %v5361 = vand.u32 %v4942, 4294901760
    %5362 = vmatmul.mubr.f32.gmra.mxu0 %v5361
    %v5363 = vpop.f32.mrf.mxu0
    %v5364 = vadd.f32 %v5281, %v5363
    %v5365 = vpop.f32.mrf.mxu0
    %5366 = vdwg.mxu0
    %5367 = vmatprep.subr.mxu0 0.0
    %5368 = vmatpush1.msra.mxu0 0.0
    %5369 = vmatprep.subr.mxu0 0.0
    %5370 = vmatpush1.msra.mxu0 0.0
    %5371 = vmatprep.subr.mxu0 0.0
    %5372 = vmatpush1.msra.mxu0 0.0
    %5373 = vmatprep.subr.mxu0 0.0
    %5374 = vmatpush1.msra.mxu0 0.0
    %5375 = vmatprep.subr.mxu0 0.0
    %5376 = vmatpush1.msra.mxu0 0.0
    %5377 = vmatprep.subr.mxu0 0.0
    %5378 = vmatpush1.msra.mxu0 0.0
    %5379 = vmatprep.subr.mxu0 0.0
    %5380 = vmatpush1.msra.mxu0 0.0
    %5381 = vmatprep.subr.mxu0 0.0
    %5382 = vmatpush1.msra.mxu0 0.0
    %5383 = vmatprep.subr.mxu0 0.0
    %5384 = vmatpush1.msra.mxu0 0.0
    %5385 = vmatprep.subr.mxu0 0.0
    %5386 = vmatpush1.msra.mxu0 0.0
    %5387 = vmatprep.subr.mxu0 0.0
    %5388 = vmatpush1.msra.mxu0 0.0
    %5389 = vmatprep.subr.mxu0 0.0
    %5390 = vmatpush1.msra.mxu0 0.0
    %5391 = vmatprep.subr.mxu0 0.0
    %5392 = vmatpush1.msra.mxu0 0.0
    %5393 = vmatprep.subr.mxu0 0.0
    %5394 = vmatpush1.msra.mxu0 0.0
    %5395 = vmatprep.subr.mxu0 0.0
    %v5396 = vand.u32 %v4935, 4294901760
    %5397 = vmatpush1.msra.mxu0 %v5396
    %5398 = vmatprep.subr.mxu0 0.0
    %v5399 = vand.u32 %v4933, 4294901760
    %5400 = vmatpush1.msra.mxu0 %v5399
    %5401 = vmatprep.subr.mxu0 0.0
    %5402 = vmatpush2.msra.mxu0 0.0
    %5403 = vmatprep.subr.mxu0 0.0
    %5404 = vmatpush2.msra.mxu0 0.0
    %5405 = vmatprep.subr.mxu0 0.0
    %5406 = vmatpush2.msra.mxu0 0.0
    %5407 = vmatprep.subr.mxu0 0.0
    %5408 = vmatpush2.msra.mxu0 0.0
    %5409 = vmatprep.subr.mxu0 0.0
    %5410 = vmatpush2.msra.mxu0 0.0
    %5411 = vmatprep.subr.mxu0 0.0
    %5412 = vmatpush2.msra.mxu0 0.0
    %5413 = vmatprep.subr.mxu0 0.0
    %5414 = vmatpush2.msra.mxu0 0.0
    %5415 = vmatprep.subr.mxu0 0.0
    %5416 = vmatpush2.msra.mxu0 0.0
    %5417 = vmatprep.subr.mxu0 0.0
    %5418 = vmatpush2.msra.mxu0 0.0
    %5419 = vmatprep.subr.mxu0 0.0
    %5420 = vmatpush2.msra.mxu0 0.0
    %5421 = vmatprep.subr.mxu0 0.0
    %5422 = vmatpush2.msra.mxu0 0.0
    %5423 = vmatprep.subr.mxu0 0.0
    %5424 = vmatpush2.msra.mxu0 0.0
    %5425 = vmatprep.subr.mxu0 0.0
    %5426 = vmatpush2.msra.mxu0 0.0
    %5427 = vmatprep.subr.mxu0 0.0
    %5428 = vmatpush2.msra.mxu0 0.0
    %5429 = vmatprep.subr.mxu0 0.0
    %5430 = vmatpush2.msra.mxu0 0.0
    %5431 = vmatprep.subr.mxu0 0.0
    %5432 = vmatpush2.msra.mxu0 0.0
    %5433 = vmatprep.mubr.f32.mxu0 0.0
    %v5434 = vand.u32 %v4939, 4294901760
    %5435 = vmatmul.mubr.f32.gmra.mxu0 %v5434
    %v5436 = vpop.f32.mrf.mxu0
    %v5437 = vadd.f32 %v5358, %v5436
    %v5438 = vpop.f32.mrf.mxu0
    %5439 = vmatprep.mubr.f32.mxu0 0.0
    %v5440 = vand.u32 %v4942, 4294901760
    %5441 = vmatmul.mubr.f32.gmra.mxu0 %v5440
    %v5442 = vpop.f32.mrf.mxu0
    %v5443 = vadd.f32 %v5364, %v5442
    %v5444 = vpop.f32.mrf.mxu0
    %5445 = vdwg.mxu0
    %5448 = vrot.lane.b32.xlu0 %v3329, 8
    %v5449 = vpop.permute.xlu0 %5448
    %5450 = vrot.lane.b32.xlu0 %v3335, 8
    %v5451 = vpop.permute.xlu0 %5450
    %5456 = vrot.lane.b32.xlu0 %v4383, 16
    %v5457 = vpop.permute.xlu0 %5456
    %5458 = vrot.lane.b32.xlu0 %v4389, 16
    %v5459 = vpop.permute.xlu0 %5458
    %5464 = vrot.lane.b32.xlu0 %v5437, 24
    %v5465 = vpop.permute.xlu0 %5464
    %5466 = vrot.lane.b32.xlu0 %v5443, 24
    %v5467 = vpop.permute.xlu0 %5466
    %v5470 = vsel %vm1238, %v2273, %v5449
    %v5471 = vsel %vm1238, %v2279, %v5451
    %v5472 = vsel %vm1751, %v5470, %v5457
    %v5473 = vsel %vm1751, %v5471, %v5459
    %vm5474 = vcmask 195584
    %v5475 = vsel %vm5474, %v5472, %v5465
    %v5476 = vsel %vm5474, %v5473, %v5467
    %5477 = vrot.lane.b32.xlu0 %v73, 32
    %v5478 = vpop.permute.xlu0 %5477
    %5479 = vrot.lane.b32.xlu0 %v74, 32
    %v5480 = vpop.permute.xlu0 %5479
    %5481 = vrot.lane.b32.xlu0 %v75, 32
    %v5482 = vpop.permute.xlu0 %5481
    %5483 = vrot.lane.b32.xlu0 %v76, 32
    %v5484 = vpop.permute.xlu0 %5483
    %v5490 = vsel %vm82, %v5475, 0
    %v5493 = vsel %vm82, %v5476, 0
    %5495 = vmatprep.subr.mxu0 0.0
    %5496 = vmatpush1.msra.mxu0 0.0
    %5497 = vmatprep.subr.mxu0 0.0
    %5498 = vmatpush1.msra.mxu0 0.0
    %5499 = vmatprep.subr.mxu0 0.0
    %5500 = vmatpush1.msra.mxu0 0.0
    %5501 = vmatprep.subr.mxu0 0.0
    %5502 = vmatpush1.msra.mxu0 0.0
    %5503 = vmatprep.subr.mxu0 0.0
    %5504 = vmatpush1.msra.mxu0 0.0
    %5505 = vmatprep.subr.mxu0 0.0
    %5506 = vmatpush1.msra.mxu0 0.0
    %5507 = vmatprep.subr.mxu0 0.0
    %5508 = vmatpush1.msra.mxu0 0.0
    %5509 = vmatprep.subr.mxu0 0.0
    %5510 = vmatpush1.msra.mxu0 0.0
    %5511 = vmatprep.subr.mxu0 0.0
    %5512 = vmatpush1.msra.mxu0 0.0
    %5513 = vmatprep.subr.mxu0 0.0
    %5514 = vmatpush1.msra.mxu0 0.0
    %5515 = vmatprep.subr.mxu0 0.0
    %5516 = vmatpush1.msra.mxu0 0.0
    %5517 = vmatprep.subr.mxu0 0.0
    %5518 = vmatpush1.msra.mxu0 0.0
    %5519 = vmatprep.subr.mxu0 0.0
    %v5520 = vand.u32 %v5484, 4294901760
    %5521 = vmatpush1.msra.mxu0 %v5520
    %5522 = vmatprep.subr.mxu0 0.0
    %v5523 = vand.u32 %v5482, 4294901760
    %5524 = vmatpush1.msra.mxu0 %v5523
    %5525 = vmatprep.subr.mxu0 0.0
    %v5526 = vand.u32 %v5480, 4294901760
    %5527 = vmatpush1.msra.mxu0 %v5526
    %5528 = vmatprep.subr.mxu0 0.0
    %v5529 = vand.u32 %v5478, 4294901760
    %5530 = vmatpush1.msra.mxu0 %v5529
    %5531 = vmatprep.subr.mxu0 0.0
    %5532 = vmatpush2.msra.mxu0 0.0
    %5533 = vmatprep.subr.mxu0 0.0
    %5534 = vmatpush2.msra.mxu0 0.0
    %5535 = vmatprep.subr.mxu0 0.0
    %5536 = vmatpush2.msra.mxu0 0.0
    %5537 = vmatprep.subr.mxu0 0.0
    %5538 = vmatpush2.msra.mxu0 0.0
    %5539 = vmatprep.subr.mxu0 0.0
    %5540 = vmatpush2.msra.mxu0 0.0
    %5541 = vmatprep.subr.mxu0 0.0
    %5542 = vmatpush2.msra.mxu0 0.0
    %5543 = vmatprep.subr.mxu0 0.0
    %5544 = vmatpush2.msra.mxu0 0.0
    %5545 = vmatprep.subr.mxu0 0.0
    %5546 = vmatpush2.msra.mxu0 0.0
    %5547 = vmatprep.subr.mxu0 0.0
    %5548 = vmatpush2.msra.mxu0 0.0
    %5549 = vmatprep.subr.mxu0 0.0
    %5550 = vmatpush2.msra.mxu0 0.0
    %5551 = vmatprep.subr.mxu0 0.0
    %5552 = vmatpush2.msra.mxu0 0.0
    %5553 = vmatprep.subr.mxu0 0.0
    %5554 = vmatpush2.msra.mxu0 0.0
    %5555 = vmatprep.subr.mxu0 0.0
    %5556 = vmatpush2.msra.mxu0 0.0
    %5557 = vmatprep.subr.mxu0 0.0
    %5558 = vmatpush2.msra.mxu0 0.0
    %5559 = vmatprep.subr.mxu0 0.0
    %5560 = vmatpush2.msra.mxu0 0.0
    %5561 = vmatprep.subr.mxu0 0.0
    %5562 = vmatpush2.msra.mxu0 0.0
    %5563 = vmatprep.mubr.f32.mxu0 0.0
    %v5564 = vand.u32 %v5490, 4294901760
    %v5565 = vsub.f32 %v5490, %v5564
    %v5566 = vand.u32 %v5565, 4294901760
    %v5567 = vsub.f32 %v5565, %v5566
    %v5568 = vand.u32 %v5567, 4294901760
    %5569 = vmatmul.mubr.f32.gmra.mxu0 %v5568
    %v5570 = vpop.f32.mrf.mxu0
    %v5571 = vadd.f32 0.0, %v5570
    %v5572 = vpop.f32.mrf.mxu0
    %5573 = vmatprep.mubr.f32.mxu0 0.0
    %v5574 = vand.u32 %v5493, 4294901760
    %v5575 = vsub.f32 %v5493, %v5574
    %v5576 = vand.u32 %v5575, 4294901760
    %v5577 = vsub.f32 %v5575, %v5576
    %v5578 = vand.u32 %v5577, 4294901760
    %5579 = vmatmul.mubr.f32.gmra.mxu0 %v5578
    %v5580 = vpop.f32.mrf.mxu0
    %v5581 = vadd.f32 0.0, %v5580
    %v5582 = vpop.f32.mrf.mxu0
    %5583 = vdwg.mxu0
    %5584 = vmatprep.subr.mxu0 0.0
    %5585 = vmatpush1.msra.mxu0 0.0
    %5586 = vmatprep.subr.mxu0 0.0
    %5587 = vmatpush1.msra.mxu0 0.0
    %5588 = vmatprep.subr.mxu0 0.0
    %5589 = vmatpush1.msra.mxu0 0.0
    %5590 = vmatprep.subr.mxu0 0.0
    %5591 = vmatpush1.msra.mxu0 0.0
    %5592 = vmatprep.subr.mxu0 0.0
    %5593 = vmatpush1.msra.mxu0 0.0
    %5594 = vmatprep.subr.mxu0 0.0
    %5595 = vmatpush1.msra.mxu0 0.0
    %5596 = vmatprep.subr.mxu0 0.0
    %5597 = vmatpush1.msra.mxu0 0.0
    %5598 = vmatprep.subr.mxu0 0.0
    %5599 = vmatpush1.msra.mxu0 0.0
    %5600 = vmatprep.subr.mxu0 0.0
    %5601 = vmatpush1.msra.mxu0 0.0
    %5602 = vmatprep.subr.mxu0 0.0
    %5603 = vmatpush1.msra.mxu0 0.0
    %5604 = vmatprep.subr.mxu0 0.0
    %5605 = vmatpush1.msra.mxu0 0.0
    %5606 = vmatprep.subr.mxu0 0.0
    %5607 = vmatpush1.msra.mxu0 0.0
    %5608 = vmatprep.subr.mxu0 0.0
    %v5609 = vand.u32 %v5484, 4294901760
    %v5610 = vsub.f32 %v5484, %v5609
    %v5611 = vand.u32 %v5610, 4294901760
    %v5612 = vsub.f32 %v5610, %v5611
    %v5613 = vand.u32 %v5612, 4294901760
    %5614 = vmatpush1.msra.mxu0 %v5613
    %5615 = vmatprep.subr.mxu0 0.0
    %v5616 = vand.u32 %v5482, 4294901760
    %v5617 = vsub.f32 %v5482, %v5616
    %v5618 = vand.u32 %v5617, 4294901760
    %v5619 = vsub.f32 %v5617, %v5618
    %v5620 = vand.u32 %v5619, 4294901760
    %5621 = vmatpush1.msra.mxu0 %v5620
    %5622 = vmatprep.subr.mxu0 0.0
    %v5623 = vand.u32 %v5480, 4294901760
    %v5624 = vsub.f32 %v5480, %v5623
    %v5625 = vand.u32 %v5624, 4294901760
    %v5626 = vsub.f32 %v5624, %v5625
    %v5627 = vand.u32 %v5626, 4294901760
    %5628 = vmatpush1.msra.mxu0 %v5627
    %5629 = vmatprep.subr.mxu0 0.0
    %v5630 = vand.u32 %v5478, 4294901760
    %v5631 = vsub.f32 %v5478, %v5630
    %v5632 = vand.u32 %v5631, 4294901760
    %v5633 = vsub.f32 %v5631, %v5632
    %v5634 = vand.u32 %v5633, 4294901760
    %5635 = vmatpush1.msra.mxu0 %v5634
    %5636 = vmatprep.subr.mxu0 0.0
    %5637 = vmatpush2.msra.mxu0 0.0
    %5638 = vmatprep.subr.mxu0 0.0
    %5639 = vmatpush2.msra.mxu0 0.0
    %5640 = vmatprep.subr.mxu0 0.0
    %5641 = vmatpush2.msra.mxu0 0.0
    %5642 = vmatprep.subr.mxu0 0.0
    %5643 = vmatpush2.msra.mxu0 0.0
    %5644 = vmatprep.subr.mxu0 0.0
    %5645 = vmatpush2.msra.mxu0 0.0
    %5646 = vmatprep.subr.mxu0 0.0
    %5647 = vmatpush2.msra.mxu0 0.0
    %5648 = vmatprep.subr.mxu0 0.0
    %5649 = vmatpush2.msra.mxu0 0.0
    %5650 = vmatprep.subr.mxu0 0.0
    %5651 = vmatpush2.msra.mxu0 0.0
    %5652 = vmatprep.subr.mxu0 0.0
    %5653 = vmatpush2.msra.mxu0 0.0
    %5654 = vmatprep.subr.mxu0 0.0
    %5655 = vmatpush2.msra.mxu0 0.0
    %5656 = vmatprep.subr.mxu0 0.0
    %5657 = vmatpush2.msra.mxu0 0.0
    %5658 = vmatprep.subr.mxu0 0.0
    %5659 = vmatpush2.msra.mxu0 0.0
    %5660 = vmatprep.subr.mxu0 0.0
    %5661 = vmatpush2.msra.mxu0 0.0
    %5662 = vmatprep.subr.mxu0 0.0
    %5663 = vmatpush2.msra.mxu0 0.0
    %5664 = vmatprep.subr.mxu0 0.0
    %5665 = vmatpush2.msra.mxu0 0.0
    %5666 = vmatprep.subr.mxu0 0.0
    %5667 = vmatpush2.msra.mxu0 0.0
    %5668 = vmatprep.mubr.f32.mxu0 0.0
    %v5669 = vand.u32 %v5490, 4294901760
    %5670 = vmatmul.mubr.f32.gmra.mxu0 %v5669
    %v5671 = vpop.f32.mrf.mxu0
    %v5672 = vadd.f32 %v5571, %v5671
    %v5673 = vpop.f32.mrf.mxu0
    %5674 = vmatprep.mubr.f32.mxu0 0.0
    %v5675 = vand.u32 %v5493, 4294901760
    %5676 = vmatmul.mubr.f32.gmra.mxu0 %v5675
    %v5677 = vpop.f32.mrf.mxu0
    %v5678 = vadd.f32 %v5581, %v5677
    %v5679 = vpop.f32.mrf.mxu0
    %5680 = vdwg.mxu0
    %5681 = vmatprep.subr.mxu0 0.0
    %5682 = vmatpush1.msra.mxu0 0.0
    %5683 = vmatprep.subr.mxu0 0.0
    %5684 = vmatpush1.msra.mxu0 0.0
    %5685 = vmatprep.subr.mxu0 0.0
    %5686 = vmatpush1.msra.mxu0 0.0
    %5687 = vmatprep.subr.mxu0 0.0
    %5688 = vmatpush1.msra.mxu0 0.0
    %5689 = vmatprep.subr.mxu0 0.0
    %5690 = vmatpush1.msra.mxu0 0.0
    %5691 = vmatprep.subr.mxu0 0.0
    %5692 = vmatpush1.msra.mxu0 0.0
    %5693 = vmatprep.subr.mxu0 0.0
    %5694 = vmatpush1.msra.mxu0 0.0
    %5695 = vmatprep.subr.mxu0 0.0
    %5696 = vmatpush1.msra.mxu0 0.0
    %5697 = vmatprep.subr.mxu0 0.0
    %5698 = vmatpush1.msra.mxu0 0.0
    %5699 = vmatprep.subr.mxu0 0.0
    %5700 = vmatpush1.msra.mxu0 0.0
    %5701 = vmatprep.subr.mxu0 0.0
    %5702 = vmatpush1.msra.mxu0 0.0
    %5703 = vmatprep.subr.mxu0 0.0
    %5704 = vmatpush1.msra.mxu0 0.0
    %5705 = vmatprep.subr.mxu0 0.0
    %v5706 = vand.u32 %v5484, 4294901760
    %v5707 = vsub.f32 %v5484, %v5706
    %5708 = vmatpush1.msra.mxu0 %v5707
    %5709 = vmatprep.subr.mxu0 0.0
    %v5710 = vand.u32 %v5482, 4294901760
    %v5711 = vsub.f32 %v5482, %v5710
    %5712 = vmatpush1.msra.mxu0 %v5711
    %5713 = vmatprep.subr.mxu0 0.0
    %v5714 = vand.u32 %v5480, 4294901760
    %v5715 = vsub.f32 %v5480, %v5714
    %5716 = vmatpush1.msra.mxu0 %v5715
    %5717 = vmatprep.subr.mxu0 0.0
    %v5718 = vand.u32 %v5478, 4294901760
    %v5719 = vsub.f32 %v5478, %v5718
    %5720 = vmatpush1.msra.mxu0 %v5719
    %5721 = vmatprep.subr.mxu0 0.0
    %5722 = vmatpush2.msra.mxu0 0.0
    %5723 = vmatprep.subr.mxu0 0.0
    %5724 = vmatpush2.msra.mxu0 0.0
    %5725 = vmatprep.subr.mxu0 0.0
    %5726 = vmatpush2.msra.mxu0 0.0
    %5727 = vmatprep.subr.mxu0 0.0
    %5728 = vmatpush2.msra.mxu0 0.0
    %5729 = vmatprep.subr.mxu0 0.0
    %5730 = vmatpush2.msra.mxu0 0.0
    %5731 = vmatprep.subr.mxu0 0.0
    %5732 = vmatpush2.msra.mxu0 0.0
    %5733 = vmatprep.subr.mxu0 0.0
    %5734 = vmatpush2.msra.mxu0 0.0
    %5735 = vmatprep.subr.mxu0 0.0
    %5736 = vmatpush2.msra.mxu0 0.0
    %5737 = vmatprep.subr.mxu0 0.0
    %5738 = vmatpush2.msra.mxu0 0.0
    %5739 = vmatprep.subr.mxu0 0.0
    %5740 = vmatpush2.msra.mxu0 0.0
    %5741 = vmatprep.subr.mxu0 0.0
    %5742 = vmatpush2.msra.mxu0 0.0
    %5743 = vmatprep.subr.mxu0 0.0
    %5744 = vmatpush2.msra.mxu0 0.0
    %5745 = vmatprep.subr.mxu0 0.0
    %5746 = vmatpush2.msra.mxu0 0.0
    %5747 = vmatprep.subr.mxu0 0.0
    %5748 = vmatpush2.msra.mxu0 0.0
    %5749 = vmatprep.subr.mxu0 0.0
    %5750 = vmatpush2.msra.mxu0 0.0
    %5751 = vmatprep.subr.mxu0 0.0
    %5752 = vmatpush2.msra.mxu0 0.0
    %5753 = vmatprep.mubr.f32.mxu0 0.0
    %v5754 = vand.u32 %v5490, 4294901760
    %v5755 = vsub.f32 %v5490, %v5754
    %5756 = vmatmul.mubr.f32.gmra.mxu0 %v5755
    %v5757 = vpop.f32.mrf.mxu0
    %v5758 = vadd.f32 %v5672, %v5757
    %v5759 = vpop.f32.mrf.mxu0
    %5760 = vmatprep.mubr.f32.mxu0 0.0
    %v5761 = vand.u32 %v5493, 4294901760
    %v5762 = vsub.f32 %v5493, %v5761
    %5763 = vmatmul.mubr.f32.gmra.mxu0 %v5762
    %v5764 = vpop.f32.mrf.mxu0
    %v5765 = vadd.f32 %v5678, %v5764
    %v5766 = vpop.f32.mrf.mxu0
    %5767 = vdwg.mxu0
    %5768 = vmatprep.subr.mxu0 0.0
    %5769 = vmatpush1.msra.mxu0 0.0
    %5770 = vmatprep.subr.mxu0 0.0
    %5771 = vmatpush1.msra.mxu0 0.0
    %5772 = vmatprep.subr.mxu0 0.0
    %5773 = vmatpush1.msra.mxu0 0.0
    %5774 = vmatprep.subr.mxu0 0.0
    %5775 = vmatpush1.msra.mxu0 0.0
    %5776 = vmatprep.subr.mxu0 0.0
    %5777 = vmatpush1.msra.mxu0 0.0
    %5778 = vmatprep.subr.mxu0 0.0
    %5779 = vmatpush1.msra.mxu0 0.0
    %5780 = vmatprep.subr.mxu0 0.0
    %5781 = vmatpush1.msra.mxu0 0.0
    %5782 = vmatprep.subr.mxu0 0.0
    %5783 = vmatpush1.msra.mxu0 0.0
    %5784 = vmatprep.subr.mxu0 0.0
    %5785 = vmatpush1.msra.mxu0 0.0
    %5786 = vmatprep.subr.mxu0 0.0
    %5787 = vmatpush1.msra.mxu0 0.0
    %5788 = vmatprep.subr.mxu0 0.0
    %5789 = vmatpush1.msra.mxu0 0.0
    %5790 = vmatprep.subr.mxu0 0.0
    %5791 = vmatpush1.msra.mxu0 0.0
    %5792 = vmatprep.subr.mxu0 0.0
    %v5793 = vand.u32 %v5484, 4294901760
    %5794 = vmatpush1.msra.mxu0 %v5793
    %5795 = vmatprep.subr.mxu0 0.0
    %v5796 = vand.u32 %v5482, 4294901760
    %5797 = vmatpush1.msra.mxu0 %v5796
    %5798 = vmatprep.subr.mxu0 0.0
    %v5799 = vand.u32 %v5480, 4294901760
    %5800 = vmatpush1.msra.mxu0 %v5799
    %5801 = vmatprep.subr.mxu0 0.0
    %v5802 = vand.u32 %v5478, 4294901760
    %5803 = vmatpush1.msra.mxu0 %v5802
    %5804 = vmatprep.subr.mxu0 0.0
    %5805 = vmatpush2.msra.mxu0 0.0
    %5806 = vmatprep.subr.mxu0 0.0
    %5807 = vmatpush2.msra.mxu0 0.0
    %5808 = vmatprep.subr.mxu0 0.0
    %5809 = vmatpush2.msra.mxu0 0.0
    %5810 = vmatprep.subr.mxu0 0.0
    %5811 = vmatpush2.msra.mxu0 0.0
    %5812 = vmatprep.subr.mxu0 0.0
    %5813 = vmatpush2.msra.mxu0 0.0
    %5814 = vmatprep.subr.mxu0 0.0
    %5815 = vmatpush2.msra.mxu0 0.0
    %5816 = vmatprep.subr.mxu0 0.0
    %5817 = vmatpush2.msra.mxu0 0.0
    %5818 = vmatprep.subr.mxu0 0.0
    %5819 = vmatpush2.msra.mxu0 0.0
    %5820 = vmatprep.subr.mxu0 0.0
    %5821 = vmatpush2.msra.mxu0 0.0
    %5822 = vmatprep.subr.mxu0 0.0
    %5823 = vmatpush2.msra.mxu0 0.0
    %5824 = vmatprep.subr.mxu0 0.0
    %5825 = vmatpush2.msra.mxu0 0.0
    %5826 = vmatprep.subr.mxu0 0.0
    %5827 = vmatpush2.msra.mxu0 0.0
    %5828 = vmatprep.subr.mxu0 0.0
    %5829 = vmatpush2.msra.mxu0 0.0
    %5830 = vmatprep.subr.mxu0 0.0
    %5831 = vmatpush2.msra.mxu0 0.0
    %5832 = vmatprep.subr.mxu0 0.0
    %5833 = vmatpush2.msra.mxu0 0.0
    %5834 = vmatprep.subr.mxu0 0.0
    %5835 = vmatpush2.msra.mxu0 0.0
    %5836 = vmatprep.mubr.f32.mxu0 0.0
    %v5837 = vand.u32 %v5490, 4294901760
    %v5838 = vsub.f32 %v5490, %v5837
    %v5839 = vand.u32 %v5838, 4294901760
    %5840 = vmatmul.mubr.f32.gmra.mxu0 %v5839
    %v5841 = vpop.f32.mrf.mxu0
    %v5842 = vadd.f32 %v5758, %v5841
    %v5843 = vpop.f32.mrf.mxu0
    %5844 = vmatprep.mubr.f32.mxu0 0.0
    %v5845 = vand.u32 %v5493, 4294901760
    %v5846 = vsub.f32 %v5493, %v5845
    %v5847 = vand.u32 %v5846, 4294901760
    %5848 = vmatmul.mubr.f32.gmra.mxu0 %v5847
    %v5849 = vpop.f32.mrf.mxu0
    %v5850 = vadd.f32 %v5765, %v5849
    %v5851 = vpop.f32.mrf.mxu0
    %5852 = vdwg.mxu0
    %5853 = vmatprep.subr.mxu0 0.0
    %5854 = vmatpush1.msra.mxu0 0.0
    %5855 = vmatprep.subr.mxu0 0.0
    %5856 = vmatpush1.msra.mxu0 0.0
    %5857 = vmatprep.subr.mxu0 0.0
    %5858 = vmatpush1.msra.mxu0 0.0
    %5859 = vmatprep.subr.mxu0 0.0
    %5860 = vmatpush1.msra.mxu0 0.0
    %5861 = vmatprep.subr.mxu0 0.0
    %5862 = vmatpush1.msra.mxu0 0.0
    %5863 = vmatprep.subr.mxu0 0.0
    %5864 = vmatpush1.msra.mxu0 0.0
    %5865 = vmatprep.subr.mxu0 0.0
    %5866 = vmatpush1.msra.mxu0 0.0
    %5867 = vmatprep.subr.mxu0 0.0
    %5868 = vmatpush1.msra.mxu0 0.0
    %5869 = vmatprep.subr.mxu0 0.0
    %5870 = vmatpush1.msra.mxu0 0.0
    %5871 = vmatprep.subr.mxu0 0.0
    %5872 = vmatpush1.msra.mxu0 0.0
    %5873 = vmatprep.subr.mxu0 0.0
    %5874 = vmatpush1.msra.mxu0 0.0
    %5875 = vmatprep.subr.mxu0 0.0
    %5876 = vmatpush1.msra.mxu0 0.0
    %5877 = vmatprep.subr.mxu0 0.0
    %v5878 = vand.u32 %v5484, 4294901760
    %v5879 = vsub.f32 %v5484, %v5878
    %v5880 = vand.u32 %v5879, 4294901760
    %5881 = vmatpush1.msra.mxu0 %v5880
    %5882 = vmatprep.subr.mxu0 0.0
    %v5883 = vand.u32 %v5482, 4294901760
    %v5884 = vsub.f32 %v5482, %v5883
    %v5885 = vand.u32 %v5884, 4294901760
    %5886 = vmatpush1.msra.mxu0 %v5885
    %5887 = vmatprep.subr.mxu0 0.0
    %v5888 = vand.u32 %v5480, 4294901760
    %v5889 = vsub.f32 %v5480, %v5888
    %v5890 = vand.u32 %v5889, 4294901760
    %5891 = vmatpush1.msra.mxu0 %v5890
    %5892 = vmatprep.subr.mxu0 0.0
    %v5893 = vand.u32 %v5478, 4294901760
    %v5894 = vsub.f32 %v5478, %v5893
    %v5895 = vand.u32 %v5894, 4294901760
    %5896 = vmatpush1.msra.mxu0 %v5895
    %5897 = vmatprep.subr.mxu0 0.0
    %5898 = vmatpush2.msra.mxu0 0.0
    %5899 = vmatprep.subr.mxu0 0.0
    %5900 = vmatpush2.msra.mxu0 0.0
    %5901 = vmatprep.subr.mxu0 0.0
    %5902 = vmatpush2.msra.mxu0 0.0
    %5903 = vmatprep.subr.mxu0 0.0
    %5904 = vmatpush2.msra.mxu0 0.0
    %5905 = vmatprep.subr.mxu0 0.0
    %5906 = vmatpush2.msra.mxu0 0.0
    %5907 = vmatprep.subr.mxu0 0.0
    %5908 = vmatpush2.msra.mxu0 0.0
    %5909 = vmatprep.subr.mxu0 0.0
    %5910 = vmatpush2.msra.mxu0 0.0
    %5911 = vmatprep.subr.mxu0 0.0
    %5912 = vmatpush2.msra.mxu0 0.0
    %5913 = vmatprep.subr.mxu0 0.0
    %5914 = vmatpush2.msra.mxu0 0.0
    %5915 = vmatprep.subr.mxu0 0.0
    %5916 = vmatpush2.msra.mxu0 0.0
    %5917 = vmatprep.subr.mxu0 0.0
    %5918 = vmatpush2.msra.mxu0 0.0
    %5919 = vmatprep.subr.mxu0 0.0
    %5920 = vmatpush2.msra.mxu0 0.0
    %5921 = vmatprep.subr.mxu0 0.0
    %5922 = vmatpush2.msra.mxu0 0.0
    %5923 = vmatprep.subr.mxu0 0.0
    %5924 = vmatpush2.msra.mxu0 0.0
    %5925 = vmatprep.subr.mxu0 0.0
    %5926 = vmatpush2.msra.mxu0 0.0
    %5927 = vmatprep.subr.mxu0 0.0
    %5928 = vmatpush2.msra.mxu0 0.0
    %5929 = vmatprep.mubr.f32.mxu0 0.0
    %v5930 = vand.u32 %v5490, 4294901760
    %5931 = vmatmul.mubr.f32.gmra.mxu0 %v5930
    %v5932 = vpop.f32.mrf.mxu0
    %v5933 = vadd.f32 %v5842, %v5932
    %v5934 = vpop.f32.mrf.mxu0
    %5935 = vmatprep.mubr.f32.mxu0 0.0
    %v5936 = vand.u32 %v5493, 4294901760
    %5937 = vmatmul.mubr.f32.gmra.mxu0 %v5936
    %v5938 = vpop.f32.mrf.mxu0
    %v5939 = vadd.f32 %v5850, %v5938
    %v5940 = vpop.f32.mrf.mxu0
    %5941 = vdwg.mxu0
    %5942 = vmatprep.subr.mxu0 0.0
    %5943 = vmatpush1.msra.mxu0 0.0
    %5944 = vmatprep.subr.mxu0 0.0
    %5945 = vmatpush1.msra.mxu0 0.0
    %5946 = vmatprep.subr.mxu0 0.0
    %5947 = vmatpush1.msra.mxu0 0.0
    %5948 = vmatprep.subr.mxu0 0.0
    %5949 = vmatpush1.msra.mxu0 0.0
    %5950 = vmatprep.subr.mxu0 0.0
    %5951 = vmatpush1.msra.mxu0 0.0
    %5952 = vmatprep.subr.mxu0 0.0
    %5953 = vmatpush1.msra.mxu0 0.0
    %5954 = vmatprep.subr.mxu0 0.0
    %5955 = vmatpush1.msra.mxu0 0.0
    %5956 = vmatprep.subr.mxu0 0.0
    %5957 = vmatpush1.msra.mxu0 0.0
    %5958 = vmatprep.subr.mxu0 0.0
    %5959 = vmatpush1.msra.mxu0 0.0
    %5960 = vmatprep.subr.mxu0 0.0
    %5961 = vmatpush1.msra.mxu0 0.0
    %5962 = vmatprep.subr.mxu0 0.0
    %5963 = vmatpush1.msra.mxu0 0.0
    %5964 = vmatprep.subr.mxu0 0.0
    %5965 = vmatpush1.msra.mxu0 0.0
    %5966 = vmatprep.subr.mxu0 0.0
    %v5967 = vand.u32 %v5484, 4294901760
    %5968 = vmatpush1.msra.mxu0 %v5967
    %5969 = vmatprep.subr.mxu0 0.0
    %v5970 = vand.u32 %v5482, 4294901760
    %5971 = vmatpush1.msra.mxu0 %v5970
    %5972 = vmatprep.subr.mxu0 0.0
    %v5973 = vand.u32 %v5480, 4294901760
    %5974 = vmatpush1.msra.mxu0 %v5973
    %5975 = vmatprep.subr.mxu0 0.0
    %v5976 = vand.u32 %v5478, 4294901760
    %5977 = vmatpush1.msra.mxu0 %v5976
    %5978 = vmatprep.subr.mxu0 0.0
    %5979 = vmatpush2.msra.mxu0 0.0
    %5980 = vmatprep.subr.mxu0 0.0
    %5981 = vmatpush2.msra.mxu0 0.0
    %5982 = vmatprep.subr.mxu0 0.0
    %5983 = vmatpush2.msra.mxu0 0.0
    %5984 = vmatprep.subr.mxu0 0.0
    %5985 = vmatpush2.msra.mxu0 0.0
    %5986 = vmatprep.subr.mxu0 0.0
    %5987 = vmatpush2.msra.mxu0 0.0
    %5988 = vmatprep.subr.mxu0 0.0
    %5989 = vmatpush2.msra.mxu0 0.0
    %5990 = vmatprep.subr.mxu0 0.0
    %5991 = vmatpush2.msra.mxu0 0.0
    %5992 = vmatprep.subr.mxu0 0.0
    %5993 = vmatpush2.msra.mxu0 0.0
    %5994 = vmatprep.subr.mxu0 0.0
    %5995 = vmatpush2.msra.mxu0 0.0
    %5996 = vmatprep.subr.mxu0 0.0
    %5997 = vmatpush2.msra.mxu0 0.0
    %5998 = vmatprep.subr.mxu0 0.0
    %5999 = vmatpush2.msra.mxu0 0.0
    %6000 = vmatprep.subr.mxu0 0.0
    %6001 = vmatpush2.msra.mxu0 0.0
    %6002 = vmatprep.subr.mxu0 0.0
    %6003 = vmatpush2.msra.mxu0 0.0
    %6004 = vmatprep.subr.mxu0 0.0
    %6005 = vmatpush2.msra.mxu0 0.0
    %6006 = vmatprep.subr.mxu0 0.0
    %6007 = vmatpush2.msra.mxu0 0.0
    %6008 = vmatprep.subr.mxu0 0.0
    %6009 = vmatpush2.msra.mxu0 0.0
    %6010 = vmatprep.mubr.f32.mxu0 0.0
    %v6011 = vand.u32 %v5490, 4294901760
    %6012 = vmatmul.mubr.f32.gmra.mxu0 %v6011
    %v6013 = vpop.f32.mrf.mxu0
    %v6014 = vadd.f32 %v5933, %v6013
    %v6015 = vpop.f32.mrf.mxu0
    %6016 = vmatprep.mubr.f32.mxu0 0.0
    %v6017 = vand.u32 %v5493, 4294901760
    %6018 = vmatmul.mubr.f32.gmra.mxu0 %v6017
    %v6019 = vpop.f32.mrf.mxu0
    %v6020 = vadd.f32 %v5939, %v6019
    %v6021 = vpop.f32.mrf.mxu0
    %6022 = vdwg.mxu0
    %v6023 = vadd.f32 %v71, %v6014
    %v6024 = vadd.f32 %v72, %v6020
    %v6025 = vlaneseq
    %v6026 = vshrl.u32 %v6025, 7
    %v6027 = vsub.s32 3, %v6026
    %v6028 = vrot.slane %v77, %v6027
    %v6029 = vadd.f32 %v6023, %v6028
    %v6030 = vadd.f32 %v6024, %v6028
    %v6031 = vsel %vm82, %v6029, 0.0
    %6032 = vadd.xlane.f32.xlu0 %v6031
    %v6033 = vpop.xlane.xlu0 %6032
    %v6034 = vsel %vm82, %v6030, 0.0
    %6035 = vadd.xlane.f32.xlu0 %v6034
    %v6036 = vpop.xlane.xlu0 %6035
    %v6037 = vrcp.pop 32.0
    %v6038 = vmul.f32 %v6033, %v6037
    %v6039 = vmul.f32 %v6036, %v6037
    %v6040 = vsub.f32 %v6029, %v6038
    %v6041 = vsub.f32 %v6030, %v6039
    %v6042 = vmul.f32 %v6040, %v6040
    %v6043 = vmul.f32 %v6041, %v6041
    %v6044 = vsel %vm82, %v6042, 0.0
    %6045 = vadd.xlane.f32.xlu0 %v6044
    %v6046 = vpop.xlane.xlu0 %6045
    %v6047 = vsel %vm82, %v6043, 0.0
    %6048 = vadd.xlane.f32.xlu0 %v6047
    %v6049 = vpop.xlane.xlu0 %6048
    %v6050 = vmul.f32 %v6046, %v6037
    %v6051 = vmul.f32 %v6049, %v6037
    %v6052 = vadd.f32 %v6050, 1e-05
    %v6053 = vadd.f32 %v6051, 1e-05
    %v6054 = vrsqrt.pop %v6052
    %v6055 = vrsqrt.pop %v6053
    %v6056 = vmul.f32 %v6040, %v6054
    %v6057 = vmul.f32 %v6041, %v6055
    %v6058 = vlaneseq
    %v6059 = vshrl.u32 %v6058, 7
    %v6060 = vsub.s32 4, %v6059
    %v6061 = vrot.slane %v77, %v6060
    %v6062 = vmul.f32 %v6056, %v6061
    %v6063 = vmul.f32 %v6057, %v6061
    %v6064 = vlaneseq
    %v6065 = vshrl.u32 %v6064, 7
    %v6066 = vsub.s32 5, %v6065
    %v6067 = vrot.slane %v77, %v6066
    %v6068 = vadd.f32 %v6062, %v6067
    %v6069 = vadd.f32 %v6063, %v6067
    %6070 = vst.msk [vmem:[#allocation10] sm:$0xff] %vm82, %v6068
    %6071 = vst.msk [vmem:[#allocation10 + $0x8] sm:$0xff] %vm82, %v6069
    // Predicated region
    $region34: #{self_attention_layer.1} parent=1 // pred_check
      _
    $region35: #{self_attention_layer.1} parent=1 // pred_check_branch
      %6073 = sbr.rel (0) target = $region37
    $region36: #{self_attention_layer.1} parent=1 // pred_region
      %s6075 = ssub.s32 256, 256
      %6076 = vsyncadd [#allocation4], %s6075
      %s6077 = sshll.u32 [#allocation10], 4
      %s6078 = int_to_ptr.vmem [resolvable:$true] %s6077
      %6083 = dma.vmem_to_hbm [thread:$0]  %s6078, 256, %s4, [#allocation4], 128, 128, 8
    $region37: #{self_attention_layer.1} parent=1 // pred_fallthru
      _
    // Predicated region
    $region38: #{self_attention_layer.1} parent=1 // pred_check
      _
    $region39: #{self_attention_layer.1} parent=1 // pred_check_branch
      %6085 = sbr.rel (0) target = $region41
    $region40: #{self_attention_layer.1} parent=1 // pred_region
      %6086 = dma.done [#allocation4], 256
    $region41: #{self_attention_layer.1} parent=1 // pred_fallthru
      _
    %6087 = vsyncpa [#allocation3], 1
    %6088 = vsyncpa [#allocation6], 1
    %6089 = vsyncpa [#allocation9], 1
    %6090 = vsyncpa [#allocation4], 1

</llo_original>
